<compile_context>
chip_gen: v6e
topology: v6e:2x2x1
jax: 0.10.0
libtpu: 0.0.40
codegen_flags: <defaults>
</compile_context>

<pallas_src>
import functools

import jax
import jax.numpy as jnp
from jax.experimental import pallas as pl
from jax.experimental.pallas import tpu as pltpu


_VMEM = pl.BlockSpec(memory_space=pltpu.MemorySpace.VMEM)


# ----------------------------- Pallas kernel ------------------------------- #

def fused_lstm_kernel(*refs, T, B_pad, H, n_layers, num_dirs):
    """Whole LSTMModel forward in one kernel.

    refs layout (inputs, outputs, scratch):
      x_ref:              (T*B_pad, input_size)            f32, time-major
      w_ih_refs[l]:       (D_l, num_dirs*4H)               bf16, l = 0..n_layers-1
      w_hh_ref:           (n_layers, H, num_dirs*4H)       bf16
      b_ref:              (n_layers, 1, num_dirs*4H)       f32  (b_ih + b_hh)
      wl_ref:             (num_dirs*H, 128)                bf16 (col 0 = linear w)
      bl_ref:             (1, 1)                           f32
      out_ref:            (T*B_pad, 128)                   f32  (col 0 = logits)
      act_a, act_b:       (T*B_pad, num_dirs*H)            bf16 ping-pong acts

    Gate column order (per direction, set up in pack_params): [i, f, o, g].
    Direction column order: [fwd 4H | bwd 4H].
    Carry rows: [fwd B_pad rows ; bwd B_pad rows] (sublane-stacked).
    """
    x_ref = refs[0]
    w_ih_refs = refs[1:1 + n_layers]
    w_hh_ref, b_ref, wl_ref, bl_ref = refs[1 + n_layers:5 + n_layers]
    out_ref = refs[5 + n_layers]
    act_a, act_b = refs[6 + n_layers], refs[7 + n_layers]
    buffers = [act_a, act_b]

    G = 4 * H                   # per-direction gate width
    R = num_dirs * B_pad        # sublane-stacked carry rows

    for layer in range(n_layers):
        in_ref = x_ref if layer == 0 else buffers[(layer - 1) % 2]
        out_buf = buffers[layer % 2]

        x_in = in_ref[...]
        if layer == 0:
            x_in = x_in.astype(jnp.bfloat16)    # later layers already bf16

        # Hoisted input projection for BOTH directions in one MXU matmul:
        # (T*B_pad, D_l) @ (D_l, num_dirs*4H); N = 256 when bidirectional.
        gates_x = jnp.dot(x_in, w_ih_refs[layer][...],
                          preferred_element_type=jnp.float32) + b_ref[layer]

        w_hh = w_hh_ref[layer]                          # (H, num_dirs*4H) bf16

        h = jnp.zeros((R, H), jnp.bfloat16)             # [h_fwd ; h_bwd]
        c = jnp.zeros((R, H), jnp.float32)

        # Fully unrolled (small static T) serial recurrence: one MXU dot per
        # step advances both directions.
        for t in range(T):
            g_all = jnp.dot(h, w_hh, preferred_element_type=jnp.float32)
            row_f = t * B_pad
            if num_dirs == 2:
                row_b = (T - 1 - t) * B_pad
                g_f = g_all[:B_pad, :G] + gates_x[row_f:row_f + B_pad, :G]
                g_b = g_all[B_pad:, G:] + gates_x[row_b:row_b + B_pad, G:]
                g = jnp.concatenate([g_f, g_b], axis=0)     # (2*B_pad, 4H)
            else:
                g = g_all + gates_x[row_f:row_f + B_pad, :]

            # [i | f | o | g]: one sigmoid slab + one tanh slab.
            s = jax.nn.sigmoid(g[:, :3 * H])
            g_cell = jnp.tanh(g[:, 3 * H:])
            i_g = s[:, 0 * H:1 * H]
            f_g = s[:, 1 * H:2 * H]
            o_g = s[:, 2 * H:3 * H]
            c = f_g * c + i_g * g_cell
            h = (o_g * jnp.tanh(c)).astype(jnp.bfloat16)

            # fwd hidden -> output row t, bwd hidden -> output row (T-1-t).
            out_buf[row_f:row_f + B_pad, 0:H] = h[:B_pad]
            if num_dirs == 2:
                out_buf[row_b:row_b + B_pad, H:2 * H] = h[B_pad:]

    # Lane-dense linear head fused into the same kernel (128-wide output slab,
    # only column 0 is the real logit).
    final_act = buffers[(n_layers - 1) % 2][...]            # (T*B_pad, dirs*H) bf16
    out_ref[...] = (
        jnp.dot(final_act, wl_ref[...], preferred_element_type=jnp.float32)
        + bl_ref[0, 0]
    )


# ------------------------------ JAX wrapper --------------------------------- #

@functools.partial(jax.jit, static_argnames=("n_layers", "bidirectional"))
def lstm_model_forward(inputs, packed, n_layers, bidirectional):
    """Equivalent of LSTMModel.forward (inference mode).

    inputs: (B, T, input_size)  [batch_first=True]
    packed: output of pack_params()
    returns logits: (B, T, 1)
    """
    B, T, d_in = inputs.shape
    num_dirs = 2 if bidirectional else 1
    H = packed["w_hh"].shape[1]
    B_pad = max(8, ((B + 7) // 8) * 8)

    # batch-first -> time-major, pad batch to the 8-sublane granule, flatten.
    x = jnp.transpose(inputs, (1, 0, 2))                        # (T, B, D)
    x = jnp.pad(x, ((0, 0), (0, B_pad - B), (0, 0)))
    x = x.reshape(T * B_pad, d_in).astype(jnp.float32)

    kernel = functools.partial(
        fused_lstm_kernel, T=T, B_pad=B_pad, H=H,
        n_layers=n_layers, num_dirs=num_dirs)

    n_in = n_layers + 5
    logits_pad = pl.pallas_call(
        kernel,
        out_shape=jax.ShapeDtypeStruct((T * B_pad, 128), jnp.float32),
        in_specs=[_VMEM] * n_in,
        out_specs=_VMEM,
        scratch_shapes=[
            pltpu.VMEM((T * B_pad, num_dirs * H), jnp.bfloat16),
            pltpu.VMEM((T * B_pad, num_dirs * H), jnp.bfloat16),
        ],
    )(x, *packed["w_ih"], packed["w_hh"], packed["b"],
      packed["wl"], packed["bl"])

    logits = logits_pad[:, 0:1].reshape(T, B_pad, 1)[:, :B]     # (T, B, 1)
    return jnp.transpose(logits, (1, 0, 2))                     # (B, T, 1)


# ------------------------------- Param prep --------------------------------- #

def init_params(key, input_size, hidden_dim, n_layers, bidirectional):
    """Deterministic init mimicking PyTorch's uniform(-1/sqrt(H), 1/sqrt(H))."""
    params = {}
    k_lstm = 1.0 / jnp.sqrt(jnp.float32(hidden_dim))
    dirs = ["fwd", "bwd"] if bidirectional else ["fwd"]
    num_dirs = len(dirs)

    for layer in range(n_layers):
        d_in = input_size if layer == 0 else hidden_dim * num_dirs
        for d in dirs:
            key, k1, k2, k3, k4 = jax.random.split(key, 5)
            w_ih = jax.random.uniform(k1, (4 * hidden_dim, d_in),
                                      jnp.float32, -k_lstm, k_lstm)
            w_hh = jax.random.uniform(k2, (4 * hidden_dim, hidden_dim),
                                      jnp.float32, -k_lstm, k_lstm)
            b_ih = jax.random.uniform(k3, (4 * hidden_dim,),
                                      jnp.float32, -k_lstm, k_lstm)
            b_hh = jax.random.uniform(k4, (4 * hidden_dim,),
                                      jnp.float32, -k_lstm, k_lstm)
            params[f"l{layer}_{d}"] = (w_ih, w_hh, b_ih, b_hh)

    h_out = hidden_dim * num_dirs
    k_lin = 1.0 / jnp.sqrt(jnp.float32(h_out))
    key, k1, k2 = jax.random.split(key, 3)
    w_l = jax.random.uniform(k1, (1, h_out), jnp.float32, -k_lin, k_lin)
    b_l = jax.random.uniform(k2, (1,), jnp.float32, -k_lin, k_lin)
    params["linear"] = (w_l, b_l)
    return params


def _reorder_ifgo_to_ifog(w):
    """Reorder the leading 4H axis from PyTorch's [i,f,g,o] to [i,f,o,g]."""
    H = w.shape[0] // 4
    i, f, g, o = w[:H], w[H:2 * H], w[2 * H:3 * H], w[3 * H:]
    return jnp.concatenate([i, f, o, g], axis=0)


def pack_params(params, input_size, hidden_dim, n_layers, bidirectional):
    """One-time transform: reorder gates to [i,f,o,g], transpose, stack both
    directions along the output axis, combine biases, cast matmul weights to
    bf16, pad the linear head to a 128-lane-dense column slab.
    Runs once at init so the jitted forward does zero weight prep per call."""
    H = hidden_dim
    dirs = ["fwd", "bwd"] if bidirectional else ["fwd"]
    num_dirs = len(dirs)

    w_ih_layers, w_hh_layers, b_layers = [], [], []
    for layer in range(n_layers):
        w_ih_cols, w_hh_cols, b_cols = [], [], []
        for d in dirs:
            w_ih, w_hh, b_ih, b_hh = params[f"l{layer}_{d}"]
            w_ih_cols.append(_reorder_ifgo_to_ifog(w_ih).T)        # (d_in, 4H)
            w_hh_cols.append(_reorder_ifgo_to_ifog(w_hh).T)        # (H, 4H)
            b = _reorder_ifgo_to_ifog((b_ih + b_hh).reshape(4 * H, 1))
            b_cols.append(b.reshape(1, 4 * H))
        w_ih_layers.append(
            jnp.concatenate(w_ih_cols, axis=1).astype(jnp.bfloat16))
        w_hh_layers.append(
            jnp.concatenate(w_hh_cols, axis=1).astype(jnp.bfloat16))
        b_layers.append(jnp.concatenate(b_cols, axis=1))

    w_l, b_l = params["linear"]
    wl = (jnp.zeros((H * num_dirs, 128), jnp.float32)
          .at[:, 0:1].set(w_l.T)).astype(jnp.bfloat16)

    return dict(
        w_ih=tuple(w_ih_layers),         # per-layer (D_l, dirs*4H)  bf16
        w_hh=jnp.stack(w_hh_layers),     # (L, H, dirs*4H)           bf16
        b=jnp.stack(b_layers),           # (L, 1, dirs*4H)           f32
        wl=wl,                           # (dirs*H, 128)             bf16
        bl=b_l.reshape(1, 1),            # (1, 1)                    f32
    )


# ---------------------------------- Main ------------------------------------ #

if __name__ == "__main__":
    # Module hyperparameters (dropout=0.0 -> inference-equivalent forward).
    hidden_dim = 32
    input_size = 16
    n_layers = 2
    bidirectional = True

    batch = 2
    seq_len = 8

    key = jax.random.PRNGKey(0)
    key, k_x, k_p = jax.random.split(key, 3)
    inputs = jax.random.normal(k_x, (batch, seq_len, input_size), jnp.float32)
    raw_params = init_params(k_p, input_size, hidden_dim, n_layers, bidirectional)
    packed = pack_params(raw_params, input_size, hidden_dim, n_layers,
                         bidirectional)

    logits = lstm_model_forward(inputs, packed, n_layers, bidirectional)
    logits = jax.block_until_ready(logits)

    assert logits.shape == (batch, seq_len, 1), logits.shape
    assert bool(jnp.all(jnp.isfinite(logits)))
    print("KERNEL_OK")
</pallas_src>

<mosaic_0001>
module attributes {stable_mosaic.version = 11 : i64} {
  func.func @fused_lstm_kernel(%arg0: memref<64x16xf32, #tpu.memory_space<vmem>>, %arg1: memref<16x256xbf16, #tpu.memory_space<vmem>>, %arg2: memref<64x256xbf16, #tpu.memory_space<vmem>>, %arg3: memref<2x32x256xbf16, #tpu.memory_space<vmem>>, %arg4: memref<2x1x256xf32, #tpu.memory_space<vmem>>, %arg5: memref<64x128xbf16, #tpu.memory_space<vmem>>, %arg6: memref<1x1xf32, #tpu.memory_space<vmem>>, %arg7: memref<64x128xf32, #tpu.memory_space<vmem>>, %arg8: memref<64x64xbf16, #tpu.memory_space<vmem>>, %arg9: memref<64x64xbf16, #tpu.memory_space<vmem>>) attributes {dimension_semantics = [], scalar_prefetch = 0 : i64, scratch_operands = 2 : i64, tpu.core_type = #tpu.core_type<tc>} {
    %c0 = arith.constant 0 : index
    %c0_0 = arith.constant 0 : index
    %0 = vector.load %arg0[%c0, %c0_0] : memref<64x16xf32, #tpu.memory_space<vmem>>, vector<64x16xf32>
    %1 = arith.truncf %0 : vector<64x16xf32> to vector<64x16xbf16>
    %c0_1 = arith.constant 0 : index
    %c0_2 = arith.constant 0 : index
    %2 = vector.load %arg1[%c0_1, %c0_2] : memref<16x256xbf16, #tpu.memory_space<vmem>>, vector<16x256xbf16>
    %cst = arith.constant dense<0.000000e+00> : vector<64x256xf32>
    %3 = tpu.matmul %1, %2, %cst {dimension_numbers = #tpu.dot_dimension_numbers<[1], [0], [0], [1], [0, 0, 1, 1], [], []>} : vector<64x16xbf16>, vector<16x256xbf16>, vector<64x256xf32> -> vector<64x256xf32>
    %c0_3 = arith.constant 0 : index
    %c0_4 = arith.constant 0 : index
    %c0_5 = arith.constant 0 : index
    %4 = vector.load %arg4[%c0_3, %c0_4, %c0_5] : memref<2x1x256xf32, #tpu.memory_space<vmem>>, vector<1x1x256xf32>
    %5 = vector.shape_cast %4 : vector<1x1x256xf32> to vector<1x256xf32>
    %6 = vector.broadcast %5 : vector<1x256xf32> to vector<64x256xf32>
    %7 = arith.addf %3, %6 : vector<64x256xf32>
    %c0_6 = arith.constant 0 : index
    %c0_7 = arith.constant 0 : index
    %c0_8 = arith.constant 0 : index
    %8 = vector.load %arg3[%c0_6, %c0_7, %c0_8] : memref<2x32x256xbf16, #tpu.memory_space<vmem>>, vector<1x32x256xbf16>
    %9 = vector.shape_cast %8 : vector<1x32x256xbf16> to vector<32x256xbf16>
    %cst_9 = arith.constant 0.000000e+00 : bf16
    %10 = vector.broadcast %cst_9 : bf16 to vector<16x32xbf16>
    %cst_10 = arith.constant 0.000000e+00 : f32
    %11 = vector.broadcast %cst_10 : f32 to vector<16x32xf32>
    %cst_11 = arith.constant dense<0.000000e+00> : vector<16x256xf32>
    %12 = tpu.matmul %10, %9, %cst_11 {dimension_numbers = #tpu.dot_dimension_numbers<[1], [0], [0], [1], [0, 0, 1, 1], [], []>} : vector<16x32xbf16>, vector<32x256xbf16>, vector<16x256xf32> -> vector<16x256xf32>
    %13 = vector.extract_strided_slice %12 {offsets = [0, 0], sizes = [8, 128], strides = [1, 1]} : vector<16x256xf32> to vector<8x128xf32>
    %14 = vector.extract_strided_slice %7 {offsets = [0, 0], sizes = [8, 128], strides = [1, 1]} : vector<64x256xf32> to vector<8x128xf32>
    %15 = arith.addf %13, %14 : vector<8x128xf32>
    %16 = vector.extract_strided_slice %12 {offsets = [8, 128], sizes = [8, 128], strides = [1, 1]} : vector<16x256xf32> to vector<8x128xf32>
    %17 = vector.extract_strided_slice %7 {offsets = [56, 128], sizes = [8, 128], strides = [1, 1]} : vector<64x256xf32> to vector<8x128xf32>
    %18 = arith.addf %16, %17 : vector<8x128xf32>
    %19 = tpu.concatenate %15, %18 in 0 : vector<8x128xf32>, vector<8x128xf32> -> vector<16x128xf32>
    %20 = vector.extract_strided_slice %19 {offsets = [0, 0], sizes = [16, 96], strides = [1, 1]} : vector<16x128xf32> to vector<16x96xf32>
    %21 = arith.negf %20 : vector<16x96xf32>
    %22 = math.exp %21 : vector<16x96xf32>
    %cst_12 = arith.constant 1.000000e+00 : f32
    %23 = vector.broadcast %cst_12 : f32 to vector<16x96xf32>
    %24 = arith.addf %23, %22 : vector<16x96xf32>
    %25 = arith.divf %23, %24 : vector<16x96xf32>
    %26 = vector.extract_strided_slice %19 {offsets = [0, 96], sizes = [16, 32], strides = [1, 1]} : vector<16x128xf32> to vector<16x32xf32>
    %27 = math.tanh %26 : vector<16x32xf32>
    %28 = vector.extract_strided_slice %25 {offsets = [0, 0], sizes = [16, 32], strides = [1, 1]} : vector<16x96xf32> to vector<16x32xf32>
    %29 = vector.extract_strided_slice %25 {offsets = [0, 32], sizes = [16, 32], strides = [1, 1]} : vector<16x96xf32> to vector<16x32xf32>
    %30 = vector.extract_strided_slice %25 {offsets = [0, 64], sizes = [16, 32], strides = [1, 1]} : vector<16x96xf32> to vector<16x32xf32>
    %31 = arith.mulf %29, %11 : vector<16x32xf32>
    %32 = arith.mulf %28, %27 : vector<16x32xf32>
    %33 = arith.addf %31, %32 : vector<16x32xf32>
    %34 = math.tanh %33 : vector<16x32xf32>
    %35 = arith.mulf %30, %34 : vector<16x32xf32>
    %36 = arith.truncf %35 : vector<16x32xf32> to vector<16x32xbf16>
    %37 = vector.extract_strided_slice %36 {offsets = [0, 0], sizes = [8, 32], strides = [1, 1]} : vector<16x32xbf16> to vector<8x32xbf16>
    %c0_13 = arith.constant 0 : index
    %c0_14 = arith.constant 0 : index
    %38 = vector.load %arg8[%c0_13, %c0_14] : memref<64x64xbf16, #tpu.memory_space<vmem>>, vector<8x32xbf16>
    tpu.vector_store %arg8[%c0_13, %c0_14], %37 {strides = array<i32>} : memref<64x64xbf16, #tpu.memory_space<vmem>>, vector<8x32xbf16>,
    %39 = vector.extract_strided_slice %36 {offsets = [8, 0], sizes = [8, 32], strides = [1, 1]} : vector<16x32xbf16> to vector<8x32xbf16>
    %c56 = arith.constant 56 : index
    %c32 = arith.constant 32 : index
    %40 = vector.load %arg8[%c56, %c32] : memref<64x64xbf16, #tpu.memory_space<vmem>>, vector<8x32xbf16>
    tpu.vector_store %arg8[%c56, %c32], %39 {strides = array<i32>} : memref<64x64xbf16, #tpu.memory_space<vmem>>, vector<8x32xbf16>,
    %cst_15 = arith.constant dense<0.000000e+00> : vector<16x256xf32>
    %41 = tpu.matmul %36, %9, %cst_15 {dimension_numbers = #tpu.dot_dimension_numbers<[1], [0], [0], [1], [0, 0, 1, 1], [], []>} : vector<16x32xbf16>, vector<32x256xbf16>, vector<16x256xf32> -> vector<16x256xf32>
    %42 = vector.extract_strided_slice %41 {offsets = [0, 0], sizes = [8, 128], strides = [1, 1]} : vector<16x256xf32> to vector<8x128xf32>
    %43 = vector.extract_strided_slice %7 {offsets = [8, 0], sizes = [8, 128], strides = [1, 1]} : vector<64x256xf32> to vector<8x128xf32>
    %44 = arith.addf %42, %43 : vector<8x128xf32>
    %45 = vector.extract_strided_slice %41 {offsets = [8, 128], sizes = [8, 128], strides = [1, 1]} : vector<16x256xf32> to vector<8x128xf32>
    %46 = vector.extract_strided_slice %7 {offsets = [48, 128], sizes = [8, 128], strides = [1, 1]} : vector<64x256xf32> to vector<8x128xf32>
    %47 = arith.addf %45, %46 : vector<8x128xf32>
    %48 = tpu.concatenate %44, %47 in 0 : vector<8x128xf32>, vector<8x128xf32> -> vector<16x128xf32>
    %49 = vector.extract_strided_slice %48 {offsets = [0, 0], sizes = [16, 96], strides = [1, 1]} : vector<16x128xf32> to vector<16x96xf32>
    %50 = arith.negf %49 : vector<16x96xf32>
    %51 = math.exp %50 : vector<16x96xf32>
    %cst_16 = arith.constant 1.000000e+00 : f32
    %52 = vector.broadcast %cst_16 : f32 to vector<16x96xf32>
    %53 = arith.addf %52, %51 : vector<16x96xf32>
    %54 = arith.divf %52, %53 : vector<16x96xf32>
    %55 = vector.extract_strided_slice %48 {offsets = [0, 96], sizes = [16, 32], strides = [1, 1]} : vector<16x128xf32> to vector<16x32xf32>
    %56 = math.tanh %55 : vector<16x32xf32>
    %57 = vector.extract_strided_slice %54 {offsets = [0, 0], sizes = [16, 32], strides = [1, 1]} : vector<16x96xf32> to vector<16x32xf32>
    %58 = vector.extract_strided_slice %54 {offsets = [0, 32], sizes = [16, 32], strides = [1, 1]} : vector<16x96xf32> to vector<16x32xf32>
    %59 = vector.extract_strided_slice %54 {offsets = [0, 64], sizes = [16, 32], strides = [1, 1]} : vector<16x96xf32> to vector<16x32xf32>
    %60 = arith.mulf %58, %33 : vector<16x32xf32>
    %61 = arith.mulf %57, %56 : vector<16x32xf32>
    %62 = arith.addf %60, %61 : vector<16x32xf32>
    %63 = math.tanh %62 : vector<16x32xf32>
    %64 = arith.mulf %59, %63 : vector<16x32xf32>
    %65 = arith.truncf %64 : vector<16x32xf32> to vector<16x32xbf16>
    %66 = vector.extract_strided_slice %65 {offsets = [0, 0], sizes = [8, 32], strides = [1, 1]} : vector<16x32xbf16> to vector<8x32xbf16>
    %c8 = arith.constant 8 : index
    %c0_17 = arith.constant 0 : index
    %67 = vector.load %arg8[%c8, %c0_17] : memref<64x64xbf16, #tpu.memory_space<vmem>>, vector<8x32xbf16>
    tpu.vector_store %arg8[%c8, %c0_17], %66 {strides = array<i32>} : memref<64x64xbf16, #tpu.memory_space<vmem>>, vector<8x32xbf16>,
    %68 = vector.extract_strided_slice %65 {offsets = [8, 0], sizes = [8, 32], strides = [1, 1]} : vector<16x32xbf16> to vector<8x32xbf16>
    %c48 = arith.constant 48 : index
    %c32_18 = arith.constant 32 : index
    %69 = vector.load %arg8[%c48, %c32_18] : memref<64x64xbf16, #tpu.memory_space<vmem>>, vector<8x32xbf16>
    tpu.vector_store %arg8[%c48, %c32_18], %68 {strides = array<i32>} : memref<64x64xbf16, #tpu.memory_space<vmem>>, vector<8x32xbf16>,
    %cst_19 = arith.constant dense<0.000000e+00> : vector<16x256xf32>
    %70 = tpu.matmul %65, %9, %cst_19 {dimension_numbers = #tpu.dot_dimension_numbers<[1], [0], [0], [1], [0, 0, 1, 1], [], []>} : vector<16x32xbf16>, vector<32x256xbf16>, vector<16x256xf32> -> vector<16x256xf32>
    %71 = vector.extract_strided_slice %70 {offsets = [0, 0], sizes = [8, 128], strides = [1, 1]} : vector<16x256xf32> to vector<8x128xf32>
    %72 = vector.extract_strided_slice %7 {offsets = [16, 0], sizes = [8, 128], strides = [1, 1]} : vector<64x256xf32> to vector<8x128xf32>
    %73 = arith.addf %71, %72 : vector<8x128xf32>
    %74 = vector.extract_strided_slice %70 {offsets = [8, 128], sizes = [8, 128], strides = [1, 1]} : vector<16x256xf32> to vector<8x128xf32>
    %75 = vector.extract_strided_slice %7 {offsets = [40, 128], sizes = [8, 128], strides = [1, 1]} : vector<64x256xf32> to vector<8x128xf32>
    %76 = arith.addf %74, %75 : vector<8x128xf32>
    %77 = tpu.concatenate %73, %76 in 0 : vector<8x128xf32>, vector<8x128xf32> -> vector<16x128xf32>
    %78 = vector.extract_strided_slice %77 {offsets = [0, 0], sizes = [16, 96], strides = [1, 1]} : vector<16x128xf32> to vector<16x96xf32>
    %79 = arith.negf %78 : vector<16x96xf32>
    %80 = math.exp %79 : vector<16x96xf32>
    %cst_20 = arith.constant 1.000000e+00 : f32
    %81 = vector.broadcast %cst_20 : f32 to vector<16x96xf32>
    %82 = arith.addf %81, %80 : vector<16x96xf32>
    %83 = arith.divf %81, %82 : vector<16x96xf32>
    %84 = vector.extract_strided_slice %77 {offsets = [0, 96], sizes = [16, 32], strides = [1, 1]} : vector<16x128xf32> to vector<16x32xf32>
    %85 = math.tanh %84 : vector<16x32xf32>
    %86 = vector.extract_strided_slice %83 {offsets = [0, 0], sizes = [16, 32], strides = [1, 1]} : vector<16x96xf32> to vector<16x32xf32>
    %87 = vector.extract_strided_slice %83 {offsets = [0, 32], sizes = [16, 32], strides = [1, 1]} : vector<16x96xf32> to vector<16x32xf32>
    %88 = vector.extract_strided_slice %83 {offsets = [0, 64], sizes = [16, 32], strides = [1, 1]} : vector<16x96xf32> to vector<16x32xf32>
    %89 = arith.mulf %87, %62 : vector<16x32xf32>
    %90 = arith.mulf %86, %85 : vector<16x32xf32>
    %91 = arith.addf %89, %90 : vector<16x32xf32>
    %92 = math.tanh %91 : vector<16x32xf32>
    %93 = arith.mulf %88, %92 : vector<16x32xf32>
    %94 = arith.truncf %93 : vector<16x32xf32> to vector<16x32xbf16>
    %95 = vector.extract_strided_slice %94 {offsets = [0, 0], sizes = [8, 32], strides = [1, 1]} : vector<16x32xbf16> to vector<8x32xbf16>
    %c16 = arith.constant 16 : index
    %c0_21 = arith.constant 0 : index
    %96 = vector.load %arg8[%c16, %c0_21] : memref<64x64xbf16, #tpu.memory_space<vmem>>, vector<8x32xbf16>
    tpu.vector_store %arg8[%c16, %c0_21], %95 {strides = array<i32>} : memref<64x64xbf16, #tpu.memory_space<vmem>>, vector<8x32xbf16>,
    %97 = vector.extract_strided_slice %94 {offsets = [8, 0], sizes = [8, 32], strides = [1, 1]} : vector<16x32xbf16> to vector<8x32xbf16>
    %c40 = arith.constant 40 : index
    %c32_22 = arith.constant 32 : index
    %98 = vector.load %arg8[%c40, %c32_22] : memref<64x64xbf16, #tpu.memory_space<vmem>>, vector<8x32xbf16>
    tpu.vector_store %arg8[%c40, %c32_22], %97 {strides = array<i32>} : memref<64x64xbf16, #tpu.memory_space<vmem>>, vector<8x32xbf16>,
    %cst_23 = arith.constant dense<0.000000e+00> : vector<16x256xf32>
    %99 = tpu.matmul %94, %9, %cst_23 {dimension_numbers = #tpu.dot_dimension_numbers<[1], [0], [0], [1], [0, 0, 1, 1], [], []>} : vector<16x32xbf16>, vector<32x256xbf16>, vector<16x256xf32> -> vector<16x256xf32>
    %100 = vector.extract_strided_slice %99 {offsets = [0, 0], sizes = [8, 128], strides = [1, 1]} : vector<16x256xf32> to vector<8x128xf32>
    %101 = vector.extract_strided_slice %7 {offsets = [24, 0], sizes = [8, 128], strides = [1, 1]} : vector<64x256xf32> to vector<8x128xf32>
    %102 = arith.addf %100, %101 : vector<8x128xf32>
    %103 = vector.extract_strided_slice %99 {offsets = [8, 128], sizes = [8, 128], strides = [1, 1]} : vector<16x256xf32> to vector<8x128xf32>
    %104 = vector.extract_strided_slice %7 {offsets = [32, 128], sizes = [8, 128], strides = [1, 1]} : vector<64x256xf32> to vector<8x128xf32>
    %105 = arith.addf %103, %104 : vector<8x128xf32>
    %106 = tpu.concatenate %102, %105 in 0 : vector<8x128xf32>, vector<8x128xf32> -> vector<16x128xf32>
    %107 = vector.extract_strided_slice %106 {offsets = [0, 0], sizes = [16, 96], strides = [1, 1]} : vector<16x128xf32> to vector<16x96xf32>
    %108 = arith.negf %107 : vector<16x96xf32>
    %109 = math.exp %108 : vector<16x96xf32>
    %cst_24 = arith.constant 1.000000e+00 : f32
    %110 = vector.broadcast %cst_24 : f32 to vector<16x96xf32>
    %111 = arith.addf %110, %109 : vector<16x96xf32>
    %112 = arith.divf %110, %111 : vector<16x96xf32>
    %113 = vector.extract_strided_slice %106 {offsets = [0, 96], sizes = [16, 32], strides = [1, 1]} : vector<16x128xf32> to vector<16x32xf32>
    %114 = math.tanh %113 : vector<16x32xf32>
    %115 = vector.extract_strided_slice %112 {offsets = [0, 0], sizes = [16, 32], strides = [1, 1]} : vector<16x96xf32> to vector<16x32xf32>
    %116 = vector.extract_strided_slice %112 {offsets = [0, 32], sizes = [16, 32], strides = [1, 1]} : vector<16x96xf32> to vector<16x32xf32>
    %117 = vector.extract_strided_slice %112 {offsets = [0, 64], sizes = [16, 32], strides = [1, 1]} : vector<16x96xf32> to vector<16x32xf32>
    %118 = arith.mulf %116, %91 : vector<16x32xf32>
    %119 = arith.mulf %115, %114 : vector<16x32xf32>
    %120 = arith.addf %118, %119 : vector<16x32xf32>
    %121 = math.tanh %120 : vector<16x32xf32>
    %122 = arith.mulf %117, %121 : vector<16x32xf32>
    %123 = arith.truncf %122 : vector<16x32xf32> to vector<16x32xbf16>
    %124 = vector.extract_strided_slice %123 {offsets = [0, 0], sizes = [8, 32], strides = [1, 1]} : vector<16x32xbf16> to vector<8x32xbf16>
    %c24 = arith.constant 24 : index
    %c0_25 = arith.constant 0 : index
    %125 = vector.load %arg8[%c24, %c0_25] : memref<64x64xbf16, #tpu.memory_space<vmem>>, vector<8x32xbf16>
    tpu.vector_store %arg8[%c24, %c0_25], %124 {strides = array<i32>} : memref<64x64xbf16, #tpu.memory_space<vmem>>, vector<8x32xbf16>,
    %126 = vector.extract_strided_slice %123 {offsets = [8, 0], sizes = [8, 32], strides = [1, 1]} : vector<16x32xbf16> to vector<8x32xbf16>
    %c32_26 = arith.constant 32 : index
    %c32_27 = arith.constant 32 : index
    %127 = vector.load %arg8[%c32_26, %c32_27] : memref<64x64xbf16, #tpu.memory_space<vmem>>, vector<8x32xbf16>
    tpu.vector_store %arg8[%c32_26, %c32_27], %126 {strides = array<i32>} : memref<64x64xbf16, #tpu.memory_space<vmem>>, vector<8x32xbf16>,
    %cst_28 = arith.constant dense<0.000000e+00> : vector<16x256xf32>
    %128 = tpu.matmul %123, %9, %cst_28 {dimension_numbers = #tpu.dot_dimension_numbers<[1], [0], [0], [1], [0, 0, 1, 1], [], []>} : vector<16x32xbf16>, vector<32x256xbf16>, vector<16x256xf32> -> vector<16x256xf32>
    %129 = vector.extract_strided_slice %128 {offsets = [0, 0], sizes = [8, 128], strides = [1, 1]} : vector<16x256xf32> to vector<8x128xf32>
    %130 = vector.extract_strided_slice %7 {offsets = [32, 0], sizes = [8, 128], strides = [1, 1]} : vector<64x256xf32> to vector<8x128xf32>
    %131 = arith.addf %129, %130 : vector<8x128xf32>
    %132 = vector.extract_strided_slice %128 {offsets = [8, 128], sizes = [8, 128], strides = [1, 1]} : vector<16x256xf32> to vector<8x128xf32>
    %133 = vector.extract_strided_slice %7 {offsets = [24, 128], sizes = [8, 128], strides = [1, 1]} : vector<64x256xf32> to vector<8x128xf32>
    %134 = arith.addf %132, %133 : vector<8x128xf32>
    %135 = tpu.concatenate %131, %134 in 0 : vector<8x128xf32>, vector<8x128xf32> -> vector<16x128xf32>
    %136 = vector.extract_strided_slice %135 {offsets = [0, 0], sizes = [16, 96], strides = [1, 1]} : vector<16x128xf32> to vector<16x96xf32>
    %137 = arith.negf %136 : vector<16x96xf32>
    %138 = math.exp %137 : vector<16x96xf32>
    %cst_29 = arith.constant 1.000000e+00 : f32
    %139 = vector.broadcast %cst_29 : f32 to vector<16x96xf32>
    %140 = arith.addf %139, %138 : vector<16x96xf32>
    %141 = arith.divf %139, %140 : vector<16x96xf32>
    %142 = vector.extract_strided_slice %135 {offsets = [0, 96], sizes = [16, 32], strides = [1, 1]} : vector<16x128xf32> to vector<16x32xf32>
    %143 = math.tanh %142 : vector<16x32xf32>
    %144 = vector.extract_strided_slice %141 {offsets = [0, 0], sizes = [16, 32], strides = [1, 1]} : vector<16x96xf32> to vector<16x32xf32>
    %145 = vector.extract_strided_slice %141 {offsets = [0, 32], sizes = [16, 32], strides = [1, 1]} : vector<16x96xf32> to vector<16x32xf32>
    %146 = vector.extract_strided_slice %141 {offsets = [0, 64], sizes = [16, 32], strides = [1, 1]} : vector<16x96xf32> to vector<16x32xf32>
    %147 = arith.mulf %145, %120 : vector<16x32xf32>
    %148 = arith.mulf %144, %143 : vector<16x32xf32>
    %149 = arith.addf %147, %148 : vector<16x32xf32>
    %150 = math.tanh %149 : vector<16x32xf32>
    %151 = arith.mulf %146, %150 : vector<16x32xf32>
    %152 = arith.truncf %151 : vector<16x32xf32> to vector<16x32xbf16>
    %153 = vector.extract_strided_slice %152 {offsets = [0, 0], sizes = [8, 32], strides = [1, 1]} : vector<16x32xbf16> to vector<8x32xbf16>
    %c32_30 = arith.constant 32 : index
    %c0_31 = arith.constant 0 : index
    %154 = vector.load %arg8[%c32_30, %c0_31] : memref<64x64xbf16, #tpu.memory_space<vmem>>, vector<8x32xbf16>
    tpu.vector_store %arg8[%c32_30, %c0_31], %153 {strides = array<i32>} : memref<64x64xbf16, #tpu.memory_space<vmem>>, vector<8x32xbf16>,
    %155 = vector.extract_strided_slice %152 {offsets = [8, 0], sizes = [8, 32], strides = [1, 1]} : vector<16x32xbf16> to vector<8x32xbf16>
    %c24_32 = arith.constant 24 : index
    %c32_33 = arith.constant 32 : index
    %156 = vector.load %arg8[%c24_32, %c32_33] : memref<64x64xbf16, #tpu.memory_space<vmem>>, vector<8x32xbf16>
    tpu.vector_store %arg8[%c24_32, %c32_33], %155 {strides = array<i32>} : memref<64x64xbf16, #tpu.memory_space<vmem>>, vector<8x32xbf16>,
    %cst_34 = arith.constant dense<0.000000e+00> : vector<16x256xf32>
    %157 = tpu.matmul %152, %9, %cst_34 {dimension_numbers = #tpu.dot_dimension_numbers<[1], [0], [0], [1], [0, 0, 1, 1], [], []>} : vector<16x32xbf16>, vector<32x256xbf16>, vector<16x256xf32> -> vector<16x256xf32>
    %158 = vector.extract_strided_slice %157 {offsets = [0, 0], sizes = [8, 128], strides = [1, 1]} : vector<16x256xf32> to vector<8x128xf32>
    %159 = vector.extract_strided_slice %7 {offsets = [40, 0], sizes = [8, 128], strides = [1, 1]} : vector<64x256xf32> to vector<8x128xf32>
    %160 = arith.addf %158, %159 : vector<8x128xf32>
    %161 = vector.extract_strided_slice %157 {offsets = [8, 128], sizes = [8, 128], strides = [1, 1]} : vector<16x256xf32> to vector<8x128xf32>
    %162 = vector.extract_strided_slice %7 {offsets = [16, 128], sizes = [8, 128], strides = [1, 1]} : vector<64x256xf32> to vector<8x128xf32>
    %163 = arith.addf %161, %162 : vector<8x128xf32>
    %164 = tpu.concatenate %160, %163 in 0 : vector<8x128xf32>, vector<8x128xf32> -> vector<16x128xf32>
    %165 = vector.extract_strided_slice %164 {offsets = [0, 0], sizes = [16, 96], strides = [1, 1]} : vector<16x128xf32> to vector<16x96xf32>
    %166 = arith.negf %165 : vector<16x96xf32>
    %167 = math.exp %166 : vector<16x96xf32>
    %cst_35 = arith.constant 1.000000e+00 : f32
    %168 = vector.broadcast %cst_35 : f32 to vector<16x96xf32>
    %169 = arith.addf %168, %167 : vector<16x96xf32>
    %170 = arith.divf %168, %169 : vector<16x96xf32>
    %171 = vector.extract_strided_slice %164 {offsets = [0, 96], sizes = [16, 32], strides = [1, 1]} : vector<16x128xf32> to vector<16x32xf32>
    %172 = math.tanh %171 : vector<16x32xf32>
    %173 = vector.extract_strided_slice %170 {offsets = [0, 0], sizes = [16, 32], strides = [1, 1]} : vector<16x96xf32> to vector<16x32xf32>
    %174 = vector.extract_strided_slice %170 {offsets = [0, 32], sizes = [16, 32], strides = [1, 1]} : vector<16x96xf32> to vector<16x32xf32>
    %175 = vector.extract_strided_slice %170 {offsets = [0, 64], sizes = [16, 32], strides = [1, 1]} : vector<16x96xf32> to vector<16x32xf32>
    %176 = arith.mulf %174, %149 : vector<16x32xf32>
    %177 = arith.mulf %173, %172 : vector<16x32xf32>
    %178 = arith.addf %176, %177 : vector<16x32xf32>
    %179 = math.tanh %178 : vector<16x32xf32>
    %180 = arith.mulf %175, %179 : vector<16x32xf32>
    %181 = arith.truncf %180 : vector<16x32xf32> to vector<16x32xbf16>
    %182 = vector.extract_strided_slice %181 {offsets = [0, 0], sizes = [8, 32], strides = [1, 1]} : vector<16x32xbf16> to vector<8x32xbf16>
    %c40_36 = arith.constant 40 : index
    %c0_37 = arith.constant 0 : index
    %183 = vector.load %arg8[%c40_36, %c0_37] : memref<64x64xbf16, #tpu.memory_space<vmem>>, vector<8x32xbf16>
    tpu.vector_store %arg8[%c40_36, %c0_37], %182 {strides = array<i32>} : memref<64x64xbf16, #tpu.memory_space<vmem>>, vector<8x32xbf16>,
    %184 = vector.extract_strided_slice %181 {offsets = [8, 0], sizes = [8, 32], strides = [1, 1]} : vector<16x32xbf16> to vector<8x32xbf16>
    %c16_38 = arith.constant 16 : index
    %c32_39 = arith.constant 32 : index
    %185 = vector.load %arg8[%c16_38, %c32_39] : memref<64x64xbf16, #tpu.memory_space<vmem>>, vector<8x32xbf16>
    tpu.vector_store %arg8[%c16_38, %c32_39], %184 {strides = array<i32>} : memref<64x64xbf16, #tpu.memory_space<vmem>>, vector<8x32xbf16>,
    %cst_40 = arith.constant dense<0.000000e+00> : vector<16x256xf32>
    %186 = tpu.matmul %181, %9, %cst_40 {dimension_numbers = #tpu.dot_dimension_numbers<[1], [0], [0], [1], [0, 0, 1, 1], [], []>} : vector<16x32xbf16>, vector<32x256xbf16>, vector<16x256xf32> -> vector<16x256xf32>
    %187 = vector.extract_strided_slice %186 {offsets = [0, 0], sizes = [8, 128], strides = [1, 1]} : vector<16x256xf32> to vector<8x128xf32>
    %188 = vector.extract_strided_slice %7 {offsets = [48, 0], sizes = [8, 128], strides = [1, 1]} : vector<64x256xf32> to vector<8x128xf32>
    %189 = arith.addf %187, %188 : vector<8x128xf32>
    %190 = vector.extract_strided_slice %186 {offsets = [8, 128], sizes = [8, 128], strides = [1, 1]} : vector<16x256xf32> to vector<8x128xf32>
    %191 = vector.extract_strided_slice %7 {offsets = [8, 128], sizes = [8, 128], strides = [1, 1]} : vector<64x256xf32> to vector<8x128xf32>
    %192 = arith.addf %190, %191 : vector<8x128xf32>
    %193 = tpu.concatenate %189, %192 in 0 : vector<8x128xf32>, vector<8x128xf32> -> vector<16x128xf32>
    %194 = vector.extract_strided_slice %193 {offsets = [0, 0], sizes = [16, 96], strides = [1, 1]} : vector<16x128xf32> to vector<16x96xf32>
    %195 = arith.negf %194 : vector<16x96xf32>
    %196 = math.exp %195 : vector<16x96xf32>
    %cst_41 = arith.constant 1.000000e+00 : f32
    %197 = vector.broadcast %cst_41 : f32 to vector<16x96xf32>
    %198 = arith.addf %197, %196 : vector<16x96xf32>
    %199 = arith.divf %197, %198 : vector<16x96xf32>
    %200 = vector.extract_strided_slice %193 {offsets = [0, 96], sizes = [16, 32], strides = [1, 1]} : vector<16x128xf32> to vector<16x32xf32>
    %201 = math.tanh %200 : vector<16x32xf32>
    %202 = vector.extract_strided_slice %199 {offsets = [0, 0], sizes = [16, 32], strides = [1, 1]} : vector<16x96xf32> to vector<16x32xf32>
    %203 = vector.extract_strided_slice %199 {offsets = [0, 32], sizes = [16, 32], strides = [1, 1]} : vector<16x96xf32> to vector<16x32xf32>
    %204 = vector.extract_strided_slice %199 {offsets = [0, 64], sizes = [16, 32], strides = [1, 1]} : vector<16x96xf32> to vector<16x32xf32>
    %205 = arith.mulf %203, %178 : vector<16x32xf32>
    %206 = arith.mulf %202, %201 : vector<16x32xf32>
    %207 = arith.addf %205, %206 : vector<16x32xf32>
    %208 = math.tanh %207 : vector<16x32xf32>
    %209 = arith.mulf %204, %208 : vector<16x32xf32>
    %210 = arith.truncf %209 : vector<16x32xf32> to vector<16x32xbf16>
    %211 = vector.extract_strided_slice %210 {offsets = [0, 0], sizes = [8, 32], strides = [1, 1]} : vector<16x32xbf16> to vector<8x32xbf16>
    %c48_42 = arith.constant 48 : index
    %c0_43 = arith.constant 0 : index
    %212 = vector.load %arg8[%c48_42, %c0_43] : memref<64x64xbf16, #tpu.memory_space<vmem>>, vector<8x32xbf16>
    tpu.vector_store %arg8[%c48_42, %c0_43], %211 {strides = array<i32>} : memref<64x64xbf16, #tpu.memory_space<vmem>>, vector<8x32xbf16>,
    %213 = vector.extract_strided_slice %210 {offsets = [8, 0], sizes = [8, 32], strides = [1, 1]} : vector<16x32xbf16> to vector<8x32xbf16>
    %c8_44 = arith.constant 8 : index
    %c32_45 = arith.constant 32 : index
    %214 = vector.load %arg8[%c8_44, %c32_45] : memref<64x64xbf16, #tpu.memory_space<vmem>>, vector<8x32xbf16>
    tpu.vector_store %arg8[%c8_44, %c32_45], %213 {strides = array<i32>} : memref<64x64xbf16, #tpu.memory_space<vmem>>, vector<8x32xbf16>,
    %cst_46 = arith.constant dense<0.000000e+00> : vector<16x256xf32>
    %215 = tpu.matmul %210, %9, %cst_46 {dimension_numbers = #tpu.dot_dimension_numbers<[1], [0], [0], [1], [0, 0, 1, 1], [], []>} : vector<16x32xbf16>, vector<32x256xbf16>, vector<16x256xf32> -> vector<16x256xf32>
    %216 = vector.extract_strided_slice %215 {offsets = [0, 0], sizes = [8, 128], strides = [1, 1]} : vector<16x256xf32> to vector<8x128xf32>
    %217 = vector.extract_strided_slice %7 {offsets = [56, 0], sizes = [8, 128], strides = [1, 1]} : vector<64x256xf32> to vector<8x128xf32>
    %218 = arith.addf %216, %217 : vector<8x128xf32>
    %219 = vector.extract_strided_slice %215 {offsets = [8, 128], sizes = [8, 128], strides = [1, 1]} : vector<16x256xf32> to vector<8x128xf32>
    %220 = vector.extract_strided_slice %7 {offsets = [0, 128], sizes = [8, 128], strides = [1, 1]} : vector<64x256xf32> to vector<8x128xf32>
    %221 = arith.addf %219, %220 : vector<8x128xf32>
    %222 = tpu.concatenate %218, %221 in 0 : vector<8x128xf32>, vector<8x128xf32> -> vector<16x128xf32>
    %223 = vector.extract_strided_slice %222 {offsets = [0, 0], sizes = [16, 96], strides = [1, 1]} : vector<16x128xf32> to vector<16x96xf32>
    %224 = arith.negf %223 : vector<16x96xf32>
    %225 = math.exp %224 : vector<16x96xf32>
    %cst_47 = arith.constant 1.000000e+00 : f32
    %226 = vector.broadcast %cst_47 : f32 to vector<16x96xf32>
    %227 = arith.addf %226, %225 : vector<16x96xf32>
    %228 = arith.divf %226, %227 : vector<16x96xf32>
    %229 = vector.extract_strided_slice %222 {offsets = [0, 96], sizes = [16, 32], strides = [1, 1]} : vector<16x128xf32> to vector<16x32xf32>
    %230 = math.tanh %229 : vector<16x32xf32>
    %231 = vector.extract_strided_slice %228 {offsets = [0, 0], sizes = [16, 32], strides = [1, 1]} : vector<16x96xf32> to vector<16x32xf32>
    %232 = vector.extract_strided_slice %228 {offsets = [0, 32], sizes = [16, 32], strides = [1, 1]} : vector<16x96xf32> to vector<16x32xf32>
    %233 = vector.extract_strided_slice %228 {offsets = [0, 64], sizes = [16, 32], strides = [1, 1]} : vector<16x96xf32> to vector<16x32xf32>
    %234 = arith.mulf %232, %207 : vector<16x32xf32>
    %235 = arith.mulf %231, %230 : vector<16x32xf32>
    %236 = arith.addf %234, %235 : vector<16x32xf32>
    %237 = math.tanh %236 : vector<16x32xf32>
    %238 = arith.mulf %233, %237 : vector<16x32xf32>
    %239 = arith.truncf %238 : vector<16x32xf32> to vector<16x32xbf16>
    %240 = vector.extract_strided_slice %239 {offsets = [0, 0], sizes = [8, 32], strides = [1, 1]} : vector<16x32xbf16> to vector<8x32xbf16>
    %c56_48 = arith.constant 56 : index
    %c0_49 = arith.constant 0 : index
    %241 = vector.load %arg8[%c56_48, %c0_49] : memref<64x64xbf16, #tpu.memory_space<vmem>>, vector<8x32xbf16>
    tpu.vector_store %arg8[%c56_48, %c0_49], %240 {strides = array<i32>} : memref<64x64xbf16, #tpu.memory_space<vmem>>, vector<8x32xbf16>,
    %242 = vector.extract_strided_slice %239 {offsets = [8, 0], sizes = [8, 32], strides = [1, 1]} : vector<16x32xbf16> to vector<8x32xbf16>
    %c0_50 = arith.constant 0 : index
    %c32_51 = arith.constant 32 : index
    %243 = vector.load %arg8[%c0_50, %c32_51] : memref<64x64xbf16, #tpu.memory_space<vmem>>, vector<8x32xbf16>
    tpu.vector_store %arg8[%c0_50, %c32_51], %242 {strides = array<i32>} : memref<64x64xbf16, #tpu.memory_space<vmem>>, vector<8x32xbf16>,
    %c0_52 = arith.constant 0 : index
    %c0_53 = arith.constant 0 : index
    %244 = vector.load %arg8[%c0_52, %c0_53] : memref<64x64xbf16, #tpu.memory_space<vmem>>, vector<64x64xbf16>
    %c0_54 = arith.constant 0 : index
    %c0_55 = arith.constant 0 : index
    %245 = vector.load %arg2[%c0_54, %c0_55] : memref<64x256xbf16, #tpu.memory_space<vmem>>, vector<64x256xbf16>
    %cst_56 = arith.constant dense<0.000000e+00> : vector<64x256xf32>
    %246 = tpu.matmul %244, %245, %cst_56 {dimension_numbers = #tpu.dot_dimension_numbers<[1], [0], [0], [1], [0, 0, 1, 1], [], []>} : vector<64x64xbf16>, vector<64x256xbf16>, vector<64x256xf32> -> vector<64x256xf32>
    %c1 = arith.constant 1 : index
    %c0_57 = arith.constant 0 : index
    %c0_58 = arith.constant 0 : index
    %247 = vector.load %arg4[%c1, %c0_57, %c0_58] : memref<2x1x256xf32, #tpu.memory_space<vmem>>, vector<1x1x256xf32>
    %248 = vector.shape_cast %247 : vector<1x1x256xf32> to vector<1x256xf32>
    %249 = vector.broadcast %248 : vector<1x256xf32> to vector<64x256xf32>
    %250 = arith.addf %246, %249 : vector<64x256xf32>
    %c1_59 = arith.constant 1 : index
    %c0_60 = arith.constant 0 : index
    %c0_61 = arith.constant 0 : index
    %251 = vector.load %arg3[%c1_59, %c0_60, %c0_61] : memref<2x32x256xbf16, #tpu.memory_space<vmem>>, vector<1x32x256xbf16>
    %252 = vector.shape_cast %251 : vector<1x32x256xbf16> to vector<32x256xbf16>
    %cst_62 = arith.constant 0.000000e+00 : bf16
    %253 = vector.broadcast %cst_62 : bf16 to vector<16x32xbf16>
    %cst_63 = arith.constant 0.000000e+00 : f32
    %254 = vector.broadcast %cst_63 : f32 to vector<16x32xf32>
    %cst_64 = arith.constant dense<0.000000e+00> : vector<16x256xf32>
    %255 = tpu.matmul %253, %252, %cst_64 {dimension_numbers = #tpu.dot_dimension_numbers<[1], [0], [0], [1], [0, 0, 1, 1], [], []>} : vector<16x32xbf16>, vector<32x256xbf16>, vector<16x256xf32> -> vector<16x256xf32>
    %256 = vector.extract_strided_slice %255 {offsets = [0, 0], sizes = [8, 128], strides = [1, 1]} : vector<16x256xf32> to vector<8x128xf32>
    %257 = vector.extract_strided_slice %250 {offsets = [0, 0], sizes = [8, 128], strides = [1, 1]} : vector<64x256xf32> to vector<8x128xf32>
    %258 = arith.addf %256, %257 : vector<8x128xf32>
    %259 = vector.extract_strided_slice %255 {offsets = [8, 128], sizes = [8, 128], strides = [1, 1]} : vector<16x256xf32> to vector<8x128xf32>
    %260 = vector.extract_strided_slice %250 {offsets = [56, 128], sizes = [8, 128], strides = [1, 1]} : vector<64x256xf32> to vector<8x128xf32>
    %261 = arith.addf %259, %260 : vector<8x128xf32>
    %262 = tpu.concatenate %258, %261 in 0 : vector<8x128xf32>, vector<8x128xf32> -> vector<16x128xf32>
    %263 = vector.extract_strided_slice %262 {offsets = [0, 0], sizes = [16, 96], strides = [1, 1]} : vector<16x128xf32> to vector<16x96xf32>
    %264 = arith.negf %263 : vector<16x96xf32>
    %265 = math.exp %264 : vector<16x96xf32>
    %cst_65 = arith.constant 1.000000e+00 : f32
    %266 = vector.broadcast %cst_65 : f32 to vector<16x96xf32>
    %267 = arith.addf %266, %265 : vector<16x96xf32>
    %268 = arith.divf %266, %267 : vector<16x96xf32>
    %269 = vector.extract_strided_slice %262 {offsets = [0, 96], sizes = [16, 32], strides = [1, 1]} : vector<16x128xf32> to vector<16x32xf32>
    %270 = math.tanh %269 : vector<16x32xf32>
    %271 = vector.extract_strided_slice %268 {offsets = [0, 0], sizes = [16, 32], strides = [1, 1]} : vector<16x96xf32> to vector<16x32xf32>
    %272 = vector.extract_strided_slice %268 {offsets = [0, 32], sizes = [16, 32], strides = [1, 1]} : vector<16x96xf32> to vector<16x32xf32>
    %273 = vector.extract_strided_slice %268 {offsets = [0, 64], sizes = [16, 32], strides = [1, 1]} : vector<16x96xf32> to vector<16x32xf32>
    %274 = arith.mulf %272, %254 : vector<16x32xf32>
    %275 = arith.mulf %271, %270 : vector<16x32xf32>
    %276 = arith.addf %274, %275 : vector<16x32xf32>
    %277 = math.tanh %276 : vector<16x32xf32>
    %278 = arith.mulf %273, %277 : vector<16x32xf32>
    %279 = arith.truncf %278 : vector<16x32xf32> to vector<16x32xbf16>
    %280 = vector.extract_strided_slice %279 {offsets = [0, 0], sizes = [8, 32], strides = [1, 1]} : vector<16x32xbf16> to vector<8x32xbf16>
    %c0_66 = arith.constant 0 : index
    %c0_67 = arith.constant 0 : index
    %281 = vector.load %arg9[%c0_66, %c0_67] : memref<64x64xbf16, #tpu.memory_space<vmem>>, vector<8x32xbf16>
    tpu.vector_store %arg9[%c0_66, %c0_67], %280 {strides = array<i32>} : memref<64x64xbf16, #tpu.memory_space<vmem>>, vector<8x32xbf16>,
    %282 = vector.extract_strided_slice %279 {offsets = [8, 0], sizes = [8, 32], strides = [1, 1]} : vector<16x32xbf16> to vector<8x32xbf16>
    %c56_68 = arith.constant 56 : index
    %c32_69 = arith.constant 32 : index
    %283 = vector.load %arg9[%c56_68, %c32_69] : memref<64x64xbf16, #tpu.memory_space<vmem>>, vector<8x32xbf16>
    tpu.vector_store %arg9[%c56_68, %c32_69], %282 {strides = array<i32>} : memref<64x64xbf16, #tpu.memory_space<vmem>>, vector<8x32xbf16>,
    %cst_70 = arith.constant dense<0.000000e+00> : vector<16x256xf32>
    %284 = tpu.matmul %279, %252, %cst_70 {dimension_numbers = #tpu.dot_dimension_numbers<[1], [0], [0], [1], [0, 0, 1, 1], [], []>} : vector<16x32xbf16>, vector<32x256xbf16>, vector<16x256xf32> -> vector<16x256xf32>
    %285 = vector.extract_strided_slice %284 {offsets = [0, 0], sizes = [8, 128], strides = [1, 1]} : vector<16x256xf32> to vector<8x128xf32>
    %286 = vector.extract_strided_slice %250 {offsets = [8, 0], sizes = [8, 128], strides = [1, 1]} : vector<64x256xf32> to vector<8x128xf32>
    %287 = arith.addf %285, %286 : vector<8x128xf32>
    %288 = vector.extract_strided_slice %284 {offsets = [8, 128], sizes = [8, 128], strides = [1, 1]} : vector<16x256xf32> to vector<8x128xf32>
    %289 = vector.extract_strided_slice %250 {offsets = [48, 128], sizes = [8, 128], strides = [1, 1]} : vector<64x256xf32> to vector<8x128xf32>
    %290 = arith.addf %288, %289 : vector<8x128xf32>
    %291 = tpu.concatenate %287, %290 in 0 : vector<8x128xf32>, vector<8x128xf32> -> vector<16x128xf32>
    %292 = vector.extract_strided_slice %291 {offsets = [0, 0], sizes = [16, 96], strides = [1, 1]} : vector<16x128xf32> to vector<16x96xf32>
    %293 = arith.negf %292 : vector<16x96xf32>
    %294 = math.exp %293 : vector<16x96xf32>
    %cst_71 = arith.constant 1.000000e+00 : f32
    %295 = vector.broadcast %cst_71 : f32 to vector<16x96xf32>
    %296 = arith.addf %295, %294 : vector<16x96xf32>
    %297 = arith.divf %295, %296 : vector<16x96xf32>
    %298 = vector.extract_strided_slice %291 {offsets = [0, 96], sizes = [16, 32], strides = [1, 1]} : vector<16x128xf32> to vector<16x32xf32>
    %299 = math.tanh %298 : vector<16x32xf32>
    %300 = vector.extract_strided_slice %297 {offsets = [0, 0], sizes = [16, 32], strides = [1, 1]} : vector<16x96xf32> to vector<16x32xf32>
    %301 = vector.extract_strided_slice %297 {offsets = [0, 32], sizes = [16, 32], strides = [1, 1]} : vector<16x96xf32> to vector<16x32xf32>
    %302 = vector.extract_strided_slice %297 {offsets = [0, 64], sizes = [16, 32], strides = [1, 1]} : vector<16x96xf32> to vector<16x32xf32>
    %303 = arith.mulf %301, %276 : vector<16x32xf32>
    %304 = arith.mulf %300, %299 : vector<16x32xf32>
    %305 = arith.addf %303, %304 : vector<16x32xf32>
    %306 = math.tanh %305 : vector<16x32xf32>
    %307 = arith.mulf %302, %306 : vector<16x32xf32>
    %308 = arith.truncf %307 : vector<16x32xf32> to vector<16x32xbf16>
    %309 = vector.extract_strided_slice %308 {offsets = [0, 0], sizes = [8, 32], strides = [1, 1]} : vector<16x32xbf16> to vector<8x32xbf16>
    %c8_72 = arith.constant 8 : index
    %c0_73 = arith.constant 0 : index
    %310 = vector.load %arg9[%c8_72, %c0_73] : memref<64x64xbf16, #tpu.memory_space<vmem>>, vector<8x32xbf16>
    tpu.vector_store %arg9[%c8_72, %c0_73], %309 {strides = array<i32>} : memref<64x64xbf16, #tpu.memory_space<vmem>>, vector<8x32xbf16>,
    %311 = vector.extract_strided_slice %308 {offsets = [8, 0], sizes = [8, 32], strides = [1, 1]} : vector<16x32xbf16> to vector<8x32xbf16>
    %c48_74 = arith.constant 48 : index
    %c32_75 = arith.constant 32 : index
    %312 = vector.load %arg9[%c48_74, %c32_75] : memref<64x64xbf16, #tpu.memory_space<vmem>>, vector<8x32xbf16>
    tpu.vector_store %arg9[%c48_74, %c32_75], %311 {strides = array<i32>} : memref<64x64xbf16, #tpu.memory_space<vmem>>, vector<8x32xbf16>,
    %cst_76 = arith.constant dense<0.000000e+00> : vector<16x256xf32>
    %313 = tpu.matmul %308, %252, %cst_76 {dimension_numbers = #tpu.dot_dimension_numbers<[1], [0], [0], [1], [0, 0, 1, 1], [], []>} : vector<16x32xbf16>, vector<32x256xbf16>, vector<16x256xf32> -> vector<16x256xf32>
    %314 = vector.extract_strided_slice %313 {offsets = [0, 0], sizes = [8, 128], strides = [1, 1]} : vector<16x256xf32> to vector<8x128xf32>
    %315 = vector.extract_strided_slice %250 {offsets = [16, 0], sizes = [8, 128], strides = [1, 1]} : vector<64x256xf32> to vector<8x128xf32>
    %316 = arith.addf %314, %315 : vector<8x128xf32>
    %317 = vector.extract_strided_slice %313 {offsets = [8, 128], sizes = [8, 128], strides = [1, 1]} : vector<16x256xf32> to vector<8x128xf32>
    %318 = vector.extract_strided_slice %250 {offsets = [40, 128], sizes = [8, 128], strides = [1, 1]} : vector<64x256xf32> to vector<8x128xf32>
    %319 = arith.addf %317, %318 : vector<8x128xf32>
    %320 = tpu.concatenate %316, %319 in 0 : vector<8x128xf32>, vector<8x128xf32> -> vector<16x128xf32>
    %321 = vector.extract_strided_slice %320 {offsets = [0, 0], sizes = [16, 96], strides = [1, 1]} : vector<16x128xf32> to vector<16x96xf32>
    %322 = arith.negf %321 : vector<16x96xf32>
    %323 = math.exp %322 : vector<16x96xf32>
    %cst_77 = arith.constant 1.000000e+00 : f32
    %324 = vector.broadcast %cst_77 : f32 to vector<16x96xf32>
    %325 = arith.addf %324, %323 : vector<16x96xf32>
    %326 = arith.divf %324, %325 : vector<16x96xf32>
    %327 = vector.extract_strided_slice %320 {offsets = [0, 96], sizes = [16, 32], strides = [1, 1]} : vector<16x128xf32> to vector<16x32xf32>
    %328 = math.tanh %327 : vector<16x32xf32>
    %329 = vector.extract_strided_slice %326 {offsets = [0, 0], sizes = [16, 32], strides = [1, 1]} : vector<16x96xf32> to vector<16x32xf32>
    %330 = vector.extract_strided_slice %326 {offsets = [0, 32], sizes = [16, 32], strides = [1, 1]} : vector<16x96xf32> to vector<16x32xf32>
    %331 = vector.extract_strided_slice %326 {offsets = [0, 64], sizes = [16, 32], strides = [1, 1]} : vector<16x96xf32> to vector<16x32xf32>
    %332 = arith.mulf %330, %305 : vector<16x32xf32>
    %333 = arith.mulf %329, %328 : vector<16x32xf32>
    %334 = arith.addf %332, %333 : vector<16x32xf32>
    %335 = math.tanh %334 : vector<16x32xf32>
    %336 = arith.mulf %331, %335 : vector<16x32xf32>
    %337 = arith.truncf %336 : vector<16x32xf32> to vector<16x32xbf16>
    %338 = vector.extract_strided_slice %337 {offsets = [0, 0], sizes = [8, 32], strides = [1, 1]} : vector<16x32xbf16> to vector<8x32xbf16>
    %c16_78 = arith.constant 16 : index
    %c0_79 = arith.constant 0 : index
    %339 = vector.load %arg9[%c16_78, %c0_79] : memref<64x64xbf16, #tpu.memory_space<vmem>>, vector<8x32xbf16>
    tpu.vector_store %arg9[%c16_78, %c0_79], %338 {strides = array<i32>} : memref<64x64xbf16, #tpu.memory_space<vmem>>, vector<8x32xbf16>,
    %340 = vector.extract_strided_slice %337 {offsets = [8, 0], sizes = [8, 32], strides = [1, 1]} : vector<16x32xbf16> to vector<8x32xbf16>
    %c40_80 = arith.constant 40 : index
    %c32_81 = arith.constant 32 : index
    %341 = vector.load %arg9[%c40_80, %c32_81] : memref<64x64xbf16, #tpu.memory_space<vmem>>, vector<8x32xbf16>
    tpu.vector_store %arg9[%c40_80, %c32_81], %340 {strides = array<i32>} : memref<64x64xbf16, #tpu.memory_space<vmem>>, vector<8x32xbf16>,
    %cst_82 = arith.constant dense<0.000000e+00> : vector<16x256xf32>
    %342 = tpu.matmul %337, %252, %cst_82 {dimension_numbers = #tpu.dot_dimension_numbers<[1], [0], [0], [1], [0, 0, 1, 1], [], []>} : vector<16x32xbf16>, vector<32x256xbf16>, vector<16x256xf32> -> vector<16x256xf32>
    %343 = vector.extract_strided_slice %342 {offsets = [0, 0], sizes = [8, 128], strides = [1, 1]} : vector<16x256xf32> to vector<8x128xf32>
    %344 = vector.extract_strided_slice %250 {offsets = [24, 0], sizes = [8, 128], strides = [1, 1]} : vector<64x256xf32> to vector<8x128xf32>
    %345 = arith.addf %343, %344 : vector<8x128xf32>
    %346 = vector.extract_strided_slice %342 {offsets = [8, 128], sizes = [8, 128], strides = [1, 1]} : vector<16x256xf32> to vector<8x128xf32>
    %347 = vector.extract_strided_slice %250 {offsets = [32, 128], sizes = [8, 128], strides = [1, 1]} : vector<64x256xf32> to vector<8x128xf32>
    %348 = arith.addf %346, %347 : vector<8x128xf32>
    %349 = tpu.concatenate %345, %348 in 0 : vector<8x128xf32>, vector<8x128xf32> -> vector<16x128xf32>
    %350 = vector.extract_strided_slice %349 {offsets = [0, 0], sizes = [16, 96], strides = [1, 1]} : vector<16x128xf32> to vector<16x96xf32>
    %351 = arith.negf %350 : vector<16x96xf32>
    %352 = math.exp %351 : vector<16x96xf32>
    %cst_83 = arith.constant 1.000000e+00 : f32
    %353 = vector.broadcast %cst_83 : f32 to vector<16x96xf32>
    %354 = arith.addf %353, %352 : vector<16x96xf32>
    %355 = arith.divf %353, %354 : vector<16x96xf32>
    %356 = vector.extract_strided_slice %349 {offsets = [0, 96], sizes = [16, 32], strides = [1, 1]} : vector<16x128xf32> to vector<16x32xf32>
    %357 = math.tanh %356 : vector<16x32xf32>
    %358 = vector.extract_strided_slice %355 {offsets = [0, 0], sizes = [16, 32], strides = [1, 1]} : vector<16x96xf32> to vector<16x32xf32>
    %359 = vector.extract_strided_slice %355 {offsets = [0, 32], sizes = [16, 32], strides = [1, 1]} : vector<16x96xf32> to vector<16x32xf32>
    %360 = vector.extract_strided_slice %355 {offsets = [0, 64], sizes = [16, 32], strides = [1, 1]} : vector<16x96xf32> to vector<16x32xf32>
    %361 = arith.mulf %359, %334 : vector<16x32xf32>
    %362 = arith.mulf %358, %357 : vector<16x32xf32>
    %363 = arith.addf %361, %362 : vector<16x32xf32>
    %364 = math.tanh %363 : vector<16x32xf32>
    %365 = arith.mulf %360, %364 : vector<16x32xf32>
    %366 = arith.truncf %365 : vector<16x32xf32> to vector<16x32xbf16>
    %367 = vector.extract_strided_slice %366 {offsets = [0, 0], sizes = [8, 32], strides = [1, 1]} : vector<16x32xbf16> to vector<8x32xbf16>
    %c24_84 = arith.constant 24 : index
    %c0_85 = arith.constant 0 : index
    %368 = vector.load %arg9[%c24_84, %c0_85] : memref<64x64xbf16, #tpu.memory_space<vmem>>, vector<8x32xbf16>
    tpu.vector_store %arg9[%c24_84, %c0_85], %367 {strides = array<i32>} : memref<64x64xbf16, #tpu.memory_space<vmem>>, vector<8x32xbf16>,
    %369 = vector.extract_strided_slice %366 {offsets = [8, 0], sizes = [8, 32], strides = [1, 1]} : vector<16x32xbf16> to vector<8x32xbf16>
    %c32_86 = arith.constant 32 : index
    %c32_87 = arith.constant 32 : index
    %370 = vector.load %arg9[%c32_86, %c32_87] : memref<64x64xbf16, #tpu.memory_space<vmem>>, vector<8x32xbf16>
    tpu.vector_store %arg9[%c32_86, %c32_87], %369 {strides = array<i32>} : memref<64x64xbf16, #tpu.memory_space<vmem>>, vector<8x32xbf16>,
    %cst_88 = arith.constant dense<0.000000e+00> : vector<16x256xf32>
    %371 = tpu.matmul %366, %252, %cst_88 {dimension_numbers = #tpu.dot_dimension_numbers<[1], [0], [0], [1], [0, 0, 1, 1], [], []>} : vector<16x32xbf16>, vector<32x256xbf16>, vector<16x256xf32> -> vector<16x256xf32>
    %372 = vector.extract_strided_slice %371 {offsets = [0, 0], sizes = [8, 128], strides = [1, 1]} : vector<16x256xf32> to vector<8x128xf32>
    %373 = vector.extract_strided_slice %250 {offsets = [32, 0], sizes = [8, 128], strides = [1, 1]} : vector<64x256xf32> to vector<8x128xf32>
    %374 = arith.addf %372, %373 : vector<8x128xf32>
    %375 = vector.extract_strided_slice %371 {offsets = [8, 128], sizes = [8, 128], strides = [1, 1]} : vector<16x256xf32> to vector<8x128xf32>
    %376 = vector.extract_strided_slice %250 {offsets = [24, 128], sizes = [8, 128], strides = [1, 1]} : vector<64x256xf32> to vector<8x128xf32>
    %377 = arith.addf %375, %376 : vector<8x128xf32>
    %378 = tpu.concatenate %374, %377 in 0 : vector<8x128xf32>, vector<8x128xf32> -> vector<16x128xf32>
    %379 = vector.extract_strided_slice %378 {offsets = [0, 0], sizes = [16, 96], strides = [1, 1]} : vector<16x128xf32> to vector<16x96xf32>
    %380 = arith.negf %379 : vector<16x96xf32>
    %381 = math.exp %380 : vector<16x96xf32>
    %cst_89 = arith.constant 1.000000e+00 : f32
    %382 = vector.broadcast %cst_89 : f32 to vector<16x96xf32>
    %383 = arith.addf %382, %381 : vector<16x96xf32>
    %384 = arith.divf %382, %383 : vector<16x96xf32>
    %385 = vector.extract_strided_slice %378 {offsets = [0, 96], sizes = [16, 32], strides = [1, 1]} : vector<16x128xf32> to vector<16x32xf32>
    %386 = math.tanh %385 : vector<16x32xf32>
    %387 = vector.extract_strided_slice %384 {offsets = [0, 0], sizes = [16, 32], strides = [1, 1]} : vector<16x96xf32> to vector<16x32xf32>
    %388 = vector.extract_strided_slice %384 {offsets = [0, 32], sizes = [16, 32], strides = [1, 1]} : vector<16x96xf32> to vector<16x32xf32>
    %389 = vector.extract_strided_slice %384 {offsets = [0, 64], sizes = [16, 32], strides = [1, 1]} : vector<16x96xf32> to vector<16x32xf32>
    %390 = arith.mulf %388, %363 : vector<16x32xf32>
    %391 = arith.mulf %387, %386 : vector<16x32xf32>
    %392 = arith.addf %390, %391 : vector<16x32xf32>
    %393 = math.tanh %392 : vector<16x32xf32>
    %394 = arith.mulf %389, %393 : vector<16x32xf32>
    %395 = arith.truncf %394 : vector<16x32xf32> to vector<16x32xbf16>
    %396 = vector.extract_strided_slice %395 {offsets = [0, 0], sizes = [8, 32], strides = [1, 1]} : vector<16x32xbf16> to vector<8x32xbf16>
    %c32_90 = arith.constant 32 : index
    %c0_91 = arith.constant 0 : index
    %397 = vector.load %arg9[%c32_90, %c0_91] : memref<64x64xbf16, #tpu.memory_space<vmem>>, vector<8x32xbf16>
    tpu.vector_store %arg9[%c32_90, %c0_91], %396 {strides = array<i32>} : memref<64x64xbf16, #tpu.memory_space<vmem>>, vector<8x32xbf16>,
    %398 = vector.extract_strided_slice %395 {offsets = [8, 0], sizes = [8, 32], strides = [1, 1]} : vector<16x32xbf16> to vector<8x32xbf16>
    %c24_92 = arith.constant 24 : index
    %c32_93 = arith.constant 32 : index
    %399 = vector.load %arg9[%c24_92, %c32_93] : memref<64x64xbf16, #tpu.memory_space<vmem>>, vector<8x32xbf16>
    tpu.vector_store %arg9[%c24_92, %c32_93], %398 {strides = array<i32>} : memref<64x64xbf16, #tpu.memory_space<vmem>>, vector<8x32xbf16>,
    %cst_94 = arith.constant dense<0.000000e+00> : vector<16x256xf32>
    %400 = tpu.matmul %395, %252, %cst_94 {dimension_numbers = #tpu.dot_dimension_numbers<[1], [0], [0], [1], [0, 0, 1, 1], [], []>} : vector<16x32xbf16>, vector<32x256xbf16>, vector<16x256xf32> -> vector<16x256xf32>
    %401 = vector.extract_strided_slice %400 {offsets = [0, 0], sizes = [8, 128], strides = [1, 1]} : vector<16x256xf32> to vector<8x128xf32>
    %402 = vector.extract_strided_slice %250 {offsets = [40, 0], sizes = [8, 128], strides = [1, 1]} : vector<64x256xf32> to vector<8x128xf32>
    %403 = arith.addf %401, %402 : vector<8x128xf32>
    %404 = vector.extract_strided_slice %400 {offsets = [8, 128], sizes = [8, 128], strides = [1, 1]} : vector<16x256xf32> to vector<8x128xf32>
    %405 = vector.extract_strided_slice %250 {offsets = [16, 128], sizes = [8, 128], strides = [1, 1]} : vector<64x256xf32> to vector<8x128xf32>
    %406 = arith.addf %404, %405 : vector<8x128xf32>
    %407 = tpu.concatenate %403, %406 in 0 : vector<8x128xf32>, vector<8x128xf32> -> vector<16x128xf32>
    %408 = vector.extract_strided_slice %407 {offsets = [0, 0], sizes = [16, 96], strides = [1, 1]} : vector<16x128xf32> to vector<16x96xf32>
    %409 = arith.negf %408 : vector<16x96xf32>
    %410 = math.exp %409 : vector<16x96xf32>
    %cst_95 = arith.constant 1.000000e+00 : f32
    %411 = vector.broadcast %cst_95 : f32 to vector<16x96xf32>
    %412 = arith.addf %411, %410 : vector<16x96xf32>
    %413 = arith.divf %411, %412 : vector<16x96xf32>
    %414 = vector.extract_strided_slice %407 {offsets = [0, 96], sizes = [16, 32], strides = [1, 1]} : vector<16x128xf32> to vector<16x32xf32>
    %415 = math.tanh %414 : vector<16x32xf32>
    %416 = vector.extract_strided_slice %413 {offsets = [0, 0], sizes = [16, 32], strides = [1, 1]} : vector<16x96xf32> to vector<16x32xf32>
    %417 = vector.extract_strided_slice %413 {offsets = [0, 32], sizes = [16, 32], strides = [1, 1]} : vector<16x96xf32> to vector<16x32xf32>
    %418 = vector.extract_strided_slice %413 {offsets = [0, 64], sizes = [16, 32], strides = [1, 1]} : vector<16x96xf32> to vector<16x32xf32>
    %419 = arith.mulf %417, %392 : vector<16x32xf32>
    %420 = arith.mulf %416, %415 : vector<16x32xf32>
    %421 = arith.addf %419, %420 : vector<16x32xf32>
    %422 = math.tanh %421 : vector<16x32xf32>
    %423 = arith.mulf %418, %422 : vector<16x32xf32>
    %424 = arith.truncf %423 : vector<16x32xf32> to vector<16x32xbf16>
    %425 = vector.extract_strided_slice %424 {offsets = [0, 0], sizes = [8, 32], strides = [1, 1]} : vector<16x32xbf16> to vector<8x32xbf16>
    %c40_96 = arith.constant 40 : index
    %c0_97 = arith.constant 0 : index
    %426 = vector.load %arg9[%c40_96, %c0_97] : memref<64x64xbf16, #tpu.memory_space<vmem>>, vector<8x32xbf16>
    tpu.vector_store %arg9[%c40_96, %c0_97], %425 {strides = array<i32>} : memref<64x64xbf16, #tpu.memory_space<vmem>>, vector<8x32xbf16>,
    %427 = vector.extract_strided_slice %424 {offsets = [8, 0], sizes = [8, 32], strides = [1, 1]} : vector<16x32xbf16> to vector<8x32xbf16>
    %c16_98 = arith.constant 16 : index
    %c32_99 = arith.constant 32 : index
    %428 = vector.load %arg9[%c16_98, %c32_99] : memref<64x64xbf16, #tpu.memory_space<vmem>>, vector<8x32xbf16>
    tpu.vector_store %arg9[%c16_98, %c32_99], %427 {strides = array<i32>} : memref<64x64xbf16, #tpu.memory_space<vmem>>, vector<8x32xbf16>,
    %cst_100 = arith.constant dense<0.000000e+00> : vector<16x256xf32>
    %429 = tpu.matmul %424, %252, %cst_100 {dimension_numbers = #tpu.dot_dimension_numbers<[1], [0], [0], [1], [0, 0, 1, 1], [], []>} : vector<16x32xbf16>, vector<32x256xbf16>, vector<16x256xf32> -> vector<16x256xf32>
    %430 = vector.extract_strided_slice %429 {offsets = [0, 0], sizes = [8, 128], strides = [1, 1]} : vector<16x256xf32> to vector<8x128xf32>
    %431 = vector.extract_strided_slice %250 {offsets = [48, 0], sizes = [8, 128], strides = [1, 1]} : vector<64x256xf32> to vector<8x128xf32>
    %432 = arith.addf %430, %431 : vector<8x128xf32>
    %433 = vector.extract_strided_slice %429 {offsets = [8, 128], sizes = [8, 128], strides = [1, 1]} : vector<16x256xf32> to vector<8x128xf32>
    %434 = vector.extract_strided_slice %250 {offsets = [8, 128], sizes = [8, 128], strides = [1, 1]} : vector<64x256xf32> to vector<8x128xf32>
    %435 = arith.addf %433, %434 : vector<8x128xf32>
    %436 = tpu.concatenate %432, %435 in 0 : vector<8x128xf32>, vector<8x128xf32> -> vector<16x128xf32>
    %437 = vector.extract_strided_slice %436 {offsets = [0, 0], sizes = [16, 96], strides = [1, 1]} : vector<16x128xf32> to vector<16x96xf32>
    %438 = arith.negf %437 : vector<16x96xf32>
    %439 = math.exp %438 : vector<16x96xf32>
    %cst_101 = arith.constant 1.000000e+00 : f32
    %440 = vector.broadcast %cst_101 : f32 to vector<16x96xf32>
    %441 = arith.addf %440, %439 : vector<16x96xf32>
    %442 = arith.divf %440, %441 : vector<16x96xf32>
    %443 = vector.extract_strided_slice %436 {offsets = [0, 96], sizes = [16, 32], strides = [1, 1]} : vector<16x128xf32> to vector<16x32xf32>
    %444 = math.tanh %443 : vector<16x32xf32>
    %445 = vector.extract_strided_slice %442 {offsets = [0, 0], sizes = [16, 32], strides = [1, 1]} : vector<16x96xf32> to vector<16x32xf32>
    %446 = vector.extract_strided_slice %442 {offsets = [0, 32], sizes = [16, 32], strides = [1, 1]} : vector<16x96xf32> to vector<16x32xf32>
    %447 = vector.extract_strided_slice %442 {offsets = [0, 64], sizes = [16, 32], strides = [1, 1]} : vector<16x96xf32> to vector<16x32xf32>
    %448 = arith.mulf %446, %421 : vector<16x32xf32>
    %449 = arith.mulf %445, %444 : vector<16x32xf32>
    %450 = arith.addf %448, %449 : vector<16x32xf32>
    %451 = math.tanh %450 : vector<16x32xf32>
    %452 = arith.mulf %447, %451 : vector<16x32xf32>
    %453 = arith.truncf %452 : vector<16x32xf32> to vector<16x32xbf16>
    %454 = vector.extract_strided_slice %453 {offsets = [0, 0], sizes = [8, 32], strides = [1, 1]} : vector<16x32xbf16> to vector<8x32xbf16>
    %c48_102 = arith.constant 48 : index
    %c0_103 = arith.constant 0 : index
    %455 = vector.load %arg9[%c48_102, %c0_103] : memref<64x64xbf16, #tpu.memory_space<vmem>>, vector<8x32xbf16>
    tpu.vector_store %arg9[%c48_102, %c0_103], %454 {strides = array<i32>} : memref<64x64xbf16, #tpu.memory_space<vmem>>, vector<8x32xbf16>,
    %456 = vector.extract_strided_slice %453 {offsets = [8, 0], sizes = [8, 32], strides = [1, 1]} : vector<16x32xbf16> to vector<8x32xbf16>
    %c8_104 = arith.constant 8 : index
    %c32_105 = arith.constant 32 : index
    %457 = vector.load %arg9[%c8_104, %c32_105] : memref<64x64xbf16, #tpu.memory_space<vmem>>, vector<8x32xbf16>
    tpu.vector_store %arg9[%c8_104, %c32_105], %456 {strides = array<i32>} : memref<64x64xbf16, #tpu.memory_space<vmem>>, vector<8x32xbf16>,
    %cst_106 = arith.constant dense<0.000000e+00> : vector<16x256xf32>
    %458 = tpu.matmul %453, %252, %cst_106 {dimension_numbers = #tpu.dot_dimension_numbers<[1], [0], [0], [1], [0, 0, 1, 1], [], []>} : vector<16x32xbf16>, vector<32x256xbf16>, vector<16x256xf32> -> vector<16x256xf32>
    %459 = vector.extract_strided_slice %458 {offsets = [0, 0], sizes = [8, 128], strides = [1, 1]} : vector<16x256xf32> to vector<8x128xf32>
    %460 = vector.extract_strided_slice %250 {offsets = [56, 0], sizes = [8, 128], strides = [1, 1]} : vector<64x256xf32> to vector<8x128xf32>
    %461 = arith.addf %459, %460 : vector<8x128xf32>
    %462 = vector.extract_strided_slice %458 {offsets = [8, 128], sizes = [8, 128], strides = [1, 1]} : vector<16x256xf32> to vector<8x128xf32>
    %463 = vector.extract_strided_slice %250 {offsets = [0, 128], sizes = [8, 128], strides = [1, 1]} : vector<64x256xf32> to vector<8x128xf32>
    %464 = arith.addf %462, %463 : vector<8x128xf32>
    %465 = tpu.concatenate %461, %464 in 0 : vector<8x128xf32>, vector<8x128xf32> -> vector<16x128xf32>
    %466 = vector.extract_strided_slice %465 {offsets = [0, 0], sizes = [16, 96], strides = [1, 1]} : vector<16x128xf32> to vector<16x96xf32>
    %467 = arith.negf %466 : vector<16x96xf32>
    %468 = math.exp %467 : vector<16x96xf32>
    %cst_107 = arith.constant 1.000000e+00 : f32
    %469 = vector.broadcast %cst_107 : f32 to vector<16x96xf32>
    %470 = arith.addf %469, %468 : vector<16x96xf32>
    %471 = arith.divf %469, %470 : vector<16x96xf32>
    %472 = vector.extract_strided_slice %465 {offsets = [0, 96], sizes = [16, 32], strides = [1, 1]} : vector<16x128xf32> to vector<16x32xf32>
    %473 = math.tanh %472 : vector<16x32xf32>
    %474 = vector.extract_strided_slice %471 {offsets = [0, 0], sizes = [16, 32], strides = [1, 1]} : vector<16x96xf32> to vector<16x32xf32>
    %475 = vector.extract_strided_slice %471 {offsets = [0, 32], sizes = [16, 32], strides = [1, 1]} : vector<16x96xf32> to vector<16x32xf32>
    %476 = vector.extract_strided_slice %471 {offsets = [0, 64], sizes = [16, 32], strides = [1, 1]} : vector<16x96xf32> to vector<16x32xf32>
    %477 = arith.mulf %475, %450 : vector<16x32xf32>
    %478 = arith.mulf %474, %473 : vector<16x32xf32>
    %479 = arith.addf %477, %478 : vector<16x32xf32>
    %480 = math.tanh %479 : vector<16x32xf32>
    %481 = arith.mulf %476, %480 : vector<16x32xf32>
    %482 = arith.truncf %481 : vector<16x32xf32> to vector<16x32xbf16>
    %483 = vector.extract_strided_slice %482 {offsets = [0, 0], sizes = [8, 32], strides = [1, 1]} : vector<16x32xbf16> to vector<8x32xbf16>
    %c56_108 = arith.constant 56 : index
    %c0_109 = arith.constant 0 : index
    %484 = vector.load %arg9[%c56_108, %c0_109] : memref<64x64xbf16, #tpu.memory_space<vmem>>, vector<8x32xbf16>
    tpu.vector_store %arg9[%c56_108, %c0_109], %483 {strides = array<i32>} : memref<64x64xbf16, #tpu.memory_space<vmem>>, vector<8x32xbf16>,
    %485 = vector.extract_strided_slice %482 {offsets = [8, 0], sizes = [8, 32], strides = [1, 1]} : vector<16x32xbf16> to vector<8x32xbf16>
    %c0_110 = arith.constant 0 : index
    %c32_111 = arith.constant 32 : index
    %486 = vector.load %arg9[%c0_110, %c32_111] : memref<64x64xbf16, #tpu.memory_space<vmem>>, vector<8x32xbf16>
    tpu.vector_store %arg9[%c0_110, %c32_111], %485 {strides = array<i32>} : memref<64x64xbf16, #tpu.memory_space<vmem>>, vector<8x32xbf16>,
    %c0_112 = arith.constant 0 : index
    %c0_113 = arith.constant 0 : index
    %487 = vector.load %arg9[%c0_112, %c0_113] : memref<64x64xbf16, #tpu.memory_space<vmem>>, vector<64x64xbf16>
    %c0_114 = arith.constant 0 : index
    %c0_115 = arith.constant 0 : index
    %488 = vector.load %arg5[%c0_114, %c0_115] : memref<64x128xbf16, #tpu.memory_space<vmem>>, vector<64x128xbf16>
    %cst_116 = arith.constant dense<0.000000e+00> : vector<64x128xf32>
    %489 = tpu.matmul %487, %488, %cst_116 {dimension_numbers = #tpu.dot_dimension_numbers<[1], [0], [0], [1], [0, 0, 1, 1], [], []>} : vector<64x64xbf16>, vector<64x128xbf16>, vector<64x128xf32> -> vector<64x128xf32>
    %c0_117 = arith.constant 0 : index
    %c0_118 = arith.constant 0 : index
    %490 = vector.load %arg6[%c0_117, %c0_118] : memref<1x1xf32, #tpu.memory_space<vmem>>, vector<1x1xf32>
    %491 = vector.extract %490[0, 0] : f32 from vector<1x1xf32>
    %492 = vector.broadcast %491 : f32 to vector<64x128xf32>
    %493 = arith.addf %489, %492 : vector<64x128xf32>
    %c0_119 = arith.constant 0 : index
    %c0_120 = arith.constant 0 : index
    %494 = vector.load %arg7[%c0_119, %c0_120] : memref<64x128xf32, #tpu.memory_space<vmem>>, vector<64x128xf32>
    tpu.vector_store %arg7[%c0_119, %c0_120], %493 {strides = array<i32>} : memref<64x128xf32, #tpu.memory_space<vmem>>, vector<64x128xf32>,
    return
  }
}

</mosaic_0001>

<llo_original>
// kernel: lstm_model_forward.1
$region0: #{lstm_model_forward.1}
  #allocation0 [shape = 'u32[]', space=smem, size = 0x4, offset = 0x4, fixed_abs, tag = 'smem constant byte address 0x4 - core index']
  #allocation1 [shape = 'u32[144,128]{1,0:T(1,128)}', space=vmem, size = 0x12000, scoped, tag = 'internal scratch']
  #allocation2 [shape = 'bf16[64,64]{1,0:T(8,128)(2,1)}', space=vmem, size = 0x4000, scoped, tag = 'scratch operand']
  #allocation3 [shape = 'bf16[64,64]{1,0:T(8,128)(2,1)}', space=vmem, size = 0x4000, scoped, tag = 'scratch operand']
  #allocation4 [shape = 'f32[1,1]{1,0:T(1,128)S(1)}', space=vmem, size = 0x200, scoped, tag = 'scoped memory for lstm_model_forward.1']
  %s0 = inlined_call_operand.vmem [shape: f32[64,16], index: 0, kind: input, shape index: {}]
  %s1 = inlined_call_operand.vmem [shape: bf16[16,256], index: 1, kind: input, shape index: {}]
  %s2 = inlined_call_operand.vmem [shape: bf16[64,256], index: 2, kind: input, shape index: {}]
  %s3 = inlined_call_operand.hbm [shape: bf16[2,32,256], index: 3, kind: input, shape index: {}]
  %s4 = inlined_call_operand.vmem [shape: f32[2,1,256], index: 4, kind: input, shape index: {}]
  %s5 = inlined_call_operand.vmem [shape: bf16[64,128], index: 5, kind: input, shape index: {}]
  %s6 = inlined_call_operand.<no memory space> [shape: f32[1,1], index: 6, kind: input, shape index: {}]
  %s7 = inlined_call_operand.vmem [shape: f32[64,128], index: 7, kind: output, shape index: {}]
  %s8 = sld [smem:[#allocation0]]
  $region42: #{lstm_model_forward.1} parent=0
    _
  %s10 = ssub.s32 1, %s8
  %s11 = scalar_select 0, %s10, %s8
  %v12 = vstv %s6
  %13 = vst [vmem:[#allocation4] sm:$0x1] %v12
  $region1: #{lstm_model_forward.1} parent=0
    #allocation5 [shape = 'u8[32768]{0}', space=vmem, size = 0x8000, scoped, tag = 'input window, operand 3, single buffered']
    #allocation6 [shape = 's32[1]{0}', space=sflag, size = 0x4, scoped, tag = 'scoped memory for lstm_model_forward.1']
    %14 = vsyncpa [#allocation6], 0
    // Predicated region
    $region2: #{lstm_model_forward.1} parent=1 // pred_check
      _
    $region3: #{lstm_model_forward.1} parent=1 // pred_check_branch
      %16 = sbr.rel (0) target = $region5
    $region4: #{lstm_model_forward.1} parent=1 // pred_region
      _
    $region5: #{lstm_model_forward.1} parent=1 // pred_fallthru
      _
    // Predicated region
    $region6: #{lstm_model_forward.1} parent=1 // pred_check
      _
    $region7: #{lstm_model_forward.1} parent=1 // pred_check_branch
      %18 = sbr.rel (0) target = $region9
    $region8: #{lstm_model_forward.1} parent=1 // pred_region
      _
    $region9: #{lstm_model_forward.1} parent=1 // pred_fallthru
      _
    // Predicated region
    $region10: #{lstm_model_forward.1} parent=1 // pred_check
      _
    $region11: #{lstm_model_forward.1} parent=1 // pred_check_branch
      %20 = sbr.rel (0) target = $region13
    $region12: #{lstm_model_forward.1} parent=1 // pred_region
      _
    $region13: #{lstm_model_forward.1} parent=1 // pred_fallthru
      _
    // Predicated region
    $region14: #{lstm_model_forward.1} parent=1 // pred_check
      _
    $region15: #{lstm_model_forward.1} parent=1 // pred_check_branch
      %22 = sbr.rel (0) target = $region17
    $region16: #{lstm_model_forward.1} parent=1 // pred_region
      %s24 = ssub.s32 1024, 1024
      %25 = vsyncadd [#allocation6], %s24
      %s26 = sshll.u32 [#allocation5], 4
      %s27 = int_to_ptr.vmem [resolvable:$true] %s26
      %32 = dma.hbm_to_vmem [thread:$0]  %s3, 1024, %s27, [#allocation6], 128, 128, 8
    $region17: #{lstm_model_forward.1} parent=1 // pred_fallthru
      _
    // Predicated region
    $region18: #{lstm_model_forward.1} parent=1 // pred_check
      _
    $region19: #{lstm_model_forward.1} parent=1 // pred_check_branch
      %34 = sbr.rel (0) target = $region21
    $region20: #{lstm_model_forward.1} parent=1 // pred_region
      _
    $region21: #{lstm_model_forward.1} parent=1 // pred_fallthru
      _
    // Predicated region
    $region22: #{lstm_model_forward.1} parent=1 // pred_check
      _
    $region23: #{lstm_model_forward.1} parent=1 // pred_check_branch
      %36 = sbr.rel (0) target = $region25
    $region24: #{lstm_model_forward.1} parent=1 // pred_region
      _
    $region25: #{lstm_model_forward.1} parent=1 // pred_fallthru
      _
    // Predicated region
    $region26: #{lstm_model_forward.1} parent=1 // pred_check
      _
    $region27: #{lstm_model_forward.1} parent=1 // pred_check_branch
      %38 = sbr.rel (0) target = $region29
    $region28: #{lstm_model_forward.1} parent=1 // pred_region
      _
    $region29: #{lstm_model_forward.1} parent=1 // pred_fallthru
      _
    // Predicated region
    $region30: #{lstm_model_forward.1} parent=1 // pred_check
      _
    $region31: #{lstm_model_forward.1} parent=1 // pred_check_branch
      %40 = sbr.rel (0) target = $region33
    $region32: #{lstm_model_forward.1} parent=1 // pred_region
      %41 = dma.done [#allocation6], 1024
    $region33: #{lstm_model_forward.1} parent=1 // pred_fallthru
      _
    %v43 = vld [vmem:[%s0] sm:$0xff]
    %v44 = vld [vmem:[%s0 + $0x8] sm:$0xff]
    %v45 = vld [vmem:[%s0 + $0x10] sm:$0xff]
    %v46 = vld [vmem:[%s0 + $0x18] sm:$0xff]
    %v47 = vld [vmem:[%s0 + $0x20] sm:$0xff]
    %v48 = vld [vmem:[%s0 + $0x28] sm:$0xff]
    %v49 = vld [vmem:[%s0 + $0x30] sm:$0xff]
    %v50 = vld [vmem:[%s0 + $0x38] sm:$0xff]
    %v51 = vpack.c.bf16 %v44, %v43
    %v52 = vpack.c.bf16 %v46, %v45
    %v53 = vpack.c.bf16 %v48, %v47
    %v54 = vpack.c.bf16 %v50, %v49
    %v55 = vld [vmem:[%s1] sm:$0xff]
    %v56 = vld [vmem:[%s1 + $0x8] sm:$0xff]
    %v57 = vld [vmem:[%s4] sm:$0x3]
    %v59 = vlaneseq
    %v60 = vshrl.u32 %v59, 7
    %v61 = vsub.s32 0, %v60
    %v62 = vrot.slane %v57, %v61
    %v63 = vlaneseq
    %v64 = vshrl.u32 %v63, 7
    %v65 = vsub.s32 1, %v64
    %v66 = vrot.slane %v57, %v65
    %v71 = vunpack.c.l.b16 %v55
    %v72 = vunpack.c.h.b16 %v55
    %v73 = vunpack.c.l.b16 %v56
    %v74 = vunpack.c.h.b16 %v56
    %v75 = vpack.c.b16 %v73, %v71
    %v76 = vpack.c.b16 %v74, %v72
    %vm79 = vcmask 130048
    %v81 = vsel %vm79, %v51, 0
    %v84 = vsel %vm79, %v52, 0
    %v87 = vsel %vm79, %v53, 0
    %v90 = vsel %vm79, %v54, 0
    %92 = vmatprep.subr.bf16.mxu0 0
    %93 = vmatpush1.bf16.msra.mxu0 0
    %94 = vmatprep.subr.bf16.mxu0 0
    %95 = vmatpush1.bf16.msra.mxu0 0
    %96 = vmatprep.subr.bf16.mxu0 0
    %97 = vmatpush1.bf16.msra.mxu0 0
    %98 = vmatprep.subr.bf16.mxu0 0
    %99 = vmatpush1.bf16.msra.mxu0 0
    %100 = vmatprep.subr.bf16.mxu0 0
    %101 = vmatpush1.bf16.msra.mxu0 0
    %102 = vmatprep.subr.bf16.mxu0 0
    %103 = vmatpush1.bf16.msra.mxu0 0
    %104 = vmatprep.subr.bf16.mxu0 0
    %105 = vmatpush1.bf16.msra.mxu0 0
    %106 = vmatprep.subr.bf16.mxu0 %v76
    %107 = vmatpush1.bf16.msra.mxu0 %v75
    %108 = vmatprep.subr.bf16.mxu0 0
    %109 = vmatpush2.bf16.msra.mxu0 0
    %110 = vmatprep.subr.bf16.mxu0 0
    %111 = vmatpush2.bf16.msra.mxu0 0
    %112 = vmatprep.subr.bf16.mxu0 0
    %113 = vmatpush2.bf16.msra.mxu0 0
    %114 = vmatprep.subr.bf16.mxu0 0
    %115 = vmatpush2.bf16.msra.mxu0 0
    %116 = vmatprep.subr.bf16.mxu0 0
    %117 = vmatpush2.bf16.msra.mxu0 0
    %118 = vmatprep.subr.bf16.mxu0 0
    %119 = vmatpush2.bf16.msra.mxu0 0
    %120 = vmatprep.subr.bf16.mxu0 0
    %121 = vmatpush2.bf16.msra.mxu0 0
    %122 = vmatprep.subr.bf16.mxu0 0
    %123 = vmatpush2.bf16.msra.mxu0 0
    %124 = vmatprep.mubr.bf16.mxu0 0
    %125 = vmatmul.mubr.bf16.gmra.mxu0 %v81
    %v126 = vpop.f32.mrf.mxu0
    %v127 = vadd.f32 %v62, %v126
    %v128 = vpop.f32.mrf.mxu0
    %v129 = vadd.f32 %v66, %v128
    %v130 = vpop.f32.mrf.mxu0
    %v131 = vadd.f32 %v62, %v130
    %v132 = vpop.f32.mrf.mxu0
    %v133 = vadd.f32 %v66, %v132
    %134 = vmatprep.mubr.bf16.mxu0 0
    %135 = vmatmul.mubr.bf16.gmra.mxu0 %v84
    %v136 = vpop.f32.mrf.mxu0
    %v137 = vadd.f32 %v62, %v136
    %v138 = vpop.f32.mrf.mxu0
    %v139 = vadd.f32 %v66, %v138
    %v140 = vpop.f32.mrf.mxu0
    %v141 = vadd.f32 %v62, %v140
    %v142 = vpop.f32.mrf.mxu0
    %v143 = vadd.f32 %v66, %v142
    %144 = vmatprep.mubr.bf16.mxu0 0
    %145 = vmatmul.mubr.bf16.gmra.mxu0 %v87
    %v146 = vpop.f32.mrf.mxu0
    %v147 = vadd.f32 %v62, %v146
    %v148 = vpop.f32.mrf.mxu0
    %v149 = vadd.f32 %v66, %v148
    %v150 = vpop.f32.mrf.mxu0
    %v151 = vadd.f32 %v62, %v150
    %v152 = vpop.f32.mrf.mxu0
    %v153 = vadd.f32 %v66, %v152
    %154 = vmatprep.mubr.bf16.mxu0 0
    %155 = vmatmul.mubr.bf16.gmra.mxu0 %v90
    %v156 = vpop.f32.mrf.mxu0
    %v157 = vadd.f32 %v62, %v156
    %v158 = vpop.f32.mrf.mxu0
    %v159 = vadd.f32 %v66, %v158
    %v160 = vpop.f32.mrf.mxu0
    %v161 = vadd.f32 %v62, %v160
    %v162 = vpop.f32.mrf.mxu0
    %v163 = vadd.f32 %v66, %v162
    %164 = vdwg.mxu0
    %v165 = vld [vmem:[#allocation5] sm:$0xff]
    %v166 = vld [vmem:[#allocation5 + $0x8] sm:$0xff]
    %v167 = vld [vmem:[#allocation5 + $0x10] sm:$0xff]
    %v168 = vld [vmem:[#allocation5 + $0x18] sm:$0xff]
    %v173 = vunpack.c.l.b16 %v165
    %v174 = vunpack.c.h.b16 %v165
    %v175 = vunpack.c.l.b16 %v166
    %v176 = vunpack.c.h.b16 %v166
    %v177 = vunpack.c.l.b16 %v167
    %v178 = vunpack.c.h.b16 %v167
    %v179 = vunpack.c.l.b16 %v168
    %v180 = vunpack.c.h.b16 %v168
    %v181 = vpack.c.b16 %v175, %v173
    %v182 = vpack.c.b16 %v176, %v174
    %v183 = vpack.c.b16 %v179, %v177
    %v184 = vpack.c.b16 %v180, %v178
    %vm189 = vcmask 261120
    %v191 = vsel %vm189, 0, 0
    %193 = vmatprep.subr.bf16.mxu0 0
    %194 = vmatpush1.bf16.msra.mxu0 0
    %195 = vmatprep.subr.bf16.mxu0 0
    %196 = vmatpush1.bf16.msra.mxu0 0
    %197 = vmatprep.subr.bf16.mxu0 0
    %198 = vmatpush1.bf16.msra.mxu0 0
    %199 = vmatprep.subr.bf16.mxu0 0
    %200 = vmatpush1.bf16.msra.mxu0 0
    %201 = vmatprep.subr.bf16.mxu0 0
    %202 = vmatpush1.bf16.msra.mxu0 0
    %203 = vmatprep.subr.bf16.mxu0 0
    %204 = vmatpush1.bf16.msra.mxu0 0
    %205 = vmatprep.subr.bf16.mxu0 %v184
    %206 = vmatpush1.bf16.msra.mxu0 %v183
    %207 = vmatprep.subr.bf16.mxu0 %v182
    %208 = vmatpush1.bf16.msra.mxu0 %v181
    %209 = vmatprep.subr.bf16.mxu0 0
    %210 = vmatpush2.bf16.msra.mxu0 0
    %211 = vmatprep.subr.bf16.mxu0 0
    %212 = vmatpush2.bf16.msra.mxu0 0
    %213 = vmatprep.subr.bf16.mxu0 0
    %214 = vmatpush2.bf16.msra.mxu0 0
    %215 = vmatprep.subr.bf16.mxu0 0
    %216 = vmatpush2.bf16.msra.mxu0 0
    %217 = vmatprep.subr.bf16.mxu0 0
    %218 = vmatpush2.bf16.msra.mxu0 0
    %219 = vmatprep.subr.bf16.mxu0 0
    %220 = vmatpush2.bf16.msra.mxu0 0
    %221 = vmatprep.subr.bf16.mxu0 0
    %222 = vmatpush2.bf16.msra.mxu0 0
    %223 = vmatprep.subr.bf16.mxu0 0
    %224 = vmatpush2.bf16.msra.mxu0 0
    %225 = vmatprep.mubr.bf16.mxu0 0
    %226 = vmatmul.mubr.bf16.gmra.mxu0 %v191
    %v227 = vpop.f32.mrf.mxu0
    %v228 = vadd.f32 0.0, %v227
    %v229 = vpop.f32.mrf.mxu0
    %v230 = vpop.f32.mrf.mxu0
    %v231 = vpop.f32.mrf.mxu0
    %v232 = vadd.f32 0.0, %v231
    %233 = vdwg.mxu0
    %v234 = vadd.f32 %v228, %v127
    %v235 = vadd.f32 %v232, %v163
    %v236 = vxor.u32 %v234, 2147483648
    %v237 = vxor.u32 %v235, 2147483648
    %v238 = vmul.f32 %v236, 1.442695
    %v239 = vpow.pop %v238
    %v240 = vmul.f32 %v237, 1.442695
    %v241 = vpow.pop %v240
    %v242 = vadd.f32 %v239, 1.0
    %v243 = vadd.f32 %v241, 1.0
    %v244 = vrcp.pop %v242
    %v245 = vmul.f32 1.0, %v244
    %v246 = vrcp.pop %v243
    %v247 = vmul.f32 1.0, %v246
    %v248 = vtanh.pop %v234
    %v249 = vtanh.pop %v235
    %v250 = vmul.f32 %v245, 0.0
    %v251 = vmul.f32 %v247, 0.0
    %254 = vrot.lane.b32.xlu0 %v248, 32
    %v255 = vpop.permute.xlu0 %254
    %256 = vrot.lane.b32.xlu0 %v249, 32
    %v257 = vpop.permute.xlu0 %256
    %v260 = vmul.f32 %v245, %v255
    %v261 = vmul.f32 %v247, %v257
    %264 = vrot.lane.b32.xlu0 %v260, 32
    %v265 = vpop.permute.xlu0 %264
    %266 = vrot.lane.b32.xlu0 %v261, 32
    %v267 = vpop.permute.xlu0 %266
    %v270 = vadd.f32 %v250, %v265
    %v271 = vadd.f32 %v251, %v267
    %v272 = vtanh.pop %v270
    %v273 = vtanh.pop %v271
    %276 = vrot.lane.b32.xlu0 %v272, 32
    %v277 = vpop.permute.xlu0 %276
    %278 = vrot.lane.b32.xlu0 %v273, 32
    %v279 = vpop.permute.xlu0 %278
    %v282 = vmul.f32 %v245, %v277
    %v283 = vmul.f32 %v247, %v279
    %v284 = vpack.c.bf16 %v283, %v282
    %v286 = vunpack.c.l.b16 %v284
    %v287 = vpack.c.b16 %v286, %v286
    %288 = vrot.lane.b32.xlu0 %v287, 64
    %v289 = vpop.permute.xlu0 %288
    %vm291 = vcmask 257024
    %292 = vst.msk [vmem:[#allocation2] sm:$0xf] %vm291, %v289
    %v293 = vunpack.c.h.b16 %v284
    %v294 = vpack.c.b16 %v293, %v293
    %295 = vrot.lane.b32.xlu0 %v294, 96
    %v296 = vpop.permute.xlu0 %295
    %vm298 = vcmask 519424
    %299 = vst.msk [vmem:[#allocation2 + $0x1c] sm:$0xf] %vm298, %v296
    %300 = vrot.lane.b32.xlu0 %v284, 64
    %v301 = vpop.permute.xlu0 %300
    %v303 = vsel %vm189, %v301, 0
    %305 = vmatprep.subr.bf16.mxu0 0
    %306 = vmatpush1.bf16.msra.mxu0 0
    %307 = vmatprep.subr.bf16.mxu0 0
    %308 = vmatpush1.bf16.msra.mxu0 0
    %309 = vmatprep.subr.bf16.mxu0 0
    %310 = vmatpush1.bf16.msra.mxu0 0
    %311 = vmatprep.subr.bf16.mxu0 0
    %312 = vmatpush1.bf16.msra.mxu0 0
    %313 = vmatprep.subr.bf16.mxu0 0
    %314 = vmatpush1.bf16.msra.mxu0 0
    %315 = vmatprep.subr.bf16.mxu0 0
    %316 = vmatpush1.bf16.msra.mxu0 0
    %317 = vmatprep.subr.bf16.mxu0 %v184
    %318 = vmatpush1.bf16.msra.mxu0 %v183
    %319 = vmatprep.subr.bf16.mxu0 %v182
    %320 = vmatpush1.bf16.msra.mxu0 %v181
    %321 = vmatprep.subr.bf16.mxu0 0
    %322 = vmatpush2.bf16.msra.mxu0 0
    %323 = vmatprep.subr.bf16.mxu0 0
    %324 = vmatpush2.bf16.msra.mxu0 0
    %325 = vmatprep.subr.bf16.mxu0 0
    %326 = vmatpush2.bf16.msra.mxu0 0
    %327 = vmatprep.subr.bf16.mxu0 0
    %328 = vmatpush2.bf16.msra.mxu0 0
    %329 = vmatprep.subr.bf16.mxu0 0
    %330 = vmatpush2.bf16.msra.mxu0 0
    %331 = vmatprep.subr.bf16.mxu0 0
    %332 = vmatpush2.bf16.msra.mxu0 0
    %333 = vmatprep.subr.bf16.mxu0 0
    %334 = vmatpush2.bf16.msra.mxu0 0
    %335 = vmatprep.subr.bf16.mxu0 0
    %336 = vmatpush2.bf16.msra.mxu0 0
    %337 = vmatprep.mubr.bf16.mxu0 0
    %338 = vmatmul.mubr.bf16.gmra.mxu0 %v303
    %v339 = vpop.f32.mrf.mxu0
    %v340 = vadd.f32 0.0, %v339
    %v341 = vpop.f32.mrf.mxu0
    %v342 = vpop.f32.mrf.mxu0
    %v343 = vpop.f32.mrf.mxu0
    %v344 = vadd.f32 0.0, %v343
    %345 = vdwg.mxu0
    %v346 = vadd.f32 %v340, %v131
    %v347 = vadd.f32 %v344, %v159
    %v348 = vxor.u32 %v346, 2147483648
    %v349 = vxor.u32 %v347, 2147483648
    %v350 = vmul.f32 %v348, 1.442695
    %v351 = vpow.pop %v350
    %v352 = vmul.f32 %v349, 1.442695
    %v353 = vpow.pop %v352
    %v354 = vadd.f32 %v351, 1.0
    %v355 = vadd.f32 %v353, 1.0
    %v356 = vrcp.pop %v354
    %v357 = vmul.f32 1.0, %v356
    %v358 = vrcp.pop %v355
    %v359 = vmul.f32 1.0, %v358
    %v360 = vtanh.pop %v346
    %v361 = vtanh.pop %v347
    %v362 = vmul.f32 %v357, %v270
    %v363 = vmul.f32 %v359, %v271
    %366 = vrot.lane.b32.xlu0 %v360, 32
    %v367 = vpop.permute.xlu0 %366
    %368 = vrot.lane.b32.xlu0 %v361, 32
    %v369 = vpop.permute.xlu0 %368
    %v372 = vmul.f32 %v357, %v367
    %v373 = vmul.f32 %v359, %v369
    %376 = vrot.lane.b32.xlu0 %v372, 32
    %v377 = vpop.permute.xlu0 %376
    %378 = vrot.lane.b32.xlu0 %v373, 32
    %v379 = vpop.permute.xlu0 %378
    %v382 = vadd.f32 %v362, %v377
    %v383 = vadd.f32 %v363, %v379
    %v384 = vtanh.pop %v382
    %v385 = vtanh.pop %v383
    %388 = vrot.lane.b32.xlu0 %v384, 32
    %v389 = vpop.permute.xlu0 %388
    %390 = vrot.lane.b32.xlu0 %v385, 32
    %v391 = vpop.permute.xlu0 %390
    %v394 = vmul.f32 %v357, %v389
    %v395 = vmul.f32 %v359, %v391
    %v396 = vpack.c.bf16 %v395, %v394
    %v398 = vunpack.c.l.b16 %v396
    %v399 = vpack.c.b16 %v398, %v398
    %400 = vrot.lane.b32.xlu0 %v399, 64
    %v401 = vpop.permute.xlu0 %400
    %403 = vst.msk [vmem:[#allocation2 + $0x4] sm:$0xf] %vm291, %v401
    %v404 = vunpack.c.h.b16 %v396
    %v405 = vpack.c.b16 %v404, %v404
    %406 = vrot.lane.b32.xlu0 %v405, 96
    %v407 = vpop.permute.xlu0 %406
    %409 = vst.msk [vmem:[#allocation2 + $0x18] sm:$0xf] %vm298, %v407
    %410 = vrot.lane.b32.xlu0 %v396, 64
    %v411 = vpop.permute.xlu0 %410
    %v413 = vsel %vm189, %v411, 0
    %415 = vmatprep.subr.bf16.mxu0 0
    %416 = vmatpush1.bf16.msra.mxu0 0
    %417 = vmatprep.subr.bf16.mxu0 0
    %418 = vmatpush1.bf16.msra.mxu0 0
    %419 = vmatprep.subr.bf16.mxu0 0
    %420 = vmatpush1.bf16.msra.mxu0 0
    %421 = vmatprep.subr.bf16.mxu0 0
    %422 = vmatpush1.bf16.msra.mxu0 0
    %423 = vmatprep.subr.bf16.mxu0 0
    %424 = vmatpush1.bf16.msra.mxu0 0
    %425 = vmatprep.subr.bf16.mxu0 0
    %426 = vmatpush1.bf16.msra.mxu0 0
    %427 = vmatprep.subr.bf16.mxu0 %v184
    %428 = vmatpush1.bf16.msra.mxu0 %v183
    %429 = vmatprep.subr.bf16.mxu0 %v182
    %430 = vmatpush1.bf16.msra.mxu0 %v181
    %431 = vmatprep.subr.bf16.mxu0 0
    %432 = vmatpush2.bf16.msra.mxu0 0
    %433 = vmatprep.subr.bf16.mxu0 0
    %434 = vmatpush2.bf16.msra.mxu0 0
    %435 = vmatprep.subr.bf16.mxu0 0
    %436 = vmatpush2.bf16.msra.mxu0 0
    %437 = vmatprep.subr.bf16.mxu0 0
    %438 = vmatpush2.bf16.msra.mxu0 0
    %439 = vmatprep.subr.bf16.mxu0 0
    %440 = vmatpush2.bf16.msra.mxu0 0
    %441 = vmatprep.subr.bf16.mxu0 0
    %442 = vmatpush2.bf16.msra.mxu0 0
    %443 = vmatprep.subr.bf16.mxu0 0
    %444 = vmatpush2.bf16.msra.mxu0 0
    %445 = vmatprep.subr.bf16.mxu0 0
    %446 = vmatpush2.bf16.msra.mxu0 0
    %447 = vmatprep.mubr.bf16.mxu0 0
    %448 = vmatmul.mubr.bf16.gmra.mxu0 %v413
    %v449 = vpop.f32.mrf.mxu0
    %v450 = vadd.f32 0.0, %v449
    %v451 = vpop.f32.mrf.mxu0
    %v452 = vpop.f32.mrf.mxu0
    %v453 = vpop.f32.mrf.mxu0
    %v454 = vadd.f32 0.0, %v453
    %455 = vdwg.mxu0
    %v456 = vadd.f32 %v450, %v137
    %v457 = vadd.f32 %v454, %v153
    %v458 = vxor.u32 %v456, 2147483648
    %v459 = vxor.u32 %v457, 2147483648
    %v460 = vmul.f32 %v458, 1.442695
    %v461 = vpow.pop %v460
    %v462 = vmul.f32 %v459, 1.442695
    %v463 = vpow.pop %v462
    %v464 = vadd.f32 %v461, 1.0
    %v465 = vadd.f32 %v463, 1.0
    %v466 = vrcp.pop %v464
    %v467 = vmul.f32 1.0, %v466
    %v468 = vrcp.pop %v465
    %v469 = vmul.f32 1.0, %v468
    %v470 = vtanh.pop %v456
    %v471 = vtanh.pop %v457
    %v472 = vmul.f32 %v467, %v382
    %v473 = vmul.f32 %v469, %v383
    %476 = vrot.lane.b32.xlu0 %v470, 32
    %v477 = vpop.permute.xlu0 %476
    %478 = vrot.lane.b32.xlu0 %v471, 32
    %v479 = vpop.permute.xlu0 %478
    %v482 = vmul.f32 %v467, %v477
    %v483 = vmul.f32 %v469, %v479
    %486 = vrot.lane.b32.xlu0 %v482, 32
    %v487 = vpop.permute.xlu0 %486
    %488 = vrot.lane.b32.xlu0 %v483, 32
    %v489 = vpop.permute.xlu0 %488
    %v492 = vadd.f32 %v472, %v487
    %v493 = vadd.f32 %v473, %v489
    %v494 = vtanh.pop %v492
    %v495 = vtanh.pop %v493
    %498 = vrot.lane.b32.xlu0 %v494, 32
    %v499 = vpop.permute.xlu0 %498
    %500 = vrot.lane.b32.xlu0 %v495, 32
    %v501 = vpop.permute.xlu0 %500
    %v504 = vmul.f32 %v467, %v499
    %v505 = vmul.f32 %v469, %v501
    %v506 = vpack.c.bf16 %v505, %v504
    %v508 = vunpack.c.l.b16 %v506
    %v509 = vpack.c.b16 %v508, %v508
    %510 = vrot.lane.b32.xlu0 %v509, 64
    %v511 = vpop.permute.xlu0 %510
    %513 = vst.msk [vmem:[#allocation2 + $0x8] sm:$0xf] %vm291, %v511
    %v514 = vunpack.c.h.b16 %v506
    %v515 = vpack.c.b16 %v514, %v514
    %516 = vrot.lane.b32.xlu0 %v515, 96
    %v517 = vpop.permute.xlu0 %516
    %519 = vst.msk [vmem:[#allocation2 + $0x14] sm:$0xf] %vm298, %v517
    %520 = vrot.lane.b32.xlu0 %v506, 64
    %v521 = vpop.permute.xlu0 %520
    %v523 = vsel %vm189, %v521, 0
    %525 = vmatprep.subr.bf16.mxu0 0
    %526 = vmatpush1.bf16.msra.mxu0 0
    %527 = vmatprep.subr.bf16.mxu0 0
    %528 = vmatpush1.bf16.msra.mxu0 0
    %529 = vmatprep.subr.bf16.mxu0 0
    %530 = vmatpush1.bf16.msra.mxu0 0
    %531 = vmatprep.subr.bf16.mxu0 0
    %532 = vmatpush1.bf16.msra.mxu0 0
    %533 = vmatprep.subr.bf16.mxu0 0
    %534 = vmatpush1.bf16.msra.mxu0 0
    %535 = vmatprep.subr.bf16.mxu0 0
    %536 = vmatpush1.bf16.msra.mxu0 0
    %537 = vmatprep.subr.bf16.mxu0 %v184
    %538 = vmatpush1.bf16.msra.mxu0 %v183
    %539 = vmatprep.subr.bf16.mxu0 %v182
    %540 = vmatpush1.bf16.msra.mxu0 %v181
    %541 = vmatprep.subr.bf16.mxu0 0
    %542 = vmatpush2.bf16.msra.mxu0 0
    %543 = vmatprep.subr.bf16.mxu0 0
    %544 = vmatpush2.bf16.msra.mxu0 0
    %545 = vmatprep.subr.bf16.mxu0 0
    %546 = vmatpush2.bf16.msra.mxu0 0
    %547 = vmatprep.subr.bf16.mxu0 0
    %548 = vmatpush2.bf16.msra.mxu0 0
    %549 = vmatprep.subr.bf16.mxu0 0
    %550 = vmatpush2.bf16.msra.mxu0 0
    %551 = vmatprep.subr.bf16.mxu0 0
    %552 = vmatpush2.bf16.msra.mxu0 0
    %553 = vmatprep.subr.bf16.mxu0 0
    %554 = vmatpush2.bf16.msra.mxu0 0
    %555 = vmatprep.subr.bf16.mxu0 0
    %556 = vmatpush2.bf16.msra.mxu0 0
    %557 = vmatprep.mubr.bf16.mxu0 0
    %558 = vmatmul.mubr.bf16.gmra.mxu0 %v523
    %v559 = vpop.f32.mrf.mxu0
    %v560 = vadd.f32 0.0, %v559
    %v561 = vpop.f32.mrf.mxu0
    %v562 = vpop.f32.mrf.mxu0
    %v563 = vpop.f32.mrf.mxu0
    %v564 = vadd.f32 0.0, %v563
    %565 = vdwg.mxu0
    %v566 = vadd.f32 %v560, %v141
    %v567 = vadd.f32 %v564, %v149
    %v568 = vxor.u32 %v566, 2147483648
    %v569 = vxor.u32 %v567, 2147483648
    %v570 = vmul.f32 %v568, 1.442695
    %v571 = vpow.pop %v570
    %v572 = vmul.f32 %v569, 1.442695
    %v573 = vpow.pop %v572
    %v574 = vadd.f32 %v571, 1.0
    %v575 = vadd.f32 %v573, 1.0
    %v576 = vrcp.pop %v574
    %v577 = vmul.f32 1.0, %v576
    %v578 = vrcp.pop %v575
    %v579 = vmul.f32 1.0, %v578
    %v580 = vtanh.pop %v566
    %v581 = vtanh.pop %v567
    %v582 = vmul.f32 %v577, %v492
    %v583 = vmul.f32 %v579, %v493
    %586 = vrot.lane.b32.xlu0 %v580, 32
    %v587 = vpop.permute.xlu0 %586
    %588 = vrot.lane.b32.xlu0 %v581, 32
    %v589 = vpop.permute.xlu0 %588
    %v592 = vmul.f32 %v577, %v587
    %v593 = vmul.f32 %v579, %v589
    %596 = vrot.lane.b32.xlu0 %v592, 32
    %v597 = vpop.permute.xlu0 %596
    %598 = vrot.lane.b32.xlu0 %v593, 32
    %v599 = vpop.permute.xlu0 %598
    %v602 = vadd.f32 %v582, %v597
    %v603 = vadd.f32 %v583, %v599
    %v604 = vtanh.pop %v602
    %v605 = vtanh.pop %v603
    %608 = vrot.lane.b32.xlu0 %v604, 32
    %v609 = vpop.permute.xlu0 %608
    %610 = vrot.lane.b32.xlu0 %v605, 32
    %v611 = vpop.permute.xlu0 %610
    %v614 = vmul.f32 %v577, %v609
    %v615 = vmul.f32 %v579, %v611
    %v616 = vpack.c.bf16 %v615, %v614
    %v618 = vunpack.c.l.b16 %v616
    %v619 = vpack.c.b16 %v618, %v618
    %620 = vrot.lane.b32.xlu0 %v619, 64
    %v621 = vpop.permute.xlu0 %620
    %623 = vst.msk [vmem:[#allocation2 + $0xc] sm:$0xf] %vm291, %v621
    %v624 = vunpack.c.h.b16 %v616
    %v625 = vpack.c.b16 %v624, %v624
    %626 = vrot.lane.b32.xlu0 %v625, 96
    %v627 = vpop.permute.xlu0 %626
    %629 = vst.msk [vmem:[#allocation2 + $0x10] sm:$0xf] %vm298, %v627
    %630 = vrot.lane.b32.xlu0 %v616, 64
    %v631 = vpop.permute.xlu0 %630
    %v633 = vsel %vm189, %v631, 0
    %635 = vmatprep.subr.bf16.mxu0 0
    %636 = vmatpush1.bf16.msra.mxu0 0
    %637 = vmatprep.subr.bf16.mxu0 0
    %638 = vmatpush1.bf16.msra.mxu0 0
    %639 = vmatprep.subr.bf16.mxu0 0
    %640 = vmatpush1.bf16.msra.mxu0 0
    %641 = vmatprep.subr.bf16.mxu0 0
    %642 = vmatpush1.bf16.msra.mxu0 0
    %643 = vmatprep.subr.bf16.mxu0 0
    %644 = vmatpush1.bf16.msra.mxu0 0
    %645 = vmatprep.subr.bf16.mxu0 0
    %646 = vmatpush1.bf16.msra.mxu0 0
    %647 = vmatprep.subr.bf16.mxu0 %v184
    %648 = vmatpush1.bf16.msra.mxu0 %v183
    %649 = vmatprep.subr.bf16.mxu0 %v182
    %650 = vmatpush1.bf16.msra.mxu0 %v181
    %651 = vmatprep.subr.bf16.mxu0 0
    %652 = vmatpush2.bf16.msra.mxu0 0
    %653 = vmatprep.subr.bf16.mxu0 0
    %654 = vmatpush2.bf16.msra.mxu0 0
    %655 = vmatprep.subr.bf16.mxu0 0
    %656 = vmatpush2.bf16.msra.mxu0 0
    %657 = vmatprep.subr.bf16.mxu0 0
    %658 = vmatpush2.bf16.msra.mxu0 0
    %659 = vmatprep.subr.bf16.mxu0 0
    %660 = vmatpush2.bf16.msra.mxu0 0
    %661 = vmatprep.subr.bf16.mxu0 0
    %662 = vmatpush2.bf16.msra.mxu0 0
    %663 = vmatprep.subr.bf16.mxu0 0
    %664 = vmatpush2.bf16.msra.mxu0 0
    %665 = vmatprep.subr.bf16.mxu0 0
    %666 = vmatpush2.bf16.msra.mxu0 0
    %667 = vmatprep.mubr.bf16.mxu0 0
    %668 = vmatmul.mubr.bf16.gmra.mxu0 %v633
    %v669 = vpop.f32.mrf.mxu0
    %v670 = vadd.f32 0.0, %v669
    %v671 = vpop.f32.mrf.mxu0
    %v672 = vpop.f32.mrf.mxu0
    %v673 = vpop.f32.mrf.mxu0
    %v674 = vadd.f32 0.0, %v673
    %675 = vdwg.mxu0
    %v676 = vadd.f32 %v670, %v147
    %v677 = vadd.f32 %v674, %v143
    %v678 = vxor.u32 %v676, 2147483648
    %v679 = vxor.u32 %v677, 2147483648
    %v680 = vmul.f32 %v678, 1.442695
    %v681 = vpow.pop %v680
    %v682 = vmul.f32 %v679, 1.442695
    %v683 = vpow.pop %v682
    %v684 = vadd.f32 %v681, 1.0
    %v685 = vadd.f32 %v683, 1.0
    %v686 = vrcp.pop %v684
    %v687 = vmul.f32 1.0, %v686
    %v688 = vrcp.pop %v685
    %v689 = vmul.f32 1.0, %v688
    %v690 = vtanh.pop %v676
    %v691 = vtanh.pop %v677
    %v692 = vmul.f32 %v687, %v602
    %v693 = vmul.f32 %v689, %v603
    %696 = vrot.lane.b32.xlu0 %v690, 32
    %v697 = vpop.permute.xlu0 %696
    %698 = vrot.lane.b32.xlu0 %v691, 32
    %v699 = vpop.permute.xlu0 %698
    %v702 = vmul.f32 %v687, %v697
    %v703 = vmul.f32 %v689, %v699
    %706 = vrot.lane.b32.xlu0 %v702, 32
    %v707 = vpop.permute.xlu0 %706
    %708 = vrot.lane.b32.xlu0 %v703, 32
    %v709 = vpop.permute.xlu0 %708
    %v712 = vadd.f32 %v692, %v707
    %v713 = vadd.f32 %v693, %v709
    %v714 = vtanh.pop %v712
    %v715 = vtanh.pop %v713
    %718 = vrot.lane.b32.xlu0 %v714, 32
    %v719 = vpop.permute.xlu0 %718
    %720 = vrot.lane.b32.xlu0 %v715, 32
    %v721 = vpop.permute.xlu0 %720
    %v724 = vmul.f32 %v687, %v719
    %v725 = vmul.f32 %v689, %v721
    %v726 = vpack.c.bf16 %v725, %v724
    %v728 = vunpack.c.l.b16 %v726
    %v729 = vpack.c.b16 %v728, %v728
    %730 = vrot.lane.b32.xlu0 %v729, 64
    %v731 = vpop.permute.xlu0 %730
    %733 = vst.msk [vmem:[#allocation2 + $0x10] sm:$0xf] %vm291, %v731
    %v734 = vunpack.c.h.b16 %v726
    %v735 = vpack.c.b16 %v734, %v734
    %736 = vrot.lane.b32.xlu0 %v735, 96
    %v737 = vpop.permute.xlu0 %736
    %739 = vst.msk [vmem:[#allocation2 + $0xc] sm:$0xf] %vm298, %v737
    %740 = vrot.lane.b32.xlu0 %v726, 64
    %v741 = vpop.permute.xlu0 %740
    %v743 = vsel %vm189, %v741, 0
    %745 = vmatprep.subr.bf16.mxu0 0
    %746 = vmatpush1.bf16.msra.mxu0 0
    %747 = vmatprep.subr.bf16.mxu0 0
    %748 = vmatpush1.bf16.msra.mxu0 0
    %749 = vmatprep.subr.bf16.mxu0 0
    %750 = vmatpush1.bf16.msra.mxu0 0
    %751 = vmatprep.subr.bf16.mxu0 0
    %752 = vmatpush1.bf16.msra.mxu0 0
    %753 = vmatprep.subr.bf16.mxu0 0
    %754 = vmatpush1.bf16.msra.mxu0 0
    %755 = vmatprep.subr.bf16.mxu0 0
    %756 = vmatpush1.bf16.msra.mxu0 0
    %757 = vmatprep.subr.bf16.mxu0 %v184
    %758 = vmatpush1.bf16.msra.mxu0 %v183
    %759 = vmatprep.subr.bf16.mxu0 %v182
    %760 = vmatpush1.bf16.msra.mxu0 %v181
    %761 = vmatprep.subr.bf16.mxu0 0
    %762 = vmatpush2.bf16.msra.mxu0 0
    %763 = vmatprep.subr.bf16.mxu0 0
    %764 = vmatpush2.bf16.msra.mxu0 0
    %765 = vmatprep.subr.bf16.mxu0 0
    %766 = vmatpush2.bf16.msra.mxu0 0
    %767 = vmatprep.subr.bf16.mxu0 0
    %768 = vmatpush2.bf16.msra.mxu0 0
    %769 = vmatprep.subr.bf16.mxu0 0
    %770 = vmatpush2.bf16.msra.mxu0 0
    %771 = vmatprep.subr.bf16.mxu0 0
    %772 = vmatpush2.bf16.msra.mxu0 0
    %773 = vmatprep.subr.bf16.mxu0 0
    %774 = vmatpush2.bf16.msra.mxu0 0
    %775 = vmatprep.subr.bf16.mxu0 0
    %776 = vmatpush2.bf16.msra.mxu0 0
    %777 = vmatprep.mubr.bf16.mxu0 0
    %778 = vmatmul.mubr.bf16.gmra.mxu0 %v743
    %v779 = vpop.f32.mrf.mxu0
    %v780 = vadd.f32 0.0, %v779
    %v781 = vpop.f32.mrf.mxu0
    %v782 = vpop.f32.mrf.mxu0
    %v783 = vpop.f32.mrf.mxu0
    %v784 = vadd.f32 0.0, %v783
    %785 = vdwg.mxu0
    %v786 = vadd.f32 %v780, %v151
    %v787 = vadd.f32 %v784, %v139
    %v788 = vxor.u32 %v786, 2147483648
    %v789 = vxor.u32 %v787, 2147483648
    %v790 = vmul.f32 %v788, 1.442695
    %v791 = vpow.pop %v790
    %v792 = vmul.f32 %v789, 1.442695
    %v793 = vpow.pop %v792
    %v794 = vadd.f32 %v791, 1.0
    %v795 = vadd.f32 %v793, 1.0
    %v796 = vrcp.pop %v794
    %v797 = vmul.f32 1.0, %v796
    %v798 = vrcp.pop %v795
    %v799 = vmul.f32 1.0, %v798
    %v800 = vtanh.pop %v786
    %v801 = vtanh.pop %v787
    %v802 = vmul.f32 %v797, %v712
    %v803 = vmul.f32 %v799, %v713
    %806 = vrot.lane.b32.xlu0 %v800, 32
    %v807 = vpop.permute.xlu0 %806
    %808 = vrot.lane.b32.xlu0 %v801, 32
    %v809 = vpop.permute.xlu0 %808
    %v812 = vmul.f32 %v797, %v807
    %v813 = vmul.f32 %v799, %v809
    %816 = vrot.lane.b32.xlu0 %v812, 32
    %v817 = vpop.permute.xlu0 %816
    %818 = vrot.lane.b32.xlu0 %v813, 32
    %v819 = vpop.permute.xlu0 %818
    %v822 = vadd.f32 %v802, %v817
    %v823 = vadd.f32 %v803, %v819
    %v824 = vtanh.pop %v822
    %v825 = vtanh.pop %v823
    %828 = vrot.lane.b32.xlu0 %v824, 32
    %v829 = vpop.permute.xlu0 %828
    %830 = vrot.lane.b32.xlu0 %v825, 32
    %v831 = vpop.permute.xlu0 %830
    %v834 = vmul.f32 %v797, %v829
    %v835 = vmul.f32 %v799, %v831
    %v836 = vpack.c.bf16 %v835, %v834
    %v838 = vunpack.c.l.b16 %v836
    %v839 = vpack.c.b16 %v838, %v838
    %840 = vrot.lane.b32.xlu0 %v839, 64
    %v841 = vpop.permute.xlu0 %840
    %843 = vst.msk [vmem:[#allocation2 + $0x14] sm:$0xf] %vm291, %v841
    %v844 = vunpack.c.h.b16 %v836
    %v845 = vpack.c.b16 %v844, %v844
    %846 = vrot.lane.b32.xlu0 %v845, 96
    %v847 = vpop.permute.xlu0 %846
    %849 = vst.msk [vmem:[#allocation2 + $0x8] sm:$0xf] %vm298, %v847
    %850 = vrot.lane.b32.xlu0 %v836, 64
    %v851 = vpop.permute.xlu0 %850
    %v853 = vsel %vm189, %v851, 0
    %855 = vmatprep.subr.bf16.mxu0 0
    %856 = vmatpush1.bf16.msra.mxu0 0
    %857 = vmatprep.subr.bf16.mxu0 0
    %858 = vmatpush1.bf16.msra.mxu0 0
    %859 = vmatprep.subr.bf16.mxu0 0
    %860 = vmatpush1.bf16.msra.mxu0 0
    %861 = vmatprep.subr.bf16.mxu0 0
    %862 = vmatpush1.bf16.msra.mxu0 0
    %863 = vmatprep.subr.bf16.mxu0 0
    %864 = vmatpush1.bf16.msra.mxu0 0
    %865 = vmatprep.subr.bf16.mxu0 0
    %866 = vmatpush1.bf16.msra.mxu0 0
    %867 = vmatprep.subr.bf16.mxu0 %v184
    %868 = vmatpush1.bf16.msra.mxu0 %v183
    %869 = vmatprep.subr.bf16.mxu0 %v182
    %870 = vmatpush1.bf16.msra.mxu0 %v181
    %871 = vmatprep.subr.bf16.mxu0 0
    %872 = vmatpush2.bf16.msra.mxu0 0
    %873 = vmatprep.subr.bf16.mxu0 0
    %874 = vmatpush2.bf16.msra.mxu0 0
    %875 = vmatprep.subr.bf16.mxu0 0
    %876 = vmatpush2.bf16.msra.mxu0 0
    %877 = vmatprep.subr.bf16.mxu0 0
    %878 = vmatpush2.bf16.msra.mxu0 0
    %879 = vmatprep.subr.bf16.mxu0 0
    %880 = vmatpush2.bf16.msra.mxu0 0
    %881 = vmatprep.subr.bf16.mxu0 0
    %882 = vmatpush2.bf16.msra.mxu0 0
    %883 = vmatprep.subr.bf16.mxu0 0
    %884 = vmatpush2.bf16.msra.mxu0 0
    %885 = vmatprep.subr.bf16.mxu0 0
    %886 = vmatpush2.bf16.msra.mxu0 0
    %887 = vmatprep.mubr.bf16.mxu0 0
    %888 = vmatmul.mubr.bf16.gmra.mxu0 %v853
    %v889 = vpop.f32.mrf.mxu0
    %v890 = vadd.f32 0.0, %v889
    %v891 = vpop.f32.mrf.mxu0
    %v892 = vpop.f32.mrf.mxu0
    %v893 = vpop.f32.mrf.mxu0
    %v894 = vadd.f32 0.0, %v893
    %895 = vdwg.mxu0
    %v896 = vadd.f32 %v890, %v157
    %v897 = vadd.f32 %v894, %v133
    %v898 = vxor.u32 %v896, 2147483648
    %v899 = vxor.u32 %v897, 2147483648
    %v900 = vmul.f32 %v898, 1.442695
    %v901 = vpow.pop %v900
    %v902 = vmul.f32 %v899, 1.442695
    %v903 = vpow.pop %v902
    %v904 = vadd.f32 %v901, 1.0
    %v905 = vadd.f32 %v903, 1.0
    %v906 = vrcp.pop %v904
    %v907 = vmul.f32 1.0, %v906
    %v908 = vrcp.pop %v905
    %v909 = vmul.f32 1.0, %v908
    %v910 = vtanh.pop %v896
    %v911 = vtanh.pop %v897
    %v912 = vmul.f32 %v907, %v822
    %v913 = vmul.f32 %v909, %v823
    %916 = vrot.lane.b32.xlu0 %v910, 32
    %v917 = vpop.permute.xlu0 %916
    %918 = vrot.lane.b32.xlu0 %v911, 32
    %v919 = vpop.permute.xlu0 %918
    %v922 = vmul.f32 %v907, %v917
    %v923 = vmul.f32 %v909, %v919
    %926 = vrot.lane.b32.xlu0 %v922, 32
    %v927 = vpop.permute.xlu0 %926
    %928 = vrot.lane.b32.xlu0 %v923, 32
    %v929 = vpop.permute.xlu0 %928
    %v932 = vadd.f32 %v912, %v927
    %v933 = vadd.f32 %v913, %v929
    %v934 = vtanh.pop %v932
    %v935 = vtanh.pop %v933
    %938 = vrot.lane.b32.xlu0 %v934, 32
    %v939 = vpop.permute.xlu0 %938
    %940 = vrot.lane.b32.xlu0 %v935, 32
    %v941 = vpop.permute.xlu0 %940
    %v944 = vmul.f32 %v907, %v939
    %v945 = vmul.f32 %v909, %v941
    %v946 = vpack.c.bf16 %v945, %v944
    %v948 = vunpack.c.l.b16 %v946
    %v949 = vpack.c.b16 %v948, %v948
    %950 = vrot.lane.b32.xlu0 %v949, 64
    %v951 = vpop.permute.xlu0 %950
    %953 = vst.msk [vmem:[#allocation2 + $0x18] sm:$0xf] %vm291, %v951
    %v954 = vunpack.c.h.b16 %v946
    %v955 = vpack.c.b16 %v954, %v954
    %956 = vrot.lane.b32.xlu0 %v955, 96
    %v957 = vpop.permute.xlu0 %956
    %959 = vst.msk [vmem:[#allocation2 + $0x4] sm:$0xf] %vm298, %v957
    %960 = vrot.lane.b32.xlu0 %v946, 64
    %v961 = vpop.permute.xlu0 %960
    %v963 = vsel %vm189, %v961, 0
    %965 = vmatprep.subr.bf16.mxu0 0
    %966 = vmatpush1.bf16.msra.mxu0 0
    %967 = vmatprep.subr.bf16.mxu0 0
    %968 = vmatpush1.bf16.msra.mxu0 0
    %969 = vmatprep.subr.bf16.mxu0 0
    %970 = vmatpush1.bf16.msra.mxu0 0
    %971 = vmatprep.subr.bf16.mxu0 0
    %972 = vmatpush1.bf16.msra.mxu0 0
    %973 = vmatprep.subr.bf16.mxu0 0
    %974 = vmatpush1.bf16.msra.mxu0 0
    %975 = vmatprep.subr.bf16.mxu0 0
    %976 = vmatpush1.bf16.msra.mxu0 0
    %977 = vmatprep.subr.bf16.mxu0 %v184
    %978 = vmatpush1.bf16.msra.mxu0 %v183
    %979 = vmatprep.subr.bf16.mxu0 %v182
    %980 = vmatpush1.bf16.msra.mxu0 %v181
    %981 = vmatprep.subr.bf16.mxu0 0
    %982 = vmatpush2.bf16.msra.mxu0 0
    %983 = vmatprep.subr.bf16.mxu0 0
    %984 = vmatpush2.bf16.msra.mxu0 0
    %985 = vmatprep.subr.bf16.mxu0 0
    %986 = vmatpush2.bf16.msra.mxu0 0
    %987 = vmatprep.subr.bf16.mxu0 0
    %988 = vmatpush2.bf16.msra.mxu0 0
    %989 = vmatprep.subr.bf16.mxu0 0
    %990 = vmatpush2.bf16.msra.mxu0 0
    %991 = vmatprep.subr.bf16.mxu0 0
    %992 = vmatpush2.bf16.msra.mxu0 0
    %993 = vmatprep.subr.bf16.mxu0 0
    %994 = vmatpush2.bf16.msra.mxu0 0
    %995 = vmatprep.subr.bf16.mxu0 0
    %996 = vmatpush2.bf16.msra.mxu0 0
    %997 = vmatprep.mubr.bf16.mxu0 0
    %998 = vmatmul.mubr.bf16.gmra.mxu0 %v963
    %v999 = vpop.f32.mrf.mxu0
    %v1000 = vadd.f32 0.0, %v999
    %v1001 = vpop.f32.mrf.mxu0
    %v1002 = vpop.f32.mrf.mxu0
    %v1003 = vpop.f32.mrf.mxu0
    %v1004 = vadd.f32 0.0, %v1003
    %1005 = vdwg.mxu0
    %v1006 = vadd.f32 %v1000, %v161
    %v1007 = vadd.f32 %v1004, %v129
    %v1008 = vxor.u32 %v1006, 2147483648
    %v1009 = vxor.u32 %v1007, 2147483648
    %v1010 = vmul.f32 %v1008, 1.442695
    %v1011 = vpow.pop %v1010
    %v1012 = vmul.f32 %v1009, 1.442695
    %v1013 = vpow.pop %v1012
    %v1014 = vadd.f32 %v1011, 1.0
    %v1015 = vadd.f32 %v1013, 1.0
    %v1016 = vrcp.pop %v1014
    %v1017 = vmul.f32 1.0, %v1016
    %v1018 = vrcp.pop %v1015
    %v1019 = vmul.f32 1.0, %v1018
    %v1020 = vtanh.pop %v1006
    %v1021 = vtanh.pop %v1007
    %v1022 = vmul.f32 %v1017, %v932
    %v1023 = vmul.f32 %v1019, %v933
    %1026 = vrot.lane.b32.xlu0 %v1020, 32
    %v1027 = vpop.permute.xlu0 %1026
    %1028 = vrot.lane.b32.xlu0 %v1021, 32
    %v1029 = vpop.permute.xlu0 %1028
    %v1032 = vmul.f32 %v1017, %v1027
    %v1033 = vmul.f32 %v1019, %v1029
    %1036 = vrot.lane.b32.xlu0 %v1032, 32
    %v1037 = vpop.permute.xlu0 %1036
    %1038 = vrot.lane.b32.xlu0 %v1033, 32
    %v1039 = vpop.permute.xlu0 %1038
    %v1042 = vadd.f32 %v1022, %v1037
    %v1043 = vadd.f32 %v1023, %v1039
    %v1044 = vtanh.pop %v1042
    %v1045 = vtanh.pop %v1043
    %1048 = vrot.lane.b32.xlu0 %v1044, 32
    %v1049 = vpop.permute.xlu0 %1048
    %1050 = vrot.lane.b32.xlu0 %v1045, 32
    %v1051 = vpop.permute.xlu0 %1050
    %v1054 = vmul.f32 %v1017, %v1049
    %v1055 = vmul.f32 %v1019, %v1051
    %v1056 = vpack.c.bf16 %v1055, %v1054
    %v1058 = vunpack.c.l.b16 %v1056
    %v1059 = vpack.c.b16 %v1058, %v1058
    %1060 = vrot.lane.b32.xlu0 %v1059, 64
    %v1061 = vpop.permute.xlu0 %1060
    %1063 = vst.msk [vmem:[#allocation2 + $0x1c] sm:$0xf] %vm291, %v1061
    %v1064 = vunpack.c.h.b16 %v1056
    %v1065 = vpack.c.b16 %v1064, %v1064
    %1066 = vrot.lane.b32.xlu0 %v1065, 96
    %v1067 = vpop.permute.xlu0 %1066
    %1069 = vst.msk [vmem:[#allocation2] sm:$0xf] %vm298, %v1067
    %v1070 = vld [vmem:[#allocation2] sm:$0xf]
    %v1071 = vld [vmem:[#allocation2 + $0x4] sm:$0xf]
    %v1072 = vld [vmem:[#allocation2 + $0x8] sm:$0xf]
    %v1073 = vld [vmem:[#allocation2 + $0xc] sm:$0xf]
    %v1074 = vld [vmem:[#allocation2 + $0x10] sm:$0xf]
    %v1075 = vld [vmem:[#allocation2 + $0x14] sm:$0xf]
    %v1076 = vld [vmem:[#allocation2 + $0x18] sm:$0xf]
    %v1077 = vld [vmem:[#allocation2 + $0x1c] sm:$0xf]
    %v1078 = vld [vmem:[%s2] sm:$0xff]
    %v1079 = vld [vmem:[%s2 + $0x8] sm:$0xff]
    %v1080 = vld [vmem:[%s2 + $0x10] sm:$0xff]
    %v1081 = vld [vmem:[%s2 + $0x18] sm:$0xff]
    %v1082 = vld [vmem:[%s2 + $0x20] sm:$0xff]
    %v1083 = vld [vmem:[%s2 + $0x28] sm:$0xff]
    %v1084 = vld [vmem:[%s2 + $0x30] sm:$0xff]
    %v1085 = vld [vmem:[%s2 + $0x38] sm:$0xff]
    %s1086 = scalar_lea.vmem %s4, 2
    %v1087 = vld [vmem:[%s1086] sm:$0x3]
    %v1089 = vlaneseq
    %v1090 = vshrl.u32 %v1089, 7
    %v1091 = vsub.s32 0, %v1090
    %v1092 = vrot.slane %v1087, %v1091
    %v1093 = vlaneseq
    %v1094 = vshrl.u32 %v1093, 7
    %v1095 = vsub.s32 1, %v1094
    %v1096 = vrot.slane %v1087, %v1095
    %v1107 = vunpack.c.l.b16 %v1070
    %v1108 = vunpack.c.l.b16 %v1071
    %v1109 = vunpack.c.l.b16 %v1072
    %v1110 = vunpack.c.l.b16 %v1073
    %v1111 = vunpack.c.l.b16 %v1074
    %v1112 = vunpack.c.l.b16 %v1075
    %v1113 = vunpack.c.l.b16 %v1076
    %v1114 = vunpack.c.l.b16 %v1077
    %v1115 = vpack.c.b16 %v1108, %v1107
    %v1116 = vpack.c.b16 %v1110, %v1109
    %v1117 = vpack.c.b16 %v1112, %v1111
    %v1118 = vpack.c.b16 %v1114, %v1113
    %v1127 = vunpack.c.l.b16 %v1078
    %v1128 = vunpack.c.h.b16 %v1078
    %v1129 = vunpack.c.l.b16 %v1079
    %v1130 = vunpack.c.h.b16 %v1079
    %v1131 = vunpack.c.l.b16 %v1080
    %v1132 = vunpack.c.h.b16 %v1080
    %v1133 = vunpack.c.l.b16 %v1081
    %v1134 = vunpack.c.h.b16 %v1081
    %v1135 = vunpack.c.l.b16 %v1082
    %v1136 = vunpack.c.h.b16 %v1082
    %v1137 = vunpack.c.l.b16 %v1083
    %v1138 = vunpack.c.h.b16 %v1083
    %v1139 = vunpack.c.l.b16 %v1084
    %v1140 = vunpack.c.h.b16 %v1084
    %v1141 = vunpack.c.l.b16 %v1085
    %v1142 = vunpack.c.h.b16 %v1085
    %v1143 = vpack.c.b16 %v1129, %v1127
    %v1144 = vpack.c.b16 %v1130, %v1128
    %v1145 = vpack.c.b16 %v1133, %v1131
    %v1146 = vpack.c.b16 %v1134, %v1132
    %v1147 = vpack.c.b16 %v1137, %v1135
    %v1148 = vpack.c.b16 %v1138, %v1136
    %v1149 = vpack.c.b16 %v1141, %v1139
    %v1150 = vpack.c.b16 %v1142, %v1140
    %vm1159 = vcmask 523264
    %v1161 = vsel %vm1159, %v1115, 0
    %v1164 = vsel %vm1159, %v1116, 0
    %v1167 = vsel %vm1159, %v1117, 0
    %v1170 = vsel %vm1159, %v1118, 0
    %1172 = vmatprep.subr.bf16.mxu0 0
    %1173 = vmatpush1.bf16.msra.mxu0 0
    %1174 = vmatprep.subr.bf16.mxu0 0
    %1175 = vmatpush1.bf16.msra.mxu0 0
    %1176 = vmatprep.subr.bf16.mxu0 0
    %1177 = vmatpush1.bf16.msra.mxu0 0
    %1178 = vmatprep.subr.bf16.mxu0 0
    %1179 = vmatpush1.bf16.msra.mxu0 0
    %1180 = vmatprep.subr.bf16.mxu0 %v1150
    %1181 = vmatpush1.bf16.msra.mxu0 %v1149
    %1182 = vmatprep.subr.bf16.mxu0 %v1148
    %1183 = vmatpush1.bf16.msra.mxu0 %v1147
    %1184 = vmatprep.subr.bf16.mxu0 %v1146
    %1185 = vmatpush1.bf16.msra.mxu0 %v1145
    %1186 = vmatprep.subr.bf16.mxu0 %v1144
    %1187 = vmatpush1.bf16.msra.mxu0 %v1143
    %1188 = vmatprep.subr.bf16.mxu0 0
    %1189 = vmatpush2.bf16.msra.mxu0 0
    %1190 = vmatprep.subr.bf16.mxu0 0
    %1191 = vmatpush2.bf16.msra.mxu0 0
    %1192 = vmatprep.subr.bf16.mxu0 0
    %1193 = vmatpush2.bf16.msra.mxu0 0
    %1194 = vmatprep.subr.bf16.mxu0 0
    %1195 = vmatpush2.bf16.msra.mxu0 0
    %1196 = vmatprep.subr.bf16.mxu0 0
    %1197 = vmatpush2.bf16.msra.mxu0 0
    %1198 = vmatprep.subr.bf16.mxu0 0
    %1199 = vmatpush2.bf16.msra.mxu0 0
    %1200 = vmatprep.subr.bf16.mxu0 0
    %1201 = vmatpush2.bf16.msra.mxu0 0
    %1202 = vmatprep.subr.bf16.mxu0 0
    %1203 = vmatpush2.bf16.msra.mxu0 0
    %1204 = vmatprep.mubr.bf16.mxu0 0
    %1205 = vmatmul.mubr.bf16.gmra.mxu0 %v1161
    %v1206 = vpop.f32.mrf.mxu0
    %v1207 = vadd.f32 %v1092, %v1206
    %v1208 = vpop.f32.mrf.mxu0
    %v1209 = vadd.f32 %v1096, %v1208
    %v1210 = vpop.f32.mrf.mxu0
    %v1211 = vadd.f32 %v1092, %v1210
    %v1212 = vpop.f32.mrf.mxu0
    %v1213 = vadd.f32 %v1096, %v1212
    %1214 = vmatprep.mubr.bf16.mxu0 0
    %1215 = vmatmul.mubr.bf16.gmra.mxu0 %v1164
    %v1216 = vpop.f32.mrf.mxu0
    %v1217 = vadd.f32 %v1092, %v1216
    %v1218 = vpop.f32.mrf.mxu0
    %v1219 = vadd.f32 %v1096, %v1218
    %v1220 = vpop.f32.mrf.mxu0
    %v1221 = vadd.f32 %v1092, %v1220
    %v1222 = vpop.f32.mrf.mxu0
    %v1223 = vadd.f32 %v1096, %v1222
    %1224 = vmatprep.mubr.bf16.mxu0 0
    %1225 = vmatmul.mubr.bf16.gmra.mxu0 %v1167
    %v1226 = vpop.f32.mrf.mxu0
    %v1227 = vadd.f32 %v1092, %v1226
    %v1228 = vpop.f32.mrf.mxu0
    %v1229 = vadd.f32 %v1096, %v1228
    %v1230 = vpop.f32.mrf.mxu0
    %v1231 = vadd.f32 %v1092, %v1230
    %v1232 = vpop.f32.mrf.mxu0
    %v1233 = vadd.f32 %v1096, %v1232
    %1234 = vmatprep.mubr.bf16.mxu0 0
    %1235 = vmatmul.mubr.bf16.gmra.mxu0 %v1170
    %v1236 = vpop.f32.mrf.mxu0
    %v1237 = vadd.f32 %v1092, %v1236
    %v1238 = vpop.f32.mrf.mxu0
    %v1239 = vadd.f32 %v1096, %v1238
    %v1240 = vpop.f32.mrf.mxu0
    %v1241 = vadd.f32 %v1092, %v1240
    %v1242 = vpop.f32.mrf.mxu0
    %v1243 = vadd.f32 %v1096, %v1242
    %1244 = vdwg.mxu0
    %s1245 = scalar_lea.vmem [#allocation5], 32
    %v1246 = vld [vmem:[%s1245] sm:$0xff]
    %v1247 = vld [vmem:[%s1245 + $0x8] sm:$0xff]
    %v1248 = vld [vmem:[%s1245 + $0x10] sm:$0xff]
    %v1249 = vld [vmem:[%s1245 + $0x18] sm:$0xff]
    %v1254 = vunpack.c.l.b16 %v1246
    %v1255 = vunpack.c.h.b16 %v1246
    %v1256 = vunpack.c.l.b16 %v1247
    %v1257 = vunpack.c.h.b16 %v1247
    %v1258 = vunpack.c.l.b16 %v1248
    %v1259 = vunpack.c.h.b16 %v1248
    %v1260 = vunpack.c.l.b16 %v1249
    %v1261 = vunpack.c.h.b16 %v1249
    %v1262 = vpack.c.b16 %v1256, %v1254
    %v1263 = vpack.c.b16 %v1257, %v1255
    %v1264 = vpack.c.b16 %v1260, %v1258
    %v1265 = vpack.c.b16 %v1261, %v1259
    %1270 = vmatprep.subr.bf16.mxu0 0
    %1271 = vmatpush1.bf16.msra.mxu0 0
    %1272 = vmatprep.subr.bf16.mxu0 0
    %1273 = vmatpush1.bf16.msra.mxu0 0
    %1274 = vmatprep.subr.bf16.mxu0 0
    %1275 = vmatpush1.bf16.msra.mxu0 0
    %1276 = vmatprep.subr.bf16.mxu0 0
    %1277 = vmatpush1.bf16.msra.mxu0 0
    %1278 = vmatprep.subr.bf16.mxu0 0
    %1279 = vmatpush1.bf16.msra.mxu0 0
    %1280 = vmatprep.subr.bf16.mxu0 0
    %1281 = vmatpush1.bf16.msra.mxu0 0
    %1282 = vmatprep.subr.bf16.mxu0 %v1265
    %1283 = vmatpush1.bf16.msra.mxu0 %v1264
    %1284 = vmatprep.subr.bf16.mxu0 %v1263
    %1285 = vmatpush1.bf16.msra.mxu0 %v1262
    %1286 = vmatprep.subr.bf16.mxu0 0
    %1287 = vmatpush2.bf16.msra.mxu0 0
    %1288 = vmatprep.subr.bf16.mxu0 0
    %1289 = vmatpush2.bf16.msra.mxu0 0
    %1290 = vmatprep.subr.bf16.mxu0 0
    %1291 = vmatpush2.bf16.msra.mxu0 0
    %1292 = vmatprep.subr.bf16.mxu0 0
    %1293 = vmatpush2.bf16.msra.mxu0 0
    %1294 = vmatprep.subr.bf16.mxu0 0
    %1295 = vmatpush2.bf16.msra.mxu0 0
    %1296 = vmatprep.subr.bf16.mxu0 0
    %1297 = vmatpush2.bf16.msra.mxu0 0
    %1298 = vmatprep.subr.bf16.mxu0 0
    %1299 = vmatpush2.bf16.msra.mxu0 0
    %1300 = vmatprep.subr.bf16.mxu0 0
    %1301 = vmatpush2.bf16.msra.mxu0 0
    %1302 = vmatprep.mubr.bf16.mxu0 0
    %1303 = vmatmul.mubr.bf16.gmra.mxu0 %v191
    %v1304 = vpop.f32.mrf.mxu0
    %v1305 = vadd.f32 0.0, %v1304
    %v1306 = vpop.f32.mrf.mxu0
    %v1307 = vpop.f32.mrf.mxu0
    %v1308 = vpop.f32.mrf.mxu0
    %v1309 = vadd.f32 0.0, %v1308
    %1310 = vdwg.mxu0
    %v1311 = vadd.f32 %v1305, %v1207
    %v1312 = vadd.f32 %v1309, %v1243
    %v1313 = vxor.u32 %v1311, 2147483648
    %v1314 = vxor.u32 %v1312, 2147483648
    %v1315 = vmul.f32 %v1313, 1.442695
    %v1316 = vpow.pop %v1315
    %v1317 = vmul.f32 %v1314, 1.442695
    %v1318 = vpow.pop %v1317
    %v1319 = vadd.f32 %v1316, 1.0
    %v1320 = vadd.f32 %v1318, 1.0
    %v1321 = vrcp.pop %v1319
    %v1322 = vmul.f32 1.0, %v1321
    %v1323 = vrcp.pop %v1320
    %v1324 = vmul.f32 1.0, %v1323
    %v1325 = vtanh.pop %v1311
    %v1326 = vtanh.pop %v1312
    %v1327 = vmul.f32 %v1322, 0.0
    %v1328 = vmul.f32 %v1324, 0.0
    %1331 = vrot.lane.b32.xlu0 %v1325, 32
    %v1332 = vpop.permute.xlu0 %1331
    %1333 = vrot.lane.b32.xlu0 %v1326, 32
    %v1334 = vpop.permute.xlu0 %1333
    %v1337 = vmul.f32 %v1322, %v1332
    %v1338 = vmul.f32 %v1324, %v1334
    %1341 = vrot.lane.b32.xlu0 %v1337, 32
    %v1342 = vpop.permute.xlu0 %1341
    %1343 = vrot.lane.b32.xlu0 %v1338, 32
    %v1344 = vpop.permute.xlu0 %1343
    %v1347 = vadd.f32 %v1327, %v1342
    %v1348 = vadd.f32 %v1328, %v1344
    %v1349 = vtanh.pop %v1347
    %v1350 = vtanh.pop %v1348
    %1353 = vrot.lane.b32.xlu0 %v1349, 32
    %v1354 = vpop.permute.xlu0 %1353
    %1355 = vrot.lane.b32.xlu0 %v1350, 32
    %v1356 = vpop.permute.xlu0 %1355
    %v1359 = vmul.f32 %v1322, %v1354
    %v1360 = vmul.f32 %v1324, %v1356
    %v1361 = vpack.c.bf16 %v1360, %v1359
    %v1363 = vunpack.c.l.b16 %v1361
    %v1364 = vpack.c.b16 %v1363, %v1363
    %1365 = vrot.lane.b32.xlu0 %v1364, 64
    %v1366 = vpop.permute.xlu0 %1365
    %1368 = vst.msk [vmem:[#allocation3] sm:$0xf] %vm291, %v1366
    %v1369 = vunpack.c.h.b16 %v1361
    %v1370 = vpack.c.b16 %v1369, %v1369
    %1371 = vrot.lane.b32.xlu0 %v1370, 96
    %v1372 = vpop.permute.xlu0 %1371
    %1374 = vst.msk [vmem:[#allocation3 + $0x1c] sm:$0xf] %vm298, %v1372
    %1375 = vrot.lane.b32.xlu0 %v1361, 64
    %v1376 = vpop.permute.xlu0 %1375
    %v1378 = vsel %vm189, %v1376, 0
    %1380 = vmatprep.subr.bf16.mxu0 0
    %1381 = vmatpush1.bf16.msra.mxu0 0
    %1382 = vmatprep.subr.bf16.mxu0 0
    %1383 = vmatpush1.bf16.msra.mxu0 0
    %1384 = vmatprep.subr.bf16.mxu0 0
    %1385 = vmatpush1.bf16.msra.mxu0 0
    %1386 = vmatprep.subr.bf16.mxu0 0
    %1387 = vmatpush1.bf16.msra.mxu0 0
    %1388 = vmatprep.subr.bf16.mxu0 0
    %1389 = vmatpush1.bf16.msra.mxu0 0
    %1390 = vmatprep.subr.bf16.mxu0 0
    %1391 = vmatpush1.bf16.msra.mxu0 0
    %1392 = vmatprep.subr.bf16.mxu0 %v1265
    %1393 = vmatpush1.bf16.msra.mxu0 %v1264
    %1394 = vmatprep.subr.bf16.mxu0 %v1263
    %1395 = vmatpush1.bf16.msra.mxu0 %v1262
    %1396 = vmatprep.subr.bf16.mxu0 0
    %1397 = vmatpush2.bf16.msra.mxu0 0
    %1398 = vmatprep.subr.bf16.mxu0 0
    %1399 = vmatpush2.bf16.msra.mxu0 0
    %1400 = vmatprep.subr.bf16.mxu0 0
    %1401 = vmatpush2.bf16.msra.mxu0 0
    %1402 = vmatprep.subr.bf16.mxu0 0
    %1403 = vmatpush2.bf16.msra.mxu0 0
    %1404 = vmatprep.subr.bf16.mxu0 0
    %1405 = vmatpush2.bf16.msra.mxu0 0
    %1406 = vmatprep.subr.bf16.mxu0 0
    %1407 = vmatpush2.bf16.msra.mxu0 0
    %1408 = vmatprep.subr.bf16.mxu0 0
    %1409 = vmatpush2.bf16.msra.mxu0 0
    %1410 = vmatprep.subr.bf16.mxu0 0
    %1411 = vmatpush2.bf16.msra.mxu0 0
    %1412 = vmatprep.mubr.bf16.mxu0 0
    %1413 = vmatmul.mubr.bf16.gmra.mxu0 %v1378
    %v1414 = vpop.f32.mrf.mxu0
    %v1415 = vadd.f32 0.0, %v1414
    %v1416 = vpop.f32.mrf.mxu0
    %v1417 = vpop.f32.mrf.mxu0
    %v1418 = vpop.f32.mrf.mxu0
    %v1419 = vadd.f32 0.0, %v1418
    %1420 = vdwg.mxu0
    %v1421 = vadd.f32 %v1415, %v1211
    %v1422 = vadd.f32 %v1419, %v1239
    %v1423 = vxor.u32 %v1421, 2147483648
    %v1424 = vxor.u32 %v1422, 2147483648
    %v1425 = vmul.f32 %v1423, 1.442695
    %v1426 = vpow.pop %v1425
    %v1427 = vmul.f32 %v1424, 1.442695
    %v1428 = vpow.pop %v1427
    %v1429 = vadd.f32 %v1426, 1.0
    %v1430 = vadd.f32 %v1428, 1.0
    %v1431 = vrcp.pop %v1429
    %v1432 = vmul.f32 1.0, %v1431
    %v1433 = vrcp.pop %v1430
    %v1434 = vmul.f32 1.0, %v1433
    %v1435 = vtanh.pop %v1421
    %v1436 = vtanh.pop %v1422
    %v1437 = vmul.f32 %v1432, %v1347
    %v1438 = vmul.f32 %v1434, %v1348
    %1441 = vrot.lane.b32.xlu0 %v1435, 32
    %v1442 = vpop.permute.xlu0 %1441
    %1443 = vrot.lane.b32.xlu0 %v1436, 32
    %v1444 = vpop.permute.xlu0 %1443
    %v1447 = vmul.f32 %v1432, %v1442
    %v1448 = vmul.f32 %v1434, %v1444
    %1451 = vrot.lane.b32.xlu0 %v1447, 32
    %v1452 = vpop.permute.xlu0 %1451
    %1453 = vrot.lane.b32.xlu0 %v1448, 32
    %v1454 = vpop.permute.xlu0 %1453
    %v1457 = vadd.f32 %v1437, %v1452
    %v1458 = vadd.f32 %v1438, %v1454
    %v1459 = vtanh.pop %v1457
    %v1460 = vtanh.pop %v1458
    %1463 = vrot.lane.b32.xlu0 %v1459, 32
    %v1464 = vpop.permute.xlu0 %1463
    %1465 = vrot.lane.b32.xlu0 %v1460, 32
    %v1466 = vpop.permute.xlu0 %1465
    %v1469 = vmul.f32 %v1432, %v1464
    %v1470 = vmul.f32 %v1434, %v1466
    %v1471 = vpack.c.bf16 %v1470, %v1469
    %v1473 = vunpack.c.l.b16 %v1471
    %v1474 = vpack.c.b16 %v1473, %v1473
    %1475 = vrot.lane.b32.xlu0 %v1474, 64
    %v1476 = vpop.permute.xlu0 %1475
    %1478 = vst.msk [vmem:[#allocation3 + $0x4] sm:$0xf] %vm291, %v1476
    %v1479 = vunpack.c.h.b16 %v1471
    %v1480 = vpack.c.b16 %v1479, %v1479
    %1481 = vrot.lane.b32.xlu0 %v1480, 96
    %v1482 = vpop.permute.xlu0 %1481
    %1484 = vst.msk [vmem:[#allocation3 + $0x18] sm:$0xf] %vm298, %v1482
    %1485 = vrot.lane.b32.xlu0 %v1471, 64
    %v1486 = vpop.permute.xlu0 %1485
    %v1488 = vsel %vm189, %v1486, 0
    %1490 = vmatprep.subr.bf16.mxu0 0
    %1491 = vmatpush1.bf16.msra.mxu0 0
    %1492 = vmatprep.subr.bf16.mxu0 0
    %1493 = vmatpush1.bf16.msra.mxu0 0
    %1494 = vmatprep.subr.bf16.mxu0 0
    %1495 = vmatpush1.bf16.msra.mxu0 0
    %1496 = vmatprep.subr.bf16.mxu0 0
    %1497 = vmatpush1.bf16.msra.mxu0 0
    %1498 = vmatprep.subr.bf16.mxu0 0
    %1499 = vmatpush1.bf16.msra.mxu0 0
    %1500 = vmatprep.subr.bf16.mxu0 0
    %1501 = vmatpush1.bf16.msra.mxu0 0
    %1502 = vmatprep.subr.bf16.mxu0 %v1265
    %1503 = vmatpush1.bf16.msra.mxu0 %v1264
    %1504 = vmatprep.subr.bf16.mxu0 %v1263
    %1505 = vmatpush1.bf16.msra.mxu0 %v1262
    %1506 = vmatprep.subr.bf16.mxu0 0
    %1507 = vmatpush2.bf16.msra.mxu0 0
    %1508 = vmatprep.subr.bf16.mxu0 0
    %1509 = vmatpush2.bf16.msra.mxu0 0
    %1510 = vmatprep.subr.bf16.mxu0 0
    %1511 = vmatpush2.bf16.msra.mxu0 0
    %1512 = vmatprep.subr.bf16.mxu0 0
    %1513 = vmatpush2.bf16.msra.mxu0 0
    %1514 = vmatprep.subr.bf16.mxu0 0
    %1515 = vmatpush2.bf16.msra.mxu0 0
    %1516 = vmatprep.subr.bf16.mxu0 0
    %1517 = vmatpush2.bf16.msra.mxu0 0
    %1518 = vmatprep.subr.bf16.mxu0 0
    %1519 = vmatpush2.bf16.msra.mxu0 0
    %1520 = vmatprep.subr.bf16.mxu0 0
    %1521 = vmatpush2.bf16.msra.mxu0 0
    %1522 = vmatprep.mubr.bf16.mxu0 0
    %1523 = vmatmul.mubr.bf16.gmra.mxu0 %v1488
    %v1524 = vpop.f32.mrf.mxu0
    %v1525 = vadd.f32 0.0, %v1524
    %v1526 = vpop.f32.mrf.mxu0
    %v1527 = vpop.f32.mrf.mxu0
    %v1528 = vpop.f32.mrf.mxu0
    %v1529 = vadd.f32 0.0, %v1528
    %1530 = vdwg.mxu0
    %v1531 = vadd.f32 %v1525, %v1217
    %v1532 = vadd.f32 %v1529, %v1233
    %v1533 = vxor.u32 %v1531, 2147483648
    %v1534 = vxor.u32 %v1532, 2147483648
    %v1535 = vmul.f32 %v1533, 1.442695
    %v1536 = vpow.pop %v1535
    %v1537 = vmul.f32 %v1534, 1.442695
    %v1538 = vpow.pop %v1537
    %v1539 = vadd.f32 %v1536, 1.0
    %v1540 = vadd.f32 %v1538, 1.0
    %v1541 = vrcp.pop %v1539
    %v1542 = vmul.f32 1.0, %v1541
    %v1543 = vrcp.pop %v1540
    %v1544 = vmul.f32 1.0, %v1543
    %v1545 = vtanh.pop %v1531
    %v1546 = vtanh.pop %v1532
    %v1547 = vmul.f32 %v1542, %v1457
    %v1548 = vmul.f32 %v1544, %v1458
    %1551 = vrot.lane.b32.xlu0 %v1545, 32
    %v1552 = vpop.permute.xlu0 %1551
    %1553 = vrot.lane.b32.xlu0 %v1546, 32
    %v1554 = vpop.permute.xlu0 %1553
    %v1557 = vmul.f32 %v1542, %v1552
    %v1558 = vmul.f32 %v1544, %v1554
    %1561 = vrot.lane.b32.xlu0 %v1557, 32
    %v1562 = vpop.permute.xlu0 %1561
    %1563 = vrot.lane.b32.xlu0 %v1558, 32
    %v1564 = vpop.permute.xlu0 %1563
    %v1567 = vadd.f32 %v1547, %v1562
    %v1568 = vadd.f32 %v1548, %v1564
    %v1569 = vtanh.pop %v1567
    %v1570 = vtanh.pop %v1568
    %1573 = vrot.lane.b32.xlu0 %v1569, 32
    %v1574 = vpop.permute.xlu0 %1573
    %1575 = vrot.lane.b32.xlu0 %v1570, 32
    %v1576 = vpop.permute.xlu0 %1575
    %v1579 = vmul.f32 %v1542, %v1574
    %v1580 = vmul.f32 %v1544, %v1576
    %v1581 = vpack.c.bf16 %v1580, %v1579
    %v1583 = vunpack.c.l.b16 %v1581
    %v1584 = vpack.c.b16 %v1583, %v1583
    %1585 = vrot.lane.b32.xlu0 %v1584, 64
    %v1586 = vpop.permute.xlu0 %1585
    %1588 = vst.msk [vmem:[#allocation3 + $0x8] sm:$0xf] %vm291, %v1586
    %v1589 = vunpack.c.h.b16 %v1581
    %v1590 = vpack.c.b16 %v1589, %v1589
    %1591 = vrot.lane.b32.xlu0 %v1590, 96
    %v1592 = vpop.permute.xlu0 %1591
    %1594 = vst.msk [vmem:[#allocation3 + $0x14] sm:$0xf] %vm298, %v1592
    %1595 = vrot.lane.b32.xlu0 %v1581, 64
    %v1596 = vpop.permute.xlu0 %1595
    %v1598 = vsel %vm189, %v1596, 0
    %1600 = vmatprep.subr.bf16.mxu0 0
    %1601 = vmatpush1.bf16.msra.mxu0 0
    %1602 = vmatprep.subr.bf16.mxu0 0
    %1603 = vmatpush1.bf16.msra.mxu0 0
    %1604 = vmatprep.subr.bf16.mxu0 0
    %1605 = vmatpush1.bf16.msra.mxu0 0
    %1606 = vmatprep.subr.bf16.mxu0 0
    %1607 = vmatpush1.bf16.msra.mxu0 0
    %1608 = vmatprep.subr.bf16.mxu0 0
    %1609 = vmatpush1.bf16.msra.mxu0 0
    %1610 = vmatprep.subr.bf16.mxu0 0
    %1611 = vmatpush1.bf16.msra.mxu0 0
    %1612 = vmatprep.subr.bf16.mxu0 %v1265
    %1613 = vmatpush1.bf16.msra.mxu0 %v1264
    %1614 = vmatprep.subr.bf16.mxu0 %v1263
    %1615 = vmatpush1.bf16.msra.mxu0 %v1262
    %1616 = vmatprep.subr.bf16.mxu0 0
    %1617 = vmatpush2.bf16.msra.mxu0 0
    %1618 = vmatprep.subr.bf16.mxu0 0
    %1619 = vmatpush2.bf16.msra.mxu0 0
    %1620 = vmatprep.subr.bf16.mxu0 0
    %1621 = vmatpush2.bf16.msra.mxu0 0
    %1622 = vmatprep.subr.bf16.mxu0 0
    %1623 = vmatpush2.bf16.msra.mxu0 0
    %1624 = vmatprep.subr.bf16.mxu0 0
    %1625 = vmatpush2.bf16.msra.mxu0 0
    %1626 = vmatprep.subr.bf16.mxu0 0
    %1627 = vmatpush2.bf16.msra.mxu0 0
    %1628 = vmatprep.subr.bf16.mxu0 0
    %1629 = vmatpush2.bf16.msra.mxu0 0
    %1630 = vmatprep.subr.bf16.mxu0 0
    %1631 = vmatpush2.bf16.msra.mxu0 0
    %1632 = vmatprep.mubr.bf16.mxu0 0
    %1633 = vmatmul.mubr.bf16.gmra.mxu0 %v1598
    %v1634 = vpop.f32.mrf.mxu0
    %v1635 = vadd.f32 0.0, %v1634
    %v1636 = vpop.f32.mrf.mxu0
    %v1637 = vpop.f32.mrf.mxu0
    %v1638 = vpop.f32.mrf.mxu0
    %v1639 = vadd.f32 0.0, %v1638
    %1640 = vdwg.mxu0
    %v1641 = vadd.f32 %v1635, %v1221
    %v1642 = vadd.f32 %v1639, %v1229
    %v1643 = vxor.u32 %v1641, 2147483648
    %v1644 = vxor.u32 %v1642, 2147483648
    %v1645 = vmul.f32 %v1643, 1.442695
    %v1646 = vpow.pop %v1645
    %v1647 = vmul.f32 %v1644, 1.442695
    %v1648 = vpow.pop %v1647
    %v1649 = vadd.f32 %v1646, 1.0
    %v1650 = vadd.f32 %v1648, 1.0
    %v1651 = vrcp.pop %v1649
    %v1652 = vmul.f32 1.0, %v1651
    %v1653 = vrcp.pop %v1650
    %v1654 = vmul.f32 1.0, %v1653
    %v1655 = vtanh.pop %v1641
    %v1656 = vtanh.pop %v1642
    %v1657 = vmul.f32 %v1652, %v1567
    %v1658 = vmul.f32 %v1654, %v1568
    %1661 = vrot.lane.b32.xlu0 %v1655, 32
    %v1662 = vpop.permute.xlu0 %1661
    %1663 = vrot.lane.b32.xlu0 %v1656, 32
    %v1664 = vpop.permute.xlu0 %1663
    %v1667 = vmul.f32 %v1652, %v1662
    %v1668 = vmul.f32 %v1654, %v1664
    %1671 = vrot.lane.b32.xlu0 %v1667, 32
    %v1672 = vpop.permute.xlu0 %1671
    %1673 = vrot.lane.b32.xlu0 %v1668, 32
    %v1674 = vpop.permute.xlu0 %1673
    %v1677 = vadd.f32 %v1657, %v1672
    %v1678 = vadd.f32 %v1658, %v1674
    %v1679 = vtanh.pop %v1677
    %v1680 = vtanh.pop %v1678
    %1683 = vrot.lane.b32.xlu0 %v1679, 32
    %v1684 = vpop.permute.xlu0 %1683
    %1685 = vrot.lane.b32.xlu0 %v1680, 32
    %v1686 = vpop.permute.xlu0 %1685
    %v1689 = vmul.f32 %v1652, %v1684
    %v1690 = vmul.f32 %v1654, %v1686
    %v1691 = vpack.c.bf16 %v1690, %v1689
    %v1693 = vunpack.c.l.b16 %v1691
    %v1694 = vpack.c.b16 %v1693, %v1693
    %1695 = vrot.lane.b32.xlu0 %v1694, 64
    %v1696 = vpop.permute.xlu0 %1695
    %1698 = vst.msk [vmem:[#allocation3 + $0xc] sm:$0xf] %vm291, %v1696
    %v1699 = vunpack.c.h.b16 %v1691
    %v1700 = vpack.c.b16 %v1699, %v1699
    %1701 = vrot.lane.b32.xlu0 %v1700, 96
    %v1702 = vpop.permute.xlu0 %1701
    %1704 = vst.msk [vmem:[#allocation3 + $0x10] sm:$0xf] %vm298, %v1702
    %1705 = vrot.lane.b32.xlu0 %v1691, 64
    %v1706 = vpop.permute.xlu0 %1705
    %v1708 = vsel %vm189, %v1706, 0
    %1710 = vmatprep.subr.bf16.mxu0 0
    %1711 = vmatpush1.bf16.msra.mxu0 0
    %1712 = vmatprep.subr.bf16.mxu0 0
    %1713 = vmatpush1.bf16.msra.mxu0 0
    %1714 = vmatprep.subr.bf16.mxu0 0
    %1715 = vmatpush1.bf16.msra.mxu0 0
    %1716 = vmatprep.subr.bf16.mxu0 0
    %1717 = vmatpush1.bf16.msra.mxu0 0
    %1718 = vmatprep.subr.bf16.mxu0 0
    %1719 = vmatpush1.bf16.msra.mxu0 0
    %1720 = vmatprep.subr.bf16.mxu0 0
    %1721 = vmatpush1.bf16.msra.mxu0 0
    %1722 = vmatprep.subr.bf16.mxu0 %v1265
    %1723 = vmatpush1.bf16.msra.mxu0 %v1264
    %1724 = vmatprep.subr.bf16.mxu0 %v1263
    %1725 = vmatpush1.bf16.msra.mxu0 %v1262
    %1726 = vmatprep.subr.bf16.mxu0 0
    %1727 = vmatpush2.bf16.msra.mxu0 0
    %1728 = vmatprep.subr.bf16.mxu0 0
    %1729 = vmatpush2.bf16.msra.mxu0 0
    %1730 = vmatprep.subr.bf16.mxu0 0
    %1731 = vmatpush2.bf16.msra.mxu0 0
    %1732 = vmatprep.subr.bf16.mxu0 0
    %1733 = vmatpush2.bf16.msra.mxu0 0
    %1734 = vmatprep.subr.bf16.mxu0 0
    %1735 = vmatpush2.bf16.msra.mxu0 0
    %1736 = vmatprep.subr.bf16.mxu0 0
    %1737 = vmatpush2.bf16.msra.mxu0 0
    %1738 = vmatprep.subr.bf16.mxu0 0
    %1739 = vmatpush2.bf16.msra.mxu0 0
    %1740 = vmatprep.subr.bf16.mxu0 0
    %1741 = vmatpush2.bf16.msra.mxu0 0
    %1742 = vmatprep.mubr.bf16.mxu0 0
    %1743 = vmatmul.mubr.bf16.gmra.mxu0 %v1708
    %v1744 = vpop.f32.mrf.mxu0
    %v1745 = vadd.f32 0.0, %v1744
    %v1746 = vpop.f32.mrf.mxu0
    %v1747 = vpop.f32.mrf.mxu0
    %v1748 = vpop.f32.mrf.mxu0
    %v1749 = vadd.f32 0.0, %v1748
    %1750 = vdwg.mxu0
    %v1751 = vadd.f32 %v1745, %v1227
    %v1752 = vadd.f32 %v1749, %v1223
    %v1753 = vxor.u32 %v1751, 2147483648
    %v1754 = vxor.u32 %v1752, 2147483648
    %v1755 = vmul.f32 %v1753, 1.442695
    %v1756 = vpow.pop %v1755
    %v1757 = vmul.f32 %v1754, 1.442695
    %v1758 = vpow.pop %v1757
    %v1759 = vadd.f32 %v1756, 1.0
    %v1760 = vadd.f32 %v1758, 1.0
    %v1761 = vrcp.pop %v1759
    %v1762 = vmul.f32 1.0, %v1761
    %v1763 = vrcp.pop %v1760
    %v1764 = vmul.f32 1.0, %v1763
    %v1765 = vtanh.pop %v1751
    %v1766 = vtanh.pop %v1752
    %v1767 = vmul.f32 %v1762, %v1677
    %v1768 = vmul.f32 %v1764, %v1678
    %1771 = vrot.lane.b32.xlu0 %v1765, 32
    %v1772 = vpop.permute.xlu0 %1771
    %1773 = vrot.lane.b32.xlu0 %v1766, 32
    %v1774 = vpop.permute.xlu0 %1773
    %v1777 = vmul.f32 %v1762, %v1772
    %v1778 = vmul.f32 %v1764, %v1774
    %1781 = vrot.lane.b32.xlu0 %v1777, 32
    %v1782 = vpop.permute.xlu0 %1781
    %1783 = vrot.lane.b32.xlu0 %v1778, 32
    %v1784 = vpop.permute.xlu0 %1783
    %v1787 = vadd.f32 %v1767, %v1782
    %v1788 = vadd.f32 %v1768, %v1784
    %v1789 = vtanh.pop %v1787
    %v1790 = vtanh.pop %v1788
    %1793 = vrot.lane.b32.xlu0 %v1789, 32
    %v1794 = vpop.permute.xlu0 %1793
    %1795 = vrot.lane.b32.xlu0 %v1790, 32
    %v1796 = vpop.permute.xlu0 %1795
    %v1799 = vmul.f32 %v1762, %v1794
    %v1800 = vmul.f32 %v1764, %v1796
    %v1801 = vpack.c.bf16 %v1800, %v1799
    %v1803 = vunpack.c.l.b16 %v1801
    %v1804 = vpack.c.b16 %v1803, %v1803
    %1805 = vrot.lane.b32.xlu0 %v1804, 64
    %v1806 = vpop.permute.xlu0 %1805
    %1808 = vst.msk [vmem:[#allocation3 + $0x10] sm:$0xf] %vm291, %v1806
    %v1809 = vunpack.c.h.b16 %v1801
    %v1810 = vpack.c.b16 %v1809, %v1809
    %1811 = vrot.lane.b32.xlu0 %v1810, 96
    %v1812 = vpop.permute.xlu0 %1811
    %1814 = vst.msk [vmem:[#allocation3 + $0xc] sm:$0xf] %vm298, %v1812
    %1815 = vrot.lane.b32.xlu0 %v1801, 64
    %v1816 = vpop.permute.xlu0 %1815
    %v1818 = vsel %vm189, %v1816, 0
    %1820 = vmatprep.subr.bf16.mxu0 0
    %1821 = vmatpush1.bf16.msra.mxu0 0
    %1822 = vmatprep.subr.bf16.mxu0 0
    %1823 = vmatpush1.bf16.msra.mxu0 0
    %1824 = vmatprep.subr.bf16.mxu0 0
    %1825 = vmatpush1.bf16.msra.mxu0 0
    %1826 = vmatprep.subr.bf16.mxu0 0
    %1827 = vmatpush1.bf16.msra.mxu0 0
    %1828 = vmatprep.subr.bf16.mxu0 0
    %1829 = vmatpush1.bf16.msra.mxu0 0
    %1830 = vmatprep.subr.bf16.mxu0 0
    %1831 = vmatpush1.bf16.msra.mxu0 0
    %1832 = vmatprep.subr.bf16.mxu0 %v1265
    %1833 = vmatpush1.bf16.msra.mxu0 %v1264
    %1834 = vmatprep.subr.bf16.mxu0 %v1263
    %1835 = vmatpush1.bf16.msra.mxu0 %v1262
    %1836 = vmatprep.subr.bf16.mxu0 0
    %1837 = vmatpush2.bf16.msra.mxu0 0
    %1838 = vmatprep.subr.bf16.mxu0 0
    %1839 = vmatpush2.bf16.msra.mxu0 0
    %1840 = vmatprep.subr.bf16.mxu0 0
    %1841 = vmatpush2.bf16.msra.mxu0 0
    %1842 = vmatprep.subr.bf16.mxu0 0
    %1843 = vmatpush2.bf16.msra.mxu0 0
    %1844 = vmatprep.subr.bf16.mxu0 0
    %1845 = vmatpush2.bf16.msra.mxu0 0
    %1846 = vmatprep.subr.bf16.mxu0 0
    %1847 = vmatpush2.bf16.msra.mxu0 0
    %1848 = vmatprep.subr.bf16.mxu0 0
    %1849 = vmatpush2.bf16.msra.mxu0 0
    %1850 = vmatprep.subr.bf16.mxu0 0
    %1851 = vmatpush2.bf16.msra.mxu0 0
    %1852 = vmatprep.mubr.bf16.mxu0 0
    %1853 = vmatmul.mubr.bf16.gmra.mxu0 %v1818
    %v1854 = vpop.f32.mrf.mxu0
    %v1855 = vadd.f32 0.0, %v1854
    %v1856 = vpop.f32.mrf.mxu0
    %v1857 = vpop.f32.mrf.mxu0
    %v1858 = vpop.f32.mrf.mxu0
    %v1859 = vadd.f32 0.0, %v1858
    %1860 = vdwg.mxu0
    %v1861 = vadd.f32 %v1855, %v1231
    %v1862 = vadd.f32 %v1859, %v1219
    %v1863 = vxor.u32 %v1861, 2147483648
    %v1864 = vxor.u32 %v1862, 2147483648
    %v1865 = vmul.f32 %v1863, 1.442695
    %v1866 = vpow.pop %v1865
    %v1867 = vmul.f32 %v1864, 1.442695
    %v1868 = vpow.pop %v1867
    %v1869 = vadd.f32 %v1866, 1.0
    %v1870 = vadd.f32 %v1868, 1.0
    %v1871 = vrcp.pop %v1869
    %v1872 = vmul.f32 1.0, %v1871
    %v1873 = vrcp.pop %v1870
    %v1874 = vmul.f32 1.0, %v1873
    %v1875 = vtanh.pop %v1861
    %v1876 = vtanh.pop %v1862
    %v1877 = vmul.f32 %v1872, %v1787
    %v1878 = vmul.f32 %v1874, %v1788
    %1881 = vrot.lane.b32.xlu0 %v1875, 32
    %v1882 = vpop.permute.xlu0 %1881
    %1883 = vrot.lane.b32.xlu0 %v1876, 32
    %v1884 = vpop.permute.xlu0 %1883
    %v1887 = vmul.f32 %v1872, %v1882
    %v1888 = vmul.f32 %v1874, %v1884
    %1891 = vrot.lane.b32.xlu0 %v1887, 32
    %v1892 = vpop.permute.xlu0 %1891
    %1893 = vrot.lane.b32.xlu0 %v1888, 32
    %v1894 = vpop.permute.xlu0 %1893
    %v1897 = vadd.f32 %v1877, %v1892
    %v1898 = vadd.f32 %v1878, %v1894
    %v1899 = vtanh.pop %v1897
    %v1900 = vtanh.pop %v1898
    %1903 = vrot.lane.b32.xlu0 %v1899, 32
    %v1904 = vpop.permute.xlu0 %1903
    %1905 = vrot.lane.b32.xlu0 %v1900, 32
    %v1906 = vpop.permute.xlu0 %1905
    %v1909 = vmul.f32 %v1872, %v1904
    %v1910 = vmul.f32 %v1874, %v1906
    %v1911 = vpack.c.bf16 %v1910, %v1909
    %v1913 = vunpack.c.l.b16 %v1911
    %v1914 = vpack.c.b16 %v1913, %v1913
    %1915 = vrot.lane.b32.xlu0 %v1914, 64
    %v1916 = vpop.permute.xlu0 %1915
    %1918 = vst.msk [vmem:[#allocation3 + $0x14] sm:$0xf] %vm291, %v1916
    %v1919 = vunpack.c.h.b16 %v1911
    %v1920 = vpack.c.b16 %v1919, %v1919
    %1921 = vrot.lane.b32.xlu0 %v1920, 96
    %v1922 = vpop.permute.xlu0 %1921
    %1924 = vst.msk [vmem:[#allocation3 + $0x8] sm:$0xf] %vm298, %v1922
    %1925 = vrot.lane.b32.xlu0 %v1911, 64
    %v1926 = vpop.permute.xlu0 %1925
    %v1928 = vsel %vm189, %v1926, 0
    %1930 = vmatprep.subr.bf16.mxu0 0
    %1931 = vmatpush1.bf16.msra.mxu0 0
    %1932 = vmatprep.subr.bf16.mxu0 0
    %1933 = vmatpush1.bf16.msra.mxu0 0
    %1934 = vmatprep.subr.bf16.mxu0 0
    %1935 = vmatpush1.bf16.msra.mxu0 0
    %1936 = vmatprep.subr.bf16.mxu0 0
    %1937 = vmatpush1.bf16.msra.mxu0 0
    %1938 = vmatprep.subr.bf16.mxu0 0
    %1939 = vmatpush1.bf16.msra.mxu0 0
    %1940 = vmatprep.subr.bf16.mxu0 0
    %1941 = vmatpush1.bf16.msra.mxu0 0
    %1942 = vmatprep.subr.bf16.mxu0 %v1265
    %1943 = vmatpush1.bf16.msra.mxu0 %v1264
    %1944 = vmatprep.subr.bf16.mxu0 %v1263
    %1945 = vmatpush1.bf16.msra.mxu0 %v1262
    %1946 = vmatprep.subr.bf16.mxu0 0
    %1947 = vmatpush2.bf16.msra.mxu0 0
    %1948 = vmatprep.subr.bf16.mxu0 0
    %1949 = vmatpush2.bf16.msra.mxu0 0
    %1950 = vmatprep.subr.bf16.mxu0 0
    %1951 = vmatpush2.bf16.msra.mxu0 0
    %1952 = vmatprep.subr.bf16.mxu0 0
    %1953 = vmatpush2.bf16.msra.mxu0 0
    %1954 = vmatprep.subr.bf16.mxu0 0
    %1955 = vmatpush2.bf16.msra.mxu0 0
    %1956 = vmatprep.subr.bf16.mxu0 0
    %1957 = vmatpush2.bf16.msra.mxu0 0
    %1958 = vmatprep.subr.bf16.mxu0 0
    %1959 = vmatpush2.bf16.msra.mxu0 0
    %1960 = vmatprep.subr.bf16.mxu0 0
    %1961 = vmatpush2.bf16.msra.mxu0 0
    %1962 = vmatprep.mubr.bf16.mxu0 0
    %1963 = vmatmul.mubr.bf16.gmra.mxu0 %v1928
    %v1964 = vpop.f32.mrf.mxu0
    %v1965 = vadd.f32 0.0, %v1964
    %v1966 = vpop.f32.mrf.mxu0
    %v1967 = vpop.f32.mrf.mxu0
    %v1968 = vpop.f32.mrf.mxu0
    %v1969 = vadd.f32 0.0, %v1968
    %1970 = vdwg.mxu0
    %v1971 = vadd.f32 %v1965, %v1237
    %v1972 = vadd.f32 %v1969, %v1213
    %v1973 = vxor.u32 %v1971, 2147483648
    %v1974 = vxor.u32 %v1972, 2147483648
    %v1975 = vmul.f32 %v1973, 1.442695
    %v1976 = vpow.pop %v1975
    %v1977 = vmul.f32 %v1974, 1.442695
    %v1978 = vpow.pop %v1977
    %v1979 = vadd.f32 %v1976, 1.0
    %v1980 = vadd.f32 %v1978, 1.0
    %v1981 = vrcp.pop %v1979
    %v1982 = vmul.f32 1.0, %v1981
    %v1983 = vrcp.pop %v1980
    %v1984 = vmul.f32 1.0, %v1983
    %v1985 = vtanh.pop %v1971
    %v1986 = vtanh.pop %v1972
    %v1987 = vmul.f32 %v1982, %v1897
    %v1988 = vmul.f32 %v1984, %v1898
    %1991 = vrot.lane.b32.xlu0 %v1985, 32
    %v1992 = vpop.permute.xlu0 %1991
    %1993 = vrot.lane.b32.xlu0 %v1986, 32
    %v1994 = vpop.permute.xlu0 %1993
    %v1997 = vmul.f32 %v1982, %v1992
    %v1998 = vmul.f32 %v1984, %v1994
    %2001 = vrot.lane.b32.xlu0 %v1997, 32
    %v2002 = vpop.permute.xlu0 %2001
    %2003 = vrot.lane.b32.xlu0 %v1998, 32
    %v2004 = vpop.permute.xlu0 %2003
    %v2007 = vadd.f32 %v1987, %v2002
    %v2008 = vadd.f32 %v1988, %v2004
    %v2009 = vtanh.pop %v2007
    %v2010 = vtanh.pop %v2008
    %2013 = vrot.lane.b32.xlu0 %v2009, 32
    %v2014 = vpop.permute.xlu0 %2013
    %2015 = vrot.lane.b32.xlu0 %v2010, 32
    %v2016 = vpop.permute.xlu0 %2015
    %v2019 = vmul.f32 %v1982, %v2014
    %v2020 = vmul.f32 %v1984, %v2016
    %v2021 = vpack.c.bf16 %v2020, %v2019
    %v2023 = vunpack.c.l.b16 %v2021
    %v2024 = vpack.c.b16 %v2023, %v2023
    %2025 = vrot.lane.b32.xlu0 %v2024, 64
    %v2026 = vpop.permute.xlu0 %2025
    %2028 = vst.msk [vmem:[#allocation3 + $0x18] sm:$0xf] %vm291, %v2026
    %v2029 = vunpack.c.h.b16 %v2021
    %v2030 = vpack.c.b16 %v2029, %v2029
    %2031 = vrot.lane.b32.xlu0 %v2030, 96
    %v2032 = vpop.permute.xlu0 %2031
    %2034 = vst.msk [vmem:[#allocation3 + $0x4] sm:$0xf] %vm298, %v2032
    %2035 = vrot.lane.b32.xlu0 %v2021, 64
    %v2036 = vpop.permute.xlu0 %2035
    %v2038 = vsel %vm189, %v2036, 0
    %2040 = vmatprep.subr.bf16.mxu0 0
    %2041 = vmatpush1.bf16.msra.mxu0 0
    %2042 = vmatprep.subr.bf16.mxu0 0
    %2043 = vmatpush1.bf16.msra.mxu0 0
    %2044 = vmatprep.subr.bf16.mxu0 0
    %2045 = vmatpush1.bf16.msra.mxu0 0
    %2046 = vmatprep.subr.bf16.mxu0 0
    %2047 = vmatpush1.bf16.msra.mxu0 0
    %2048 = vmatprep.subr.bf16.mxu0 0
    %2049 = vmatpush1.bf16.msra.mxu0 0
    %2050 = vmatprep.subr.bf16.mxu0 0
    %2051 = vmatpush1.bf16.msra.mxu0 0
    %2052 = vmatprep.subr.bf16.mxu0 %v1265
    %2053 = vmatpush1.bf16.msra.mxu0 %v1264
    %2054 = vmatprep.subr.bf16.mxu0 %v1263
    %2055 = vmatpush1.bf16.msra.mxu0 %v1262
    %2056 = vmatprep.subr.bf16.mxu0 0
    %2057 = vmatpush2.bf16.msra.mxu0 0
    %2058 = vmatprep.subr.bf16.mxu0 0
    %2059 = vmatpush2.bf16.msra.mxu0 0
    %2060 = vmatprep.subr.bf16.mxu0 0
    %2061 = vmatpush2.bf16.msra.mxu0 0
    %2062 = vmatprep.subr.bf16.mxu0 0
    %2063 = vmatpush2.bf16.msra.mxu0 0
    %2064 = vmatprep.subr.bf16.mxu0 0
    %2065 = vmatpush2.bf16.msra.mxu0 0
    %2066 = vmatprep.subr.bf16.mxu0 0
    %2067 = vmatpush2.bf16.msra.mxu0 0
    %2068 = vmatprep.subr.bf16.mxu0 0
    %2069 = vmatpush2.bf16.msra.mxu0 0
    %2070 = vmatprep.subr.bf16.mxu0 0
    %2071 = vmatpush2.bf16.msra.mxu0 0
    %2072 = vmatprep.mubr.bf16.mxu0 0
    %2073 = vmatmul.mubr.bf16.gmra.mxu0 %v2038
    %v2074 = vpop.f32.mrf.mxu0
    %v2075 = vadd.f32 0.0, %v2074
    %v2076 = vpop.f32.mrf.mxu0
    %v2077 = vpop.f32.mrf.mxu0
    %v2078 = vpop.f32.mrf.mxu0
    %v2079 = vadd.f32 0.0, %v2078
    %2080 = vdwg.mxu0
    %v2081 = vadd.f32 %v2075, %v1241
    %v2082 = vadd.f32 %v2079, %v1209
    %v2083 = vxor.u32 %v2081, 2147483648
    %v2084 = vxor.u32 %v2082, 2147483648
    %v2085 = vmul.f32 %v2083, 1.442695
    %v2086 = vpow.pop %v2085
    %v2087 = vmul.f32 %v2084, 1.442695
    %v2088 = vpow.pop %v2087
    %v2089 = vadd.f32 %v2086, 1.0
    %v2090 = vadd.f32 %v2088, 1.0
    %v2091 = vrcp.pop %v2089
    %v2092 = vmul.f32 1.0, %v2091
    %v2093 = vrcp.pop %v2090
    %v2094 = vmul.f32 1.0, %v2093
    %v2095 = vtanh.pop %v2081
    %v2096 = vtanh.pop %v2082
    %v2097 = vmul.f32 %v2092, %v2007
    %v2098 = vmul.f32 %v2094, %v2008
    %2101 = vrot.lane.b32.xlu0 %v2095, 32
    %v2102 = vpop.permute.xlu0 %2101
    %2103 = vrot.lane.b32.xlu0 %v2096, 32
    %v2104 = vpop.permute.xlu0 %2103
    %v2107 = vmul.f32 %v2092, %v2102
    %v2108 = vmul.f32 %v2094, %v2104
    %2111 = vrot.lane.b32.xlu0 %v2107, 32
    %v2112 = vpop.permute.xlu0 %2111
    %2113 = vrot.lane.b32.xlu0 %v2108, 32
    %v2114 = vpop.permute.xlu0 %2113
    %v2117 = vadd.f32 %v2097, %v2112
    %v2118 = vadd.f32 %v2098, %v2114
    %v2119 = vtanh.pop %v2117
    %v2120 = vtanh.pop %v2118
    %2123 = vrot.lane.b32.xlu0 %v2119, 32
    %v2124 = vpop.permute.xlu0 %2123
    %2125 = vrot.lane.b32.xlu0 %v2120, 32
    %v2126 = vpop.permute.xlu0 %2125
    %v2129 = vmul.f32 %v2092, %v2124
    %v2130 = vmul.f32 %v2094, %v2126
    %v2131 = vpack.c.bf16 %v2130, %v2129
    %v2133 = vunpack.c.l.b16 %v2131
    %v2134 = vpack.c.b16 %v2133, %v2133
    %2135 = vrot.lane.b32.xlu0 %v2134, 64
    %v2136 = vpop.permute.xlu0 %2135
    %2138 = vst.msk [vmem:[#allocation3 + $0x1c] sm:$0xf] %vm291, %v2136
    %v2139 = vunpack.c.h.b16 %v2131
    %v2140 = vpack.c.b16 %v2139, %v2139
    %2141 = vrot.lane.b32.xlu0 %v2140, 96
    %v2142 = vpop.permute.xlu0 %2141
    %2144 = vst.msk [vmem:[#allocation3] sm:$0xf] %vm298, %v2142
    %v2145 = vld [vmem:[#allocation3] sm:$0xf]
    %v2146 = vld [vmem:[#allocation3 + $0x4] sm:$0xf]
    %v2147 = vld [vmem:[#allocation3 + $0x8] sm:$0xf]
    %v2148 = vld [vmem:[#allocation3 + $0xc] sm:$0xf]
    %v2149 = vld [vmem:[#allocation3 + $0x10] sm:$0xf]
    %v2150 = vld [vmem:[#allocation3 + $0x14] sm:$0xf]
    %v2151 = vld [vmem:[#allocation3 + $0x18] sm:$0xf]
    %v2152 = vld [vmem:[#allocation3 + $0x1c] sm:$0xf]
    %v2153 = vld [vmem:[%s5] sm:$0xf]
    %v2154 = vld [vmem:[%s5 + $0x4] sm:$0xf]
    %v2155 = vld [vmem:[%s5 + $0x8] sm:$0xf]
    %v2156 = vld [vmem:[%s5 + $0xc] sm:$0xf]
    %v2157 = vld [vmem:[%s5 + $0x10] sm:$0xf]
    %v2158 = vld [vmem:[%s5 + $0x14] sm:$0xf]
    %v2159 = vld [vmem:[%s5 + $0x18] sm:$0xf]
    %v2160 = vld [vmem:[%s5 + $0x1c] sm:$0xf]
    %v2161 = vld [vmem:[#allocation4] sm:$0x1]
    %s2162 = vtos %v2161
    %v2163 = vstv %s2162
    %v2172 = vunpack.c.l.b16 %v2145
    %v2173 = vunpack.c.l.b16 %v2146
    %v2174 = vunpack.c.l.b16 %v2147
    %v2175 = vunpack.c.l.b16 %v2148
    %v2176 = vunpack.c.l.b16 %v2149
    %v2177 = vunpack.c.l.b16 %v2150
    %v2178 = vunpack.c.l.b16 %v2151
    %v2179 = vunpack.c.l.b16 %v2152
    %v2180 = vpack.c.b16 %v2173, %v2172
    %v2181 = vpack.c.b16 %v2175, %v2174
    %v2182 = vpack.c.b16 %v2177, %v2176
    %v2183 = vpack.c.b16 %v2179, %v2178
    %v2192 = vunpack.c.l.b16 %v2153
    %v2193 = vunpack.c.l.b16 %v2154
    %v2194 = vunpack.c.l.b16 %v2155
    %v2195 = vunpack.c.l.b16 %v2156
    %v2196 = vunpack.c.l.b16 %v2157
    %v2197 = vunpack.c.l.b16 %v2158
    %v2198 = vunpack.c.l.b16 %v2159
    %v2199 = vunpack.c.l.b16 %v2160
    %v2200 = vpack.c.b16 %v2193, %v2192
    %v2201 = vpack.c.b16 %v2195, %v2194
    %v2202 = vpack.c.b16 %v2197, %v2196
    %v2203 = vpack.c.b16 %v2199, %v2198
    %v2209 = vsel %vm1159, %v2180, 0
    %v2212 = vsel %vm1159, %v2181, 0
    %v2215 = vsel %vm1159, %v2182, 0
    %v2218 = vsel %vm1159, %v2183, 0
    %2220 = vmatprep.subr.bf16.mxu0 0
    %2221 = vmatpush1.bf16.msra.mxu0 0
    %2222 = vmatprep.subr.bf16.mxu0 0
    %2223 = vmatpush1.bf16.msra.mxu0 0
    %2224 = vmatprep.subr.bf16.mxu0 0
    %2225 = vmatpush1.bf16.msra.mxu0 0
    %2226 = vmatprep.subr.bf16.mxu0 0
    %2227 = vmatpush1.bf16.msra.mxu0 0
    %2228 = vmatprep.subr.bf16.mxu0 0
    %2229 = vmatpush1.bf16.msra.mxu0 %v2203
    %2230 = vmatprep.subr.bf16.mxu0 0
    %2231 = vmatpush1.bf16.msra.mxu0 %v2202
    %2232 = vmatprep.subr.bf16.mxu0 0
    %2233 = vmatpush1.bf16.msra.mxu0 %v2201
    %2234 = vmatprep.subr.bf16.mxu0 0
    %2235 = vmatpush1.bf16.msra.mxu0 %v2200
    %2236 = vmatprep.subr.bf16.mxu0 0
    %2237 = vmatpush2.bf16.msra.mxu0 0
    %2238 = vmatprep.subr.bf16.mxu0 0
    %2239 = vmatpush2.bf16.msra.mxu0 0
    %2240 = vmatprep.subr.bf16.mxu0 0
    %2241 = vmatpush2.bf16.msra.mxu0 0
    %2242 = vmatprep.subr.bf16.mxu0 0
    %2243 = vmatpush2.bf16.msra.mxu0 0
    %2244 = vmatprep.subr.bf16.mxu0 0
    %2245 = vmatpush2.bf16.msra.mxu0 0
    %2246 = vmatprep.subr.bf16.mxu0 0
    %2247 = vmatpush2.bf16.msra.mxu0 0
    %2248 = vmatprep.subr.bf16.mxu0 0
    %2249 = vmatpush2.bf16.msra.mxu0 0
    %2250 = vmatprep.subr.bf16.mxu0 0
    %2251 = vmatpush2.bf16.msra.mxu0 0
    %2252 = vmatprep.mubr.bf16.mxu0 0
    %2253 = vmatmul.mubr.bf16.gmra.mxu0 %v2209
    %v2254 = vpop.f32.mrf.mxu0
    %v2255 = vadd.f32 %v2163, %v2254
    %v2256 = vpop.f32.mrf.mxu0
    %v2257 = vpop.f32.mrf.mxu0
    %v2258 = vadd.f32 %v2163, %v2257
    %v2259 = vpop.f32.mrf.mxu0
    %2260 = vmatprep.mubr.bf16.mxu0 0
    %2261 = vmatmul.mubr.bf16.gmra.mxu0 %v2212
    %v2262 = vpop.f32.mrf.mxu0
    %v2263 = vadd.f32 %v2163, %v2262
    %v2264 = vpop.f32.mrf.mxu0
    %v2265 = vpop.f32.mrf.mxu0
    %v2266 = vadd.f32 %v2163, %v2265
    %v2267 = vpop.f32.mrf.mxu0
    %2268 = vmatprep.mubr.bf16.mxu0 0
    %2269 = vmatmul.mubr.bf16.gmra.mxu0 %v2215
    %v2270 = vpop.f32.mrf.mxu0
    %v2271 = vadd.f32 %v2163, %v2270
    %v2272 = vpop.f32.mrf.mxu0
    %v2273 = vpop.f32.mrf.mxu0
    %v2274 = vadd.f32 %v2163, %v2273
    %v2275 = vpop.f32.mrf.mxu0
    %2276 = vmatprep.mubr.bf16.mxu0 0
    %2277 = vmatmul.mubr.bf16.gmra.mxu0 %v2218
    %v2278 = vpop.f32.mrf.mxu0
    %v2279 = vadd.f32 %v2163, %v2278
    %v2280 = vpop.f32.mrf.mxu0
    %v2281 = vpop.f32.mrf.mxu0
    %v2282 = vadd.f32 %v2163, %v2281
    %v2283 = vpop.f32.mrf.mxu0
    %2284 = vdwg.mxu0
    %2285 = vst [vmem:[%s7] sm:$0xff] %v2255
    %2286 = vst [vmem:[%s7 + $0x8] sm:$0xff] %v2258
    %2287 = vst [vmem:[%s7 + $0x10] sm:$0xff] %v2263
    %2288 = vst [vmem:[%s7 + $0x18] sm:$0xff] %v2266
    %2289 = vst [vmem:[%s7 + $0x20] sm:$0xff] %v2271
    %2290 = vst [vmem:[%s7 + $0x28] sm:$0xff] %v2274
    %2291 = vst [vmem:[%s7 + $0x30] sm:$0xff] %v2279
    %2292 = vst [vmem:[%s7 + $0x38] sm:$0xff] %v2282
    // Predicated region
    $region34: #{lstm_model_forward.1} parent=1 // pred_check
      _
    $region35: #{lstm_model_forward.1} parent=1 // pred_check_branch
      %2294 = sbr.rel (0) target = $region37
    $region36: #{lstm_model_forward.1} parent=1 // pred_region
      _
    $region37: #{lstm_model_forward.1} parent=1 // pred_fallthru
      _
    // Predicated region
    $region38: #{lstm_model_forward.1} parent=1 // pred_check
      _
    $region39: #{lstm_model_forward.1} parent=1 // pred_check_branch
      %2296 = sbr.rel (0) target = $region41
    $region40: #{lstm_model_forward.1} parent=1 // pred_region
      _
    $region41: #{lstm_model_forward.1} parent=1 // pred_fallthru
      _
    %2297 = vsyncpa [#allocation6], 1

</llo_original>
